<compile_context>
chip_gen: v5e
topology: v5e:2x2
jax: 0.10.0
libtpu: 0.0.40
codegen_flags: <defaults>
</compile_context>

<pallas_src>
import functools

import jax
import jax.numpy as jnp
from jax import lax
from jax.experimental import pallas as pl
from jax.experimental.pallas import tpu as pltpu

_LANES = 128  # lane width of the padded-row scratch


def _output_block_kernel(x_ref, w_ref, b_ref, o_ref, xpad_ref, *,
                         N, Cin, Cout, H, W, K, pad, need_sigmoid, has_bias):
    # x_ref:    (N, Cin, H, W)          VMEM, input dtype
    # w_ref:    (Cout*Cin*K*K,)         SMEM f32, flattened OIHW conv weights
    # b_ref:    (Cout,)                 SMEM f32 bias
    # o_ref:    (N, Cout, H, W)         VMEM output (input dtype)
    # xpad_ref: (N*Cin, H+2*pad, 128)   VMEM f32 scratch, rows left-justified
    #
    # One memset (grid is collapsed, so it runs once); it also provides the
    # halo rows and the zero lanes >= W that the lane roll wraps into.
    xpad_ref[...] = jnp.zeros_like(xpad_ref)
    for n in range(N):
        for ci in range(Cin):
            # Left-justified store: lane offset 0, sublane offset `pad`.
            xpad_ref[n * Cin + ci, pad:pad + H, 0:W] = (
                x_ref[n, ci, :, :].astype(jnp.float32))

    kk = K * K
    for n in range(N):
        # Accumulators stay 128 lanes wide: same vreg count as (H, W) and it
        # avoids any per-tap lane slicing; lanes >= W are dropped at store.
        accs = [jnp.zeros((H, _LANES), jnp.float32) for _ in range(Cout)]
        for ci in range(Cin):
            plane = n * Cin + ci
            for kh in range(K):
                # Sublane-offset slice only (lane offset 0): (H, 128) band,
                # band[h, :] = padded row (h + kh).
                band = xpad_ref[plane, kh:kh + H, :]
                for kw in range(K):
                    # shifted[:, j] == padded[:, j + kw]; lanes >= W are zero
                    # so the circular wrap injects the left/right halo zeros.
                    shift = (pad - kw) % _LANES
                    shifted = (pltpu.roll(band, shift=shift, axis=1)
                               if shift else band)
                    wbase = (ci * K + kh) * K + kw
                    for co in range(Cout):
                        w = w_ref[co * Cin * kk + wbase]       # SMEM scalar
                        accs[co] = accs[co] + w * shifted      # VPU FMA
        for co in range(Cout):
            y = accs[co]
            if has_bias:
                y = y + b_ref[co]
            if need_sigmoid:
                # 1 / (1 + exp(-y)); exp goes to the EUP slot.
                y = 1.0 / (1.0 + jnp.exp(-y))
            # Direct plane store: no reshape/concatenate relayouts.
            o_ref[n, co, :, :] = y[:, :W].astype(o_ref.dtype)


def output_block_forward(x_nchw, weight_oihw, bias, *, need_sigmoid=True):
    """OutputBlock forward: Conv2d (stride 1, zero 'same' pad) [+bias] [+sigmoid].

    x_nchw:      (N, Cin, H, W)
    weight_oihw: (Cout, Cin, K, K)  (PyTorch Conv2d layout)
    bias:        (Cout,) or None
    returns:     (N, Cout, H, W) in x_nchw.dtype
    """
    N, Cin, H, W = x_nchw.shape
    Cout, Cin_w, K, K2 = weight_oihw.shape
    assert Cin_w == Cin and K == K2
    # Symmetric (K-1)//2 padding only reproduces the module for odd K.
    assert K % 2 == 1, "even kernel_size needs asymmetric 'same' padding"
    assert W <= _LANES  # TODO(synk): tile W (and H) for larger spatial sizes.
    pad = (K - 1) // 2
    Hp = H + 2 * pad

    w_flat = weight_oihw.astype(jnp.float32).reshape(-1)
    has_bias = bias is not None
    b = (bias.astype(jnp.float32) if has_bias
         else jnp.zeros((Cout,), jnp.float32))

    kernel = functools.partial(
        _output_block_kernel, N=N, Cin=Cin, Cout=Cout, H=H, W=W, K=K, pad=pad,
        need_sigmoid=need_sigmoid, has_bias=has_bias)

    # Single invocation (no grid): the whole problem (<200 KiB of VMEM incl.
    # the padded scratch) fits trivially on v5e/v6e/v7x, and one step avoids
    # per-grid-step pipeline overhead.  If the real workload has larger N,
    # re-introduce a grid over batches of images sized for >=1-2 us per step.
    return pl.pallas_call(
        kernel,
        out_shape=jax.ShapeDtypeStruct((N, Cout, H, W), x_nchw.dtype),
        in_specs=[
            pl.BlockSpec(memory_space=pltpu.MemorySpace.VMEM),  # activations
            pl.BlockSpec(memory_space=pltpu.MemorySpace.SMEM),  # weights
            pl.BlockSpec(memory_space=pltpu.MemorySpace.SMEM),  # bias
        ],
        out_specs=pl.BlockSpec(memory_space=pltpu.MemorySpace.VMEM),
        scratch_shapes=[pltpu.VMEM((N * Cin, Hp, _LANES), jnp.float32)],
    )(x_nchw, w_flat, b)


def _reference_forward(x_nchw, weight_oihw, bias, *, need_sigmoid=True):
    K = weight_oihw.shape[-1]
    pad = (K - 1) // 2
    y = lax.conv_general_dilated(
        x_nchw.astype(jnp.float32), weight_oihw.astype(jnp.float32),
        window_strides=(1, 1), padding=((pad, pad), (pad, pad)),
        dimension_numbers=("NCHW", "OIHW", "NCHW"),
        precision=lax.Precision.HIGHEST)
    if bias is not None:
        y = y + bias[None, :, None, None]
    if need_sigmoid:
        y = jax.nn.sigmoid(y)
    return y.astype(x_nchw.dtype)


if __name__ == "__main__":
    # OutputBlock(in_channel=4, out_channel=3, kernel_size=3, bias=True,
    #             pad='zero', need_sigmoid=True)
    key = jax.random.PRNGKey(0)
    k_x, k_w, k_b = jax.random.split(key, 3)

    N, Cin, H, W = 2, 4, 16, 16
    Cout, K = 3, 3

    x = jax.random.normal(k_x, (N, Cin, H, W), dtype=jnp.float32)
    weight = jax.random.normal(k_w, (Cout, Cin, K, K), dtype=jnp.float32) * 0.1
    bias = jax.random.normal(k_b, (Cout,), dtype=jnp.float32) * 0.1

    out = output_block_forward(x, weight, bias, need_sigmoid=True)
    out = jax.block_until_ready(out)

    ref = _reference_forward(x, weight, bias, need_sigmoid=True)
    assert out.shape == (N, Cout, H, W)
    assert jnp.allclose(out, ref, atol=1e-4, rtol=1e-4), "mismatch vs reference"

    print("KERNEL_OK")
</pallas_src>

<mosaic_0001>
module attributes {stable_mosaic.version = 11 : i64} {
  func.func @_output_block_kernel(%arg0: memref<2x4x16x16xf32, #tpu.memory_space<vmem>>, %arg1: memref<108xf32, #tpu.memory_space<smem>>, %arg2: memref<3xf32, #tpu.memory_space<smem>>, %arg3: memref<2x3x16x16xf32, #tpu.memory_space<vmem>>, %arg4: memref<8x18x128xf32, #tpu.memory_space<vmem>>) attributes {dimension_semantics = [], scalar_prefetch = 0 : i64, scratch_operands = 1 : i64, tpu.core_type = #tpu.core_type<tc>} {
    %cst = arith.constant 0.000000e+00 : f32
    %0 = vector.broadcast %cst : f32 to vector<8x18x128xf32>
    %c0 = arith.constant 0 : index
    %c0_0 = arith.constant 0 : index
    %c0_1 = arith.constant 0 : index
    %1 = vector.load %arg4[%c0, %c0_0, %c0_1] : memref<8x18x128xf32, #tpu.memory_space<vmem>>, vector<8x18x128xf32>
    tpu.vector_store %arg4[%c0, %c0_0, %c0_1], %0 {strides = array<i32>} : memref<8x18x128xf32, #tpu.memory_space<vmem>>, vector<8x18x128xf32>,
    %c0_2 = arith.constant 0 : index
    %c0_3 = arith.constant 0 : index
    %c0_4 = arith.constant 0 : index
    %c0_5 = arith.constant 0 : index
    %2 = vector.load %arg0[%c0_2, %c0_3, %c0_4, %c0_5] : memref<2x4x16x16xf32, #tpu.memory_space<vmem>>, vector<1x1x16x16xf32>
    %3 = vector.shape_cast %2 : vector<1x1x16x16xf32> to vector<16x16xf32>
    %c0_6 = arith.constant 0 : index
    %c1 = arith.constant 1 : index
    %c0_7 = arith.constant 0 : index
    %4 = vector.load %arg4[%c0_6, %c1, %c0_7] : memref<8x18x128xf32, #tpu.memory_space<vmem>>, vector<1x16x16xf32>
    %5 = vector.shape_cast %4 : vector<1x16x16xf32> to vector<16x16xf32>
    %6 = vector.shape_cast %3 : vector<16x16xf32> to vector<1x16x16xf32>
    tpu.vector_store %arg4[%c0_6, %c1, %c0_7], %6 {strides = array<i32>} : memref<8x18x128xf32, #tpu.memory_space<vmem>>, vector<1x16x16xf32>,
    %c0_8 = arith.constant 0 : index
    %c1_9 = arith.constant 1 : index
    %c0_10 = arith.constant 0 : index
    %c0_11 = arith.constant 0 : index
    %7 = vector.load %arg0[%c0_8, %c1_9, %c0_10, %c0_11] : memref<2x4x16x16xf32, #tpu.memory_space<vmem>>, vector<1x1x16x16xf32>
    %8 = vector.shape_cast %7 : vector<1x1x16x16xf32> to vector<16x16xf32>
    %c1_12 = arith.constant 1 : index
    %c1_13 = arith.constant 1 : index
    %c0_14 = arith.constant 0 : index
    %9 = vector.load %arg4[%c1_12, %c1_13, %c0_14] : memref<8x18x128xf32, #tpu.memory_space<vmem>>, vector<1x16x16xf32>
    %10 = vector.shape_cast %9 : vector<1x16x16xf32> to vector<16x16xf32>
    %11 = vector.shape_cast %8 : vector<16x16xf32> to vector<1x16x16xf32>
    tpu.vector_store %arg4[%c1_12, %c1_13, %c0_14], %11 {strides = array<i32>} : memref<8x18x128xf32, #tpu.memory_space<vmem>>, vector<1x16x16xf32>,
    %c0_15 = arith.constant 0 : index
    %c2 = arith.constant 2 : index
    %c0_16 = arith.constant 0 : index
    %c0_17 = arith.constant 0 : index
    %12 = vector.load %arg0[%c0_15, %c2, %c0_16, %c0_17] : memref<2x4x16x16xf32, #tpu.memory_space<vmem>>, vector<1x1x16x16xf32>
    %13 = vector.shape_cast %12 : vector<1x1x16x16xf32> to vector<16x16xf32>
    %c2_18 = arith.constant 2 : index
    %c1_19 = arith.constant 1 : index
    %c0_20 = arith.constant 0 : index
    %14 = vector.load %arg4[%c2_18, %c1_19, %c0_20] : memref<8x18x128xf32, #tpu.memory_space<vmem>>, vector<1x16x16xf32>
    %15 = vector.shape_cast %14 : vector<1x16x16xf32> to vector<16x16xf32>
    %16 = vector.shape_cast %13 : vector<16x16xf32> to vector<1x16x16xf32>
    tpu.vector_store %arg4[%c2_18, %c1_19, %c0_20], %16 {strides = array<i32>} : memref<8x18x128xf32, #tpu.memory_space<vmem>>, vector<1x16x16xf32>,
    %c0_21 = arith.constant 0 : index
    %c3 = arith.constant 3 : index
    %c0_22 = arith.constant 0 : index
    %c0_23 = arith.constant 0 : index
    %17 = vector.load %arg0[%c0_21, %c3, %c0_22, %c0_23] : memref<2x4x16x16xf32, #tpu.memory_space<vmem>>, vector<1x1x16x16xf32>
    %18 = vector.shape_cast %17 : vector<1x1x16x16xf32> to vector<16x16xf32>
    %c3_24 = arith.constant 3 : index
    %c1_25 = arith.constant 1 : index
    %c0_26 = arith.constant 0 : index
    %19 = vector.load %arg4[%c3_24, %c1_25, %c0_26] : memref<8x18x128xf32, #tpu.memory_space<vmem>>, vector<1x16x16xf32>
    %20 = vector.shape_cast %19 : vector<1x16x16xf32> to vector<16x16xf32>
    %21 = vector.shape_cast %18 : vector<16x16xf32> to vector<1x16x16xf32>
    tpu.vector_store %arg4[%c3_24, %c1_25, %c0_26], %21 {strides = array<i32>} : memref<8x18x128xf32, #tpu.memory_space<vmem>>, vector<1x16x16xf32>,
    %c1_27 = arith.constant 1 : index
    %c0_28 = arith.constant 0 : index
    %c0_29 = arith.constant 0 : index
    %c0_30 = arith.constant 0 : index
    %22 = vector.load %arg0[%c1_27, %c0_28, %c0_29, %c0_30] : memref<2x4x16x16xf32, #tpu.memory_space<vmem>>, vector<1x1x16x16xf32>
    %23 = vector.shape_cast %22 : vector<1x1x16x16xf32> to vector<16x16xf32>
    %c4 = arith.constant 4 : index
    %c1_31 = arith.constant 1 : index
    %c0_32 = arith.constant 0 : index
    %24 = vector.load %arg4[%c4, %c1_31, %c0_32] : memref<8x18x128xf32, #tpu.memory_space<vmem>>, vector<1x16x16xf32>
    %25 = vector.shape_cast %24 : vector<1x16x16xf32> to vector<16x16xf32>
    %26 = vector.shape_cast %23 : vector<16x16xf32> to vector<1x16x16xf32>
    tpu.vector_store %arg4[%c4, %c1_31, %c0_32], %26 {strides = array<i32>} : memref<8x18x128xf32, #tpu.memory_space<vmem>>, vector<1x16x16xf32>,
    %c1_33 = arith.constant 1 : index
    %c1_34 = arith.constant 1 : index
    %c0_35 = arith.constant 0 : index
    %c0_36 = arith.constant 0 : index
    %27 = vector.load %arg0[%c1_33, %c1_34, %c0_35, %c0_36] : memref<2x4x16x16xf32, #tpu.memory_space<vmem>>, vector<1x1x16x16xf32>
    %28 = vector.shape_cast %27 : vector<1x1x16x16xf32> to vector<16x16xf32>
    %c5 = arith.constant 5 : index
    %c1_37 = arith.constant 1 : index
    %c0_38 = arith.constant 0 : index
    %29 = vector.load %arg4[%c5, %c1_37, %c0_38] : memref<8x18x128xf32, #tpu.memory_space<vmem>>, vector<1x16x16xf32>
    %30 = vector.shape_cast %29 : vector<1x16x16xf32> to vector<16x16xf32>
    %31 = vector.shape_cast %28 : vector<16x16xf32> to vector<1x16x16xf32>
    tpu.vector_store %arg4[%c5, %c1_37, %c0_38], %31 {strides = array<i32>} : memref<8x18x128xf32, #tpu.memory_space<vmem>>, vector<1x16x16xf32>,
    %c1_39 = arith.constant 1 : index
    %c2_40 = arith.constant 2 : index
    %c0_41 = arith.constant 0 : index
    %c0_42 = arith.constant 0 : index
    %32 = vector.load %arg0[%c1_39, %c2_40, %c0_41, %c0_42] : memref<2x4x16x16xf32, #tpu.memory_space<vmem>>, vector<1x1x16x16xf32>
    %33 = vector.shape_cast %32 : vector<1x1x16x16xf32> to vector<16x16xf32>
    %c6 = arith.constant 6 : index
    %c1_43 = arith.constant 1 : index
    %c0_44 = arith.constant 0 : index
    %34 = vector.load %arg4[%c6, %c1_43, %c0_44] : memref<8x18x128xf32, #tpu.memory_space<vmem>>, vector<1x16x16xf32>
    %35 = vector.shape_cast %34 : vector<1x16x16xf32> to vector<16x16xf32>
    %36 = vector.shape_cast %33 : vector<16x16xf32> to vector<1x16x16xf32>
    tpu.vector_store %arg4[%c6, %c1_43, %c0_44], %36 {strides = array<i32>} : memref<8x18x128xf32, #tpu.memory_space<vmem>>, vector<1x16x16xf32>,
    %c1_45 = arith.constant 1 : index
    %c3_46 = arith.constant 3 : index
    %c0_47 = arith.constant 0 : index
    %c0_48 = arith.constant 0 : index
    %37 = vector.load %arg0[%c1_45, %c3_46, %c0_47, %c0_48] : memref<2x4x16x16xf32, #tpu.memory_space<vmem>>, vector<1x1x16x16xf32>
    %38 = vector.shape_cast %37 : vector<1x1x16x16xf32> to vector<16x16xf32>
    %c7 = arith.constant 7 : index
    %c1_49 = arith.constant 1 : index
    %c0_50 = arith.constant 0 : index
    %39 = vector.load %arg4[%c7, %c1_49, %c0_50] : memref<8x18x128xf32, #tpu.memory_space<vmem>>, vector<1x16x16xf32>
    %40 = vector.shape_cast %39 : vector<1x16x16xf32> to vector<16x16xf32>
    %41 = vector.shape_cast %38 : vector<16x16xf32> to vector<1x16x16xf32>
    tpu.vector_store %arg4[%c7, %c1_49, %c0_50], %41 {strides = array<i32>} : memref<8x18x128xf32, #tpu.memory_space<vmem>>, vector<1x16x16xf32>,
    %cst_51 = arith.constant 0.000000e+00 : f32
    %42 = vector.broadcast %cst_51 : f32 to vector<16x128xf32>
    %cst_52 = arith.constant 0.000000e+00 : f32
    %43 = vector.broadcast %cst_52 : f32 to vector<16x128xf32>
    %cst_53 = arith.constant 0.000000e+00 : f32
    %44 = vector.broadcast %cst_53 : f32 to vector<16x128xf32>
    %c0_54 = arith.constant 0 : index
    %c0_55 = arith.constant 0 : index
    %c0_56 = arith.constant 0 : index
    %45 = vector.load %arg4[%c0_54, %c0_55, %c0_56] : memref<8x18x128xf32, #tpu.memory_space<vmem>>, vector<1x16x128xf32>
    %46 = vector.shape_cast %45 : vector<1x16x128xf32> to vector<16x128xf32>
    %c1_i32 = arith.constant 1 : i32
    %47 = tpu.dynamic_rotate %46 by %c1_i32 dim 1 : vector<16x128xf32>, i32 -> vector<16x128xf32>
    %c0_57 = arith.constant 0 : index
    %48 = memref.load %arg1[%c0_57] : memref<108xf32, #tpu.memory_space<smem>>
    %49 = vector.broadcast %48 : f32 to vector<16x128xf32>
    %50 = arith.mulf %49, %47 : vector<16x128xf32>
    %51 = arith.addf %42, %50 : vector<16x128xf32>
    %c36 = arith.constant 36 : index
    %52 = memref.load %arg1[%c36] : memref<108xf32, #tpu.memory_space<smem>>
    %53 = vector.broadcast %52 : f32 to vector<16x128xf32>
    %54 = arith.mulf %53, %47 : vector<16x128xf32>
    %55 = arith.addf %43, %54 : vector<16x128xf32>
    %c72 = arith.constant 72 : index
    %56 = memref.load %arg1[%c72] : memref<108xf32, #tpu.memory_space<smem>>
    %57 = vector.broadcast %56 : f32 to vector<16x128xf32>
    %58 = arith.mulf %57, %47 : vector<16x128xf32>
    %59 = arith.addf %44, %58 : vector<16x128xf32>
    %c1_58 = arith.constant 1 : index
    %60 = memref.load %arg1[%c1_58] : memref<108xf32, #tpu.memory_space<smem>>
    %61 = vector.broadcast %60 : f32 to vector<16x128xf32>
    %62 = arith.mulf %61, %46 : vector<16x128xf32>
    %63 = arith.addf %51, %62 : vector<16x128xf32>
    %c37 = arith.constant 37 : index
    %64 = memref.load %arg1[%c37] : memref<108xf32, #tpu.memory_space<smem>>
    %65 = vector.broadcast %64 : f32 to vector<16x128xf32>
    %66 = arith.mulf %65, %46 : vector<16x128xf32>
    %67 = arith.addf %55, %66 : vector<16x128xf32>
    %c73 = arith.constant 73 : index
    %68 = memref.load %arg1[%c73] : memref<108xf32, #tpu.memory_space<smem>>
    %69 = vector.broadcast %68 : f32 to vector<16x128xf32>
    %70 = arith.mulf %69, %46 : vector<16x128xf32>
    %71 = arith.addf %59, %70 : vector<16x128xf32>
    %c127_i32 = arith.constant 127 : i32
    %72 = tpu.dynamic_rotate %46 by %c127_i32 dim 1 : vector<16x128xf32>, i32 -> vector<16x128xf32>
    %c2_59 = arith.constant 2 : index
    %73 = memref.load %arg1[%c2_59] : memref<108xf32, #tpu.memory_space<smem>>
    %74 = vector.broadcast %73 : f32 to vector<16x128xf32>
    %75 = arith.mulf %74, %72 : vector<16x128xf32>
    %76 = arith.addf %63, %75 : vector<16x128xf32>
    %c38 = arith.constant 38 : index
    %77 = memref.load %arg1[%c38] : memref<108xf32, #tpu.memory_space<smem>>
    %78 = vector.broadcast %77 : f32 to vector<16x128xf32>
    %79 = arith.mulf %78, %72 : vector<16x128xf32>
    %80 = arith.addf %67, %79 : vector<16x128xf32>
    %c74 = arith.constant 74 : index
    %81 = memref.load %arg1[%c74] : memref<108xf32, #tpu.memory_space<smem>>
    %82 = vector.broadcast %81 : f32 to vector<16x128xf32>
    %83 = arith.mulf %82, %72 : vector<16x128xf32>
    %84 = arith.addf %71, %83 : vector<16x128xf32>
    %c0_60 = arith.constant 0 : index
    %c1_61 = arith.constant 1 : index
    %c0_62 = arith.constant 0 : index
    %85 = vector.load %arg4[%c0_60, %c1_61, %c0_62] : memref<8x18x128xf32, #tpu.memory_space<vmem>>, vector<1x16x128xf32>
    %86 = vector.shape_cast %85 : vector<1x16x128xf32> to vector<16x128xf32>
    %c1_i32_63 = arith.constant 1 : i32
    %87 = tpu.dynamic_rotate %86 by %c1_i32_63 dim 1 : vector<16x128xf32>, i32 -> vector<16x128xf32>
    %c3_64 = arith.constant 3 : index
    %88 = memref.load %arg1[%c3_64] : memref<108xf32, #tpu.memory_space<smem>>
    %89 = vector.broadcast %88 : f32 to vector<16x128xf32>
    %90 = arith.mulf %89, %87 : vector<16x128xf32>
    %91 = arith.addf %76, %90 : vector<16x128xf32>
    %c39 = arith.constant 39 : index
    %92 = memref.load %arg1[%c39] : memref<108xf32, #tpu.memory_space<smem>>
    %93 = vector.broadcast %92 : f32 to vector<16x128xf32>
    %94 = arith.mulf %93, %87 : vector<16x128xf32>
    %95 = arith.addf %80, %94 : vector<16x128xf32>
    %c75 = arith.constant 75 : index
    %96 = memref.load %arg1[%c75] : memref<108xf32, #tpu.memory_space<smem>>
    %97 = vector.broadcast %96 : f32 to vector<16x128xf32>
    %98 = arith.mulf %97, %87 : vector<16x128xf32>
    %99 = arith.addf %84, %98 : vector<16x128xf32>
    %c4_65 = arith.constant 4 : index
    %100 = memref.load %arg1[%c4_65] : memref<108xf32, #tpu.memory_space<smem>>
    %101 = vector.broadcast %100 : f32 to vector<16x128xf32>
    %102 = arith.mulf %101, %86 : vector<16x128xf32>
    %103 = arith.addf %91, %102 : vector<16x128xf32>
    %c40 = arith.constant 40 : index
    %104 = memref.load %arg1[%c40] : memref<108xf32, #tpu.memory_space<smem>>
    %105 = vector.broadcast %104 : f32 to vector<16x128xf32>
    %106 = arith.mulf %105, %86 : vector<16x128xf32>
    %107 = arith.addf %95, %106 : vector<16x128xf32>
    %c76 = arith.constant 76 : index
    %108 = memref.load %arg1[%c76] : memref<108xf32, #tpu.memory_space<smem>>
    %109 = vector.broadcast %108 : f32 to vector<16x128xf32>
    %110 = arith.mulf %109, %86 : vector<16x128xf32>
    %111 = arith.addf %99, %110 : vector<16x128xf32>
    %c127_i32_66 = arith.constant 127 : i32
    %112 = tpu.dynamic_rotate %86 by %c127_i32_66 dim 1 : vector<16x128xf32>, i32 -> vector<16x128xf32>
    %c5_67 = arith.constant 5 : index
    %113 = memref.load %arg1[%c5_67] : memref<108xf32, #tpu.memory_space<smem>>
    %114 = vector.broadcast %113 : f32 to vector<16x128xf32>
    %115 = arith.mulf %114, %112 : vector<16x128xf32>
    %116 = arith.addf %103, %115 : vector<16x128xf32>
    %c41 = arith.constant 41 : index
    %117 = memref.load %arg1[%c41] : memref<108xf32, #tpu.memory_space<smem>>
    %118 = vector.broadcast %117 : f32 to vector<16x128xf32>
    %119 = arith.mulf %118, %112 : vector<16x128xf32>
    %120 = arith.addf %107, %119 : vector<16x128xf32>
    %c77 = arith.constant 77 : index
    %121 = memref.load %arg1[%c77] : memref<108xf32, #tpu.memory_space<smem>>
    %122 = vector.broadcast %121 : f32 to vector<16x128xf32>
    %123 = arith.mulf %122, %112 : vector<16x128xf32>
    %124 = arith.addf %111, %123 : vector<16x128xf32>
    %c0_68 = arith.constant 0 : index
    %c2_69 = arith.constant 2 : index
    %c0_70 = arith.constant 0 : index
    %125 = vector.load %arg4[%c0_68, %c2_69, %c0_70] : memref<8x18x128xf32, #tpu.memory_space<vmem>>, vector<1x16x128xf32>
    %126 = vector.shape_cast %125 : vector<1x16x128xf32> to vector<16x128xf32>
    %c1_i32_71 = arith.constant 1 : i32
    %127 = tpu.dynamic_rotate %126 by %c1_i32_71 dim 1 : vector<16x128xf32>, i32 -> vector<16x128xf32>
    %c6_72 = arith.constant 6 : index
    %128 = memref.load %arg1[%c6_72] : memref<108xf32, #tpu.memory_space<smem>>
    %129 = vector.broadcast %128 : f32 to vector<16x128xf32>
    %130 = arith.mulf %129, %127 : vector<16x128xf32>
    %131 = arith.addf %116, %130 : vector<16x128xf32>
    %c42 = arith.constant 42 : index
    %132 = memref.load %arg1[%c42] : memref<108xf32, #tpu.memory_space<smem>>
    %133 = vector.broadcast %132 : f32 to vector<16x128xf32>
    %134 = arith.mulf %133, %127 : vector<16x128xf32>
    %135 = arith.addf %120, %134 : vector<16x128xf32>
    %c78 = arith.constant 78 : index
    %136 = memref.load %arg1[%c78] : memref<108xf32, #tpu.memory_space<smem>>
    %137 = vector.broadcast %136 : f32 to vector<16x128xf32>
    %138 = arith.mulf %137, %127 : vector<16x128xf32>
    %139 = arith.addf %124, %138 : vector<16x128xf32>
    %c7_73 = arith.constant 7 : index
    %140 = memref.load %arg1[%c7_73] : memref<108xf32, #tpu.memory_space<smem>>
    %141 = vector.broadcast %140 : f32 to vector<16x128xf32>
    %142 = arith.mulf %141, %126 : vector<16x128xf32>
    %143 = arith.addf %131, %142 : vector<16x128xf32>
    %c43 = arith.constant 43 : index
    %144 = memref.load %arg1[%c43] : memref<108xf32, #tpu.memory_space<smem>>
    %145 = vector.broadcast %144 : f32 to vector<16x128xf32>
    %146 = arith.mulf %145, %126 : vector<16x128xf32>
    %147 = arith.addf %135, %146 : vector<16x128xf32>
    %c79 = arith.constant 79 : index
    %148 = memref.load %arg1[%c79] : memref<108xf32, #tpu.memory_space<smem>>
    %149 = vector.broadcast %148 : f32 to vector<16x128xf32>
    %150 = arith.mulf %149, %126 : vector<16x128xf32>
    %151 = arith.addf %139, %150 : vector<16x128xf32>
    %c127_i32_74 = arith.constant 127 : i32
    %152 = tpu.dynamic_rotate %126 by %c127_i32_74 dim 1 : vector<16x128xf32>, i32 -> vector<16x128xf32>
    %c8 = arith.constant 8 : index
    %153 = memref.load %arg1[%c8] : memref<108xf32, #tpu.memory_space<smem>>
    %154 = vector.broadcast %153 : f32 to vector<16x128xf32>
    %155 = arith.mulf %154, %152 : vector<16x128xf32>
    %156 = arith.addf %143, %155 : vector<16x128xf32>
    %c44 = arith.constant 44 : index
    %157 = memref.load %arg1[%c44] : memref<108xf32, #tpu.memory_space<smem>>
    %158 = vector.broadcast %157 : f32 to vector<16x128xf32>
    %159 = arith.mulf %158, %152 : vector<16x128xf32>
    %160 = arith.addf %147, %159 : vector<16x128xf32>
    %c80 = arith.constant 80 : index
    %161 = memref.load %arg1[%c80] : memref<108xf32, #tpu.memory_space<smem>>
    %162 = vector.broadcast %161 : f32 to vector<16x128xf32>
    %163 = arith.mulf %162, %152 : vector<16x128xf32>
    %164 = arith.addf %151, %163 : vector<16x128xf32>
    %c1_75 = arith.constant 1 : index
    %c0_76 = arith.constant 0 : index
    %c0_77 = arith.constant 0 : index
    %165 = vector.load %arg4[%c1_75, %c0_76, %c0_77] : memref<8x18x128xf32, #tpu.memory_space<vmem>>, vector<1x16x128xf32>
    %166 = vector.shape_cast %165 : vector<1x16x128xf32> to vector<16x128xf32>
    %c1_i32_78 = arith.constant 1 : i32
    %167 = tpu.dynamic_rotate %166 by %c1_i32_78 dim 1 : vector<16x128xf32>, i32 -> vector<16x128xf32>
    %c9 = arith.constant 9 : index
    %168 = memref.load %arg1[%c9] : memref<108xf32, #tpu.memory_space<smem>>
    %169 = vector.broadcast %168 : f32 to vector<16x128xf32>
    %170 = arith.mulf %169, %167 : vector<16x128xf32>
    %171 = arith.addf %156, %170 : vector<16x128xf32>
    %c45 = arith.constant 45 : index
    %172 = memref.load %arg1[%c45] : memref<108xf32, #tpu.memory_space<smem>>
    %173 = vector.broadcast %172 : f32 to vector<16x128xf32>
    %174 = arith.mulf %173, %167 : vector<16x128xf32>
    %175 = arith.addf %160, %174 : vector<16x128xf32>
    %c81 = arith.constant 81 : index
    %176 = memref.load %arg1[%c81] : memref<108xf32, #tpu.memory_space<smem>>
    %177 = vector.broadcast %176 : f32 to vector<16x128xf32>
    %178 = arith.mulf %177, %167 : vector<16x128xf32>
    %179 = arith.addf %164, %178 : vector<16x128xf32>
    %c10 = arith.constant 10 : index
    %180 = memref.load %arg1[%c10] : memref<108xf32, #tpu.memory_space<smem>>
    %181 = vector.broadcast %180 : f32 to vector<16x128xf32>
    %182 = arith.mulf %181, %166 : vector<16x128xf32>
    %183 = arith.addf %171, %182 : vector<16x128xf32>
    %c46 = arith.constant 46 : index
    %184 = memref.load %arg1[%c46] : memref<108xf32, #tpu.memory_space<smem>>
    %185 = vector.broadcast %184 : f32 to vector<16x128xf32>
    %186 = arith.mulf %185, %166 : vector<16x128xf32>
    %187 = arith.addf %175, %186 : vector<16x128xf32>
    %c82 = arith.constant 82 : index
    %188 = memref.load %arg1[%c82] : memref<108xf32, #tpu.memory_space<smem>>
    %189 = vector.broadcast %188 : f32 to vector<16x128xf32>
    %190 = arith.mulf %189, %166 : vector<16x128xf32>
    %191 = arith.addf %179, %190 : vector<16x128xf32>
    %c127_i32_79 = arith.constant 127 : i32
    %192 = tpu.dynamic_rotate %166 by %c127_i32_79 dim 1 : vector<16x128xf32>, i32 -> vector<16x128xf32>
    %c11 = arith.constant 11 : index
    %193 = memref.load %arg1[%c11] : memref<108xf32, #tpu.memory_space<smem>>
    %194 = vector.broadcast %193 : f32 to vector<16x128xf32>
    %195 = arith.mulf %194, %192 : vector<16x128xf32>
    %196 = arith.addf %183, %195 : vector<16x128xf32>
    %c47 = arith.constant 47 : index
    %197 = memref.load %arg1[%c47] : memref<108xf32, #tpu.memory_space<smem>>
    %198 = vector.broadcast %197 : f32 to vector<16x128xf32>
    %199 = arith.mulf %198, %192 : vector<16x128xf32>
    %200 = arith.addf %187, %199 : vector<16x128xf32>
    %c83 = arith.constant 83 : index
    %201 = memref.load %arg1[%c83] : memref<108xf32, #tpu.memory_space<smem>>
    %202 = vector.broadcast %201 : f32 to vector<16x128xf32>
    %203 = arith.mulf %202, %192 : vector<16x128xf32>
    %204 = arith.addf %191, %203 : vector<16x128xf32>
    %c1_80 = arith.constant 1 : index
    %c1_81 = arith.constant 1 : index
    %c0_82 = arith.constant 0 : index
    %205 = vector.load %arg4[%c1_80, %c1_81, %c0_82] : memref<8x18x128xf32, #tpu.memory_space<vmem>>, vector<1x16x128xf32>
    %206 = vector.shape_cast %205 : vector<1x16x128xf32> to vector<16x128xf32>
    %c1_i32_83 = arith.constant 1 : i32
    %207 = tpu.dynamic_rotate %206 by %c1_i32_83 dim 1 : vector<16x128xf32>, i32 -> vector<16x128xf32>
    %c12 = arith.constant 12 : index
    %208 = memref.load %arg1[%c12] : memref<108xf32, #tpu.memory_space<smem>>
    %209 = vector.broadcast %208 : f32 to vector<16x128xf32>
    %210 = arith.mulf %209, %207 : vector<16x128xf32>
    %211 = arith.addf %196, %210 : vector<16x128xf32>
    %c48 = arith.constant 48 : index
    %212 = memref.load %arg1[%c48] : memref<108xf32, #tpu.memory_space<smem>>
    %213 = vector.broadcast %212 : f32 to vector<16x128xf32>
    %214 = arith.mulf %213, %207 : vector<16x128xf32>
    %215 = arith.addf %200, %214 : vector<16x128xf32>
    %c84 = arith.constant 84 : index
    %216 = memref.load %arg1[%c84] : memref<108xf32, #tpu.memory_space<smem>>
    %217 = vector.broadcast %216 : f32 to vector<16x128xf32>
    %218 = arith.mulf %217, %207 : vector<16x128xf32>
    %219 = arith.addf %204, %218 : vector<16x128xf32>
    %c13 = arith.constant 13 : index
    %220 = memref.load %arg1[%c13] : memref<108xf32, #tpu.memory_space<smem>>
    %221 = vector.broadcast %220 : f32 to vector<16x128xf32>
    %222 = arith.mulf %221, %206 : vector<16x128xf32>
    %223 = arith.addf %211, %222 : vector<16x128xf32>
    %c49 = arith.constant 49 : index
    %224 = memref.load %arg1[%c49] : memref<108xf32, #tpu.memory_space<smem>>
    %225 = vector.broadcast %224 : f32 to vector<16x128xf32>
    %226 = arith.mulf %225, %206 : vector<16x128xf32>
    %227 = arith.addf %215, %226 : vector<16x128xf32>
    %c85 = arith.constant 85 : index
    %228 = memref.load %arg1[%c85] : memref<108xf32, #tpu.memory_space<smem>>
    %229 = vector.broadcast %228 : f32 to vector<16x128xf32>
    %230 = arith.mulf %229, %206 : vector<16x128xf32>
    %231 = arith.addf %219, %230 : vector<16x128xf32>
    %c127_i32_84 = arith.constant 127 : i32
    %232 = tpu.dynamic_rotate %206 by %c127_i32_84 dim 1 : vector<16x128xf32>, i32 -> vector<16x128xf32>
    %c14 = arith.constant 14 : index
    %233 = memref.load %arg1[%c14] : memref<108xf32, #tpu.memory_space<smem>>
    %234 = vector.broadcast %233 : f32 to vector<16x128xf32>
    %235 = arith.mulf %234, %232 : vector<16x128xf32>
    %236 = arith.addf %223, %235 : vector<16x128xf32>
    %c50 = arith.constant 50 : index
    %237 = memref.load %arg1[%c50] : memref<108xf32, #tpu.memory_space<smem>>
    %238 = vector.broadcast %237 : f32 to vector<16x128xf32>
    %239 = arith.mulf %238, %232 : vector<16x128xf32>
    %240 = arith.addf %227, %239 : vector<16x128xf32>
    %c86 = arith.constant 86 : index
    %241 = memref.load %arg1[%c86] : memref<108xf32, #tpu.memory_space<smem>>
    %242 = vector.broadcast %241 : f32 to vector<16x128xf32>
    %243 = arith.mulf %242, %232 : vector<16x128xf32>
    %244 = arith.addf %231, %243 : vector<16x128xf32>
    %c1_85 = arith.constant 1 : index
    %c2_86 = arith.constant 2 : index
    %c0_87 = arith.constant 0 : index
    %245 = vector.load %arg4[%c1_85, %c2_86, %c0_87] : memref<8x18x128xf32, #tpu.memory_space<vmem>>, vector<1x16x128xf32>
    %246 = vector.shape_cast %245 : vector<1x16x128xf32> to vector<16x128xf32>
    %c1_i32_88 = arith.constant 1 : i32
    %247 = tpu.dynamic_rotate %246 by %c1_i32_88 dim 1 : vector<16x128xf32>, i32 -> vector<16x128xf32>
    %c15 = arith.constant 15 : index
    %248 = memref.load %arg1[%c15] : memref<108xf32, #tpu.memory_space<smem>>
    %249 = vector.broadcast %248 : f32 to vector<16x128xf32>
    %250 = arith.mulf %249, %247 : vector<16x128xf32>
    %251 = arith.addf %236, %250 : vector<16x128xf32>
    %c51 = arith.constant 51 : index
    %252 = memref.load %arg1[%c51] : memref<108xf32, #tpu.memory_space<smem>>
    %253 = vector.broadcast %252 : f32 to vector<16x128xf32>
    %254 = arith.mulf %253, %247 : vector<16x128xf32>
    %255 = arith.addf %240, %254 : vector<16x128xf32>
    %c87 = arith.constant 87 : index
    %256 = memref.load %arg1[%c87] : memref<108xf32, #tpu.memory_space<smem>>
    %257 = vector.broadcast %256 : f32 to vector<16x128xf32>
    %258 = arith.mulf %257, %247 : vector<16x128xf32>
    %259 = arith.addf %244, %258 : vector<16x128xf32>
    %c16 = arith.constant 16 : index
    %260 = memref.load %arg1[%c16] : memref<108xf32, #tpu.memory_space<smem>>
    %261 = vector.broadcast %260 : f32 to vector<16x128xf32>
    %262 = arith.mulf %261, %246 : vector<16x128xf32>
    %263 = arith.addf %251, %262 : vector<16x128xf32>
    %c52 = arith.constant 52 : index
    %264 = memref.load %arg1[%c52] : memref<108xf32, #tpu.memory_space<smem>>
    %265 = vector.broadcast %264 : f32 to vector<16x128xf32>
    %266 = arith.mulf %265, %246 : vector<16x128xf32>
    %267 = arith.addf %255, %266 : vector<16x128xf32>
    %c88 = arith.constant 88 : index
    %268 = memref.load %arg1[%c88] : memref<108xf32, #tpu.memory_space<smem>>
    %269 = vector.broadcast %268 : f32 to vector<16x128xf32>
    %270 = arith.mulf %269, %246 : vector<16x128xf32>
    %271 = arith.addf %259, %270 : vector<16x128xf32>
    %c127_i32_89 = arith.constant 127 : i32
    %272 = tpu.dynamic_rotate %246 by %c127_i32_89 dim 1 : vector<16x128xf32>, i32 -> vector<16x128xf32>
    %c17 = arith.constant 17 : index
    %273 = memref.load %arg1[%c17] : memref<108xf32, #tpu.memory_space<smem>>
    %274 = vector.broadcast %273 : f32 to vector<16x128xf32>
    %275 = arith.mulf %274, %272 : vector<16x128xf32>
    %276 = arith.addf %263, %275 : vector<16x128xf32>
    %c53 = arith.constant 53 : index
    %277 = memref.load %arg1[%c53] : memref<108xf32, #tpu.memory_space<smem>>
    %278 = vector.broadcast %277 : f32 to vector<16x128xf32>
    %279 = arith.mulf %278, %272 : vector<16x128xf32>
    %280 = arith.addf %267, %279 : vector<16x128xf32>
    %c89 = arith.constant 89 : index
    %281 = memref.load %arg1[%c89] : memref<108xf32, #tpu.memory_space<smem>>
    %282 = vector.broadcast %281 : f32 to vector<16x128xf32>
    %283 = arith.mulf %282, %272 : vector<16x128xf32>
    %284 = arith.addf %271, %283 : vector<16x128xf32>
    %c2_90 = arith.constant 2 : index
    %c0_91 = arith.constant 0 : index
    %c0_92 = arith.constant 0 : index
    %285 = vector.load %arg4[%c2_90, %c0_91, %c0_92] : memref<8x18x128xf32, #tpu.memory_space<vmem>>, vector<1x16x128xf32>
    %286 = vector.shape_cast %285 : vector<1x16x128xf32> to vector<16x128xf32>
    %c1_i32_93 = arith.constant 1 : i32
    %287 = tpu.dynamic_rotate %286 by %c1_i32_93 dim 1 : vector<16x128xf32>, i32 -> vector<16x128xf32>
    %c18 = arith.constant 18 : index
    %288 = memref.load %arg1[%c18] : memref<108xf32, #tpu.memory_space<smem>>
    %289 = vector.broadcast %288 : f32 to vector<16x128xf32>
    %290 = arith.mulf %289, %287 : vector<16x128xf32>
    %291 = arith.addf %276, %290 : vector<16x128xf32>
    %c54 = arith.constant 54 : index
    %292 = memref.load %arg1[%c54] : memref<108xf32, #tpu.memory_space<smem>>
    %293 = vector.broadcast %292 : f32 to vector<16x128xf32>
    %294 = arith.mulf %293, %287 : vector<16x128xf32>
    %295 = arith.addf %280, %294 : vector<16x128xf32>
    %c90 = arith.constant 90 : index
    %296 = memref.load %arg1[%c90] : memref<108xf32, #tpu.memory_space<smem>>
    %297 = vector.broadcast %296 : f32 to vector<16x128xf32>
    %298 = arith.mulf %297, %287 : vector<16x128xf32>
    %299 = arith.addf %284, %298 : vector<16x128xf32>
    %c19 = arith.constant 19 : index
    %300 = memref.load %arg1[%c19] : memref<108xf32, #tpu.memory_space<smem>>
    %301 = vector.broadcast %300 : f32 to vector<16x128xf32>
    %302 = arith.mulf %301, %286 : vector<16x128xf32>
    %303 = arith.addf %291, %302 : vector<16x128xf32>
    %c55 = arith.constant 55 : index
    %304 = memref.load %arg1[%c55] : memref<108xf32, #tpu.memory_space<smem>>
    %305 = vector.broadcast %304 : f32 to vector<16x128xf32>
    %306 = arith.mulf %305, %286 : vector<16x128xf32>
    %307 = arith.addf %295, %306 : vector<16x128xf32>
    %c91 = arith.constant 91 : index
    %308 = memref.load %arg1[%c91] : memref<108xf32, #tpu.memory_space<smem>>
    %309 = vector.broadcast %308 : f32 to vector<16x128xf32>
    %310 = arith.mulf %309, %286 : vector<16x128xf32>
    %311 = arith.addf %299, %310 : vector<16x128xf32>
    %c127_i32_94 = arith.constant 127 : i32
    %312 = tpu.dynamic_rotate %286 by %c127_i32_94 dim 1 : vector<16x128xf32>, i32 -> vector<16x128xf32>
    %c20 = arith.constant 20 : index
    %313 = memref.load %arg1[%c20] : memref<108xf32, #tpu.memory_space<smem>>
    %314 = vector.broadcast %313 : f32 to vector<16x128xf32>
    %315 = arith.mulf %314, %312 : vector<16x128xf32>
    %316 = arith.addf %303, %315 : vector<16x128xf32>
    %c56 = arith.constant 56 : index
    %317 = memref.load %arg1[%c56] : memref<108xf32, #tpu.memory_space<smem>>
    %318 = vector.broadcast %317 : f32 to vector<16x128xf32>
    %319 = arith.mulf %318, %312 : vector<16x128xf32>
    %320 = arith.addf %307, %319 : vector<16x128xf32>
    %c92 = arith.constant 92 : index
    %321 = memref.load %arg1[%c92] : memref<108xf32, #tpu.memory_space<smem>>
    %322 = vector.broadcast %321 : f32 to vector<16x128xf32>
    %323 = arith.mulf %322, %312 : vector<16x128xf32>
    %324 = arith.addf %311, %323 : vector<16x128xf32>
    %c2_95 = arith.constant 2 : index
    %c1_96 = arith.constant 1 : index
    %c0_97 = arith.constant 0 : index
    %325 = vector.load %arg4[%c2_95, %c1_96, %c0_97] : memref<8x18x128xf32, #tpu.memory_space<vmem>>, vector<1x16x128xf32>
    %326 = vector.shape_cast %325 : vector<1x16x128xf32> to vector<16x128xf32>
    %c1_i32_98 = arith.constant 1 : i32
    %327 = tpu.dynamic_rotate %326 by %c1_i32_98 dim 1 : vector<16x128xf32>, i32 -> vector<16x128xf32>
    %c21 = arith.constant 21 : index
    %328 = memref.load %arg1[%c21] : memref<108xf32, #tpu.memory_space<smem>>
    %329 = vector.broadcast %328 : f32 to vector<16x128xf32>
    %330 = arith.mulf %329, %327 : vector<16x128xf32>
    %331 = arith.addf %316, %330 : vector<16x128xf32>
    %c57 = arith.constant 57 : index
    %332 = memref.load %arg1[%c57] : memref<108xf32, #tpu.memory_space<smem>>
    %333 = vector.broadcast %332 : f32 to vector<16x128xf32>
    %334 = arith.mulf %333, %327 : vector<16x128xf32>
    %335 = arith.addf %320, %334 : vector<16x128xf32>
    %c93 = arith.constant 93 : index
    %336 = memref.load %arg1[%c93] : memref<108xf32, #tpu.memory_space<smem>>
    %337 = vector.broadcast %336 : f32 to vector<16x128xf32>
    %338 = arith.mulf %337, %327 : vector<16x128xf32>
    %339 = arith.addf %324, %338 : vector<16x128xf32>
    %c22 = arith.constant 22 : index
    %340 = memref.load %arg1[%c22] : memref<108xf32, #tpu.memory_space<smem>>
    %341 = vector.broadcast %340 : f32 to vector<16x128xf32>
    %342 = arith.mulf %341, %326 : vector<16x128xf32>
    %343 = arith.addf %331, %342 : vector<16x128xf32>
    %c58 = arith.constant 58 : index
    %344 = memref.load %arg1[%c58] : memref<108xf32, #tpu.memory_space<smem>>
    %345 = vector.broadcast %344 : f32 to vector<16x128xf32>
    %346 = arith.mulf %345, %326 : vector<16x128xf32>
    %347 = arith.addf %335, %346 : vector<16x128xf32>
    %c94 = arith.constant 94 : index
    %348 = memref.load %arg1[%c94] : memref<108xf32, #tpu.memory_space<smem>>
    %349 = vector.broadcast %348 : f32 to vector<16x128xf32>
    %350 = arith.mulf %349, %326 : vector<16x128xf32>
    %351 = arith.addf %339, %350 : vector<16x128xf32>
    %c127_i32_99 = arith.constant 127 : i32
    %352 = tpu.dynamic_rotate %326 by %c127_i32_99 dim 1 : vector<16x128xf32>, i32 -> vector<16x128xf32>
    %c23 = arith.constant 23 : index
    %353 = memref.load %arg1[%c23] : memref<108xf32, #tpu.memory_space<smem>>
    %354 = vector.broadcast %353 : f32 to vector<16x128xf32>
    %355 = arith.mulf %354, %352 : vector<16x128xf32>
    %356 = arith.addf %343, %355 : vector<16x128xf32>
    %c59 = arith.constant 59 : index
    %357 = memref.load %arg1[%c59] : memref<108xf32, #tpu.memory_space<smem>>
    %358 = vector.broadcast %357 : f32 to vector<16x128xf32>
    %359 = arith.mulf %358, %352 : vector<16x128xf32>
    %360 = arith.addf %347, %359 : vector<16x128xf32>
    %c95 = arith.constant 95 : index
    %361 = memref.load %arg1[%c95] : memref<108xf32, #tpu.memory_space<smem>>
    %362 = vector.broadcast %361 : f32 to vector<16x128xf32>
    %363 = arith.mulf %362, %352 : vector<16x128xf32>
    %364 = arith.addf %351, %363 : vector<16x128xf32>
    %c2_100 = arith.constant 2 : index
    %c2_101 = arith.constant 2 : index
    %c0_102 = arith.constant 0 : index
    %365 = vector.load %arg4[%c2_100, %c2_101, %c0_102] : memref<8x18x128xf32, #tpu.memory_space<vmem>>, vector<1x16x128xf32>
    %366 = vector.shape_cast %365 : vector<1x16x128xf32> to vector<16x128xf32>
    %c1_i32_103 = arith.constant 1 : i32
    %367 = tpu.dynamic_rotate %366 by %c1_i32_103 dim 1 : vector<16x128xf32>, i32 -> vector<16x128xf32>
    %c24 = arith.constant 24 : index
    %368 = memref.load %arg1[%c24] : memref<108xf32, #tpu.memory_space<smem>>
    %369 = vector.broadcast %368 : f32 to vector<16x128xf32>
    %370 = arith.mulf %369, %367 : vector<16x128xf32>
    %371 = arith.addf %356, %370 : vector<16x128xf32>
    %c60 = arith.constant 60 : index
    %372 = memref.load %arg1[%c60] : memref<108xf32, #tpu.memory_space<smem>>
    %373 = vector.broadcast %372 : f32 to vector<16x128xf32>
    %374 = arith.mulf %373, %367 : vector<16x128xf32>
    %375 = arith.addf %360, %374 : vector<16x128xf32>
    %c96 = arith.constant 96 : index
    %376 = memref.load %arg1[%c96] : memref<108xf32, #tpu.memory_space<smem>>
    %377 = vector.broadcast %376 : f32 to vector<16x128xf32>
    %378 = arith.mulf %377, %367 : vector<16x128xf32>
    %379 = arith.addf %364, %378 : vector<16x128xf32>
    %c25 = arith.constant 25 : index
    %380 = memref.load %arg1[%c25] : memref<108xf32, #tpu.memory_space<smem>>
    %381 = vector.broadcast %380 : f32 to vector<16x128xf32>
    %382 = arith.mulf %381, %366 : vector<16x128xf32>
    %383 = arith.addf %371, %382 : vector<16x128xf32>
    %c61 = arith.constant 61 : index
    %384 = memref.load %arg1[%c61] : memref<108xf32, #tpu.memory_space<smem>>
    %385 = vector.broadcast %384 : f32 to vector<16x128xf32>
    %386 = arith.mulf %385, %366 : vector<16x128xf32>
    %387 = arith.addf %375, %386 : vector<16x128xf32>
    %c97 = arith.constant 97 : index
    %388 = memref.load %arg1[%c97] : memref<108xf32, #tpu.memory_space<smem>>
    %389 = vector.broadcast %388 : f32 to vector<16x128xf32>
    %390 = arith.mulf %389, %366 : vector<16x128xf32>
    %391 = arith.addf %379, %390 : vector<16x128xf32>
    %c127_i32_104 = arith.constant 127 : i32
    %392 = tpu.dynamic_rotate %366 by %c127_i32_104 dim 1 : vector<16x128xf32>, i32 -> vector<16x128xf32>
    %c26 = arith.constant 26 : index
    %393 = memref.load %arg1[%c26] : memref<108xf32, #tpu.memory_space<smem>>
    %394 = vector.broadcast %393 : f32 to vector<16x128xf32>
    %395 = arith.mulf %394, %392 : vector<16x128xf32>
    %396 = arith.addf %383, %395 : vector<16x128xf32>
    %c62 = arith.constant 62 : index
    %397 = memref.load %arg1[%c62] : memref<108xf32, #tpu.memory_space<smem>>
    %398 = vector.broadcast %397 : f32 to vector<16x128xf32>
    %399 = arith.mulf %398, %392 : vector<16x128xf32>
    %400 = arith.addf %387, %399 : vector<16x128xf32>
    %c98 = arith.constant 98 : index
    %401 = memref.load %arg1[%c98] : memref<108xf32, #tpu.memory_space<smem>>
    %402 = vector.broadcast %401 : f32 to vector<16x128xf32>
    %403 = arith.mulf %402, %392 : vector<16x128xf32>
    %404 = arith.addf %391, %403 : vector<16x128xf32>
    %c3_105 = arith.constant 3 : index
    %c0_106 = arith.constant 0 : index
    %c0_107 = arith.constant 0 : index
    %405 = vector.load %arg4[%c3_105, %c0_106, %c0_107] : memref<8x18x128xf32, #tpu.memory_space<vmem>>, vector<1x16x128xf32>
    %406 = vector.shape_cast %405 : vector<1x16x128xf32> to vector<16x128xf32>
    %c1_i32_108 = arith.constant 1 : i32
    %407 = tpu.dynamic_rotate %406 by %c1_i32_108 dim 1 : vector<16x128xf32>, i32 -> vector<16x128xf32>
    %c27 = arith.constant 27 : index
    %408 = memref.load %arg1[%c27] : memref<108xf32, #tpu.memory_space<smem>>
    %409 = vector.broadcast %408 : f32 to vector<16x128xf32>
    %410 = arith.mulf %409, %407 : vector<16x128xf32>
    %411 = arith.addf %396, %410 : vector<16x128xf32>
    %c63 = arith.constant 63 : index
    %412 = memref.load %arg1[%c63] : memref<108xf32, #tpu.memory_space<smem>>
    %413 = vector.broadcast %412 : f32 to vector<16x128xf32>
    %414 = arith.mulf %413, %407 : vector<16x128xf32>
    %415 = arith.addf %400, %414 : vector<16x128xf32>
    %c99 = arith.constant 99 : index
    %416 = memref.load %arg1[%c99] : memref<108xf32, #tpu.memory_space<smem>>
    %417 = vector.broadcast %416 : f32 to vector<16x128xf32>
    %418 = arith.mulf %417, %407 : vector<16x128xf32>
    %419 = arith.addf %404, %418 : vector<16x128xf32>
    %c28 = arith.constant 28 : index
    %420 = memref.load %arg1[%c28] : memref<108xf32, #tpu.memory_space<smem>>
    %421 = vector.broadcast %420 : f32 to vector<16x128xf32>
    %422 = arith.mulf %421, %406 : vector<16x128xf32>
    %423 = arith.addf %411, %422 : vector<16x128xf32>
    %c64 = arith.constant 64 : index
    %424 = memref.load %arg1[%c64] : memref<108xf32, #tpu.memory_space<smem>>
    %425 = vector.broadcast %424 : f32 to vector<16x128xf32>
    %426 = arith.mulf %425, %406 : vector<16x128xf32>
    %427 = arith.addf %415, %426 : vector<16x128xf32>
    %c100 = arith.constant 100 : index
    %428 = memref.load %arg1[%c100] : memref<108xf32, #tpu.memory_space<smem>>
    %429 = vector.broadcast %428 : f32 to vector<16x128xf32>
    %430 = arith.mulf %429, %406 : vector<16x128xf32>
    %431 = arith.addf %419, %430 : vector<16x128xf32>
    %c127_i32_109 = arith.constant 127 : i32
    %432 = tpu.dynamic_rotate %406 by %c127_i32_109 dim 1 : vector<16x128xf32>, i32 -> vector<16x128xf32>
    %c29 = arith.constant 29 : index
    %433 = memref.load %arg1[%c29] : memref<108xf32, #tpu.memory_space<smem>>
    %434 = vector.broadcast %433 : f32 to vector<16x128xf32>
    %435 = arith.mulf %434, %432 : vector<16x128xf32>
    %436 = arith.addf %423, %435 : vector<16x128xf32>
    %c65 = arith.constant 65 : index
    %437 = memref.load %arg1[%c65] : memref<108xf32, #tpu.memory_space<smem>>
    %438 = vector.broadcast %437 : f32 to vector<16x128xf32>
    %439 = arith.mulf %438, %432 : vector<16x128xf32>
    %440 = arith.addf %427, %439 : vector<16x128xf32>
    %c101 = arith.constant 101 : index
    %441 = memref.load %arg1[%c101] : memref<108xf32, #tpu.memory_space<smem>>
    %442 = vector.broadcast %441 : f32 to vector<16x128xf32>
    %443 = arith.mulf %442, %432 : vector<16x128xf32>
    %444 = arith.addf %431, %443 : vector<16x128xf32>
    %c3_110 = arith.constant 3 : index
    %c1_111 = arith.constant 1 : index
    %c0_112 = arith.constant 0 : index
    %445 = vector.load %arg4[%c3_110, %c1_111, %c0_112] : memref<8x18x128xf32, #tpu.memory_space<vmem>>, vector<1x16x128xf32>
    %446 = vector.shape_cast %445 : vector<1x16x128xf32> to vector<16x128xf32>
    %c1_i32_113 = arith.constant 1 : i32
    %447 = tpu.dynamic_rotate %446 by %c1_i32_113 dim 1 : vector<16x128xf32>, i32 -> vector<16x128xf32>
    %c30 = arith.constant 30 : index
    %448 = memref.load %arg1[%c30] : memref<108xf32, #tpu.memory_space<smem>>
    %449 = vector.broadcast %448 : f32 to vector<16x128xf32>
    %450 = arith.mulf %449, %447 : vector<16x128xf32>
    %451 = arith.addf %436, %450 : vector<16x128xf32>
    %c66 = arith.constant 66 : index
    %452 = memref.load %arg1[%c66] : memref<108xf32, #tpu.memory_space<smem>>
    %453 = vector.broadcast %452 : f32 to vector<16x128xf32>
    %454 = arith.mulf %453, %447 : vector<16x128xf32>
    %455 = arith.addf %440, %454 : vector<16x128xf32>
    %c102 = arith.constant 102 : index
    %456 = memref.load %arg1[%c102] : memref<108xf32, #tpu.memory_space<smem>>
    %457 = vector.broadcast %456 : f32 to vector<16x128xf32>
    %458 = arith.mulf %457, %447 : vector<16x128xf32>
    %459 = arith.addf %444, %458 : vector<16x128xf32>
    %c31 = arith.constant 31 : index
    %460 = memref.load %arg1[%c31] : memref<108xf32, #tpu.memory_space<smem>>
    %461 = vector.broadcast %460 : f32 to vector<16x128xf32>
    %462 = arith.mulf %461, %446 : vector<16x128xf32>
    %463 = arith.addf %451, %462 : vector<16x128xf32>
    %c67 = arith.constant 67 : index
    %464 = memref.load %arg1[%c67] : memref<108xf32, #tpu.memory_space<smem>>
    %465 = vector.broadcast %464 : f32 to vector<16x128xf32>
    %466 = arith.mulf %465, %446 : vector<16x128xf32>
    %467 = arith.addf %455, %466 : vector<16x128xf32>
    %c103 = arith.constant 103 : index
    %468 = memref.load %arg1[%c103] : memref<108xf32, #tpu.memory_space<smem>>
    %469 = vector.broadcast %468 : f32 to vector<16x128xf32>
    %470 = arith.mulf %469, %446 : vector<16x128xf32>
    %471 = arith.addf %459, %470 : vector<16x128xf32>
    %c127_i32_114 = arith.constant 127 : i32
    %472 = tpu.dynamic_rotate %446 by %c127_i32_114 dim 1 : vector<16x128xf32>, i32 -> vector<16x128xf32>
    %c32 = arith.constant 32 : index
    %473 = memref.load %arg1[%c32] : memref<108xf32, #tpu.memory_space<smem>>
    %474 = vector.broadcast %473 : f32 to vector<16x128xf32>
    %475 = arith.mulf %474, %472 : vector<16x128xf32>
    %476 = arith.addf %463, %475 : vector<16x128xf32>
    %c68 = arith.constant 68 : index
    %477 = memref.load %arg1[%c68] : memref<108xf32, #tpu.memory_space<smem>>
    %478 = vector.broadcast %477 : f32 to vector<16x128xf32>
    %479 = arith.mulf %478, %472 : vector<16x128xf32>
    %480 = arith.addf %467, %479 : vector<16x128xf32>
    %c104 = arith.constant 104 : index
    %481 = memref.load %arg1[%c104] : memref<108xf32, #tpu.memory_space<smem>>
    %482 = vector.broadcast %481 : f32 to vector<16x128xf32>
    %483 = arith.mulf %482, %472 : vector<16x128xf32>
    %484 = arith.addf %471, %483 : vector<16x128xf32>
    %c3_115 = arith.constant 3 : index
    %c2_116 = arith.constant 2 : index
    %c0_117 = arith.constant 0 : index
    %485 = vector.load %arg4[%c3_115, %c2_116, %c0_117] : memref<8x18x128xf32, #tpu.memory_space<vmem>>, vector<1x16x128xf32>
    %486 = vector.shape_cast %485 : vector<1x16x128xf32> to vector<16x128xf32>
    %c1_i32_118 = arith.constant 1 : i32
    %487 = tpu.dynamic_rotate %486 by %c1_i32_118 dim 1 : vector<16x128xf32>, i32 -> vector<16x128xf32>
    %c33 = arith.constant 33 : index
    %488 = memref.load %arg1[%c33] : memref<108xf32, #tpu.memory_space<smem>>
    %489 = vector.broadcast %488 : f32 to vector<16x128xf32>
    %490 = arith.mulf %489, %487 : vector<16x128xf32>
    %491 = arith.addf %476, %490 : vector<16x128xf32>
    %c69 = arith.constant 69 : index
    %492 = memref.load %arg1[%c69] : memref<108xf32, #tpu.memory_space<smem>>
    %493 = vector.broadcast %492 : f32 to vector<16x128xf32>
    %494 = arith.mulf %493, %487 : vector<16x128xf32>
    %495 = arith.addf %480, %494 : vector<16x128xf32>
    %c105 = arith.constant 105 : index
    %496 = memref.load %arg1[%c105] : memref<108xf32, #tpu.memory_space<smem>>
    %497 = vector.broadcast %496 : f32 to vector<16x128xf32>
    %498 = arith.mulf %497, %487 : vector<16x128xf32>
    %499 = arith.addf %484, %498 : vector<16x128xf32>
    %c34 = arith.constant 34 : index
    %500 = memref.load %arg1[%c34] : memref<108xf32, #tpu.memory_space<smem>>
    %501 = vector.broadcast %500 : f32 to vector<16x128xf32>
    %502 = arith.mulf %501, %486 : vector<16x128xf32>
    %503 = arith.addf %491, %502 : vector<16x128xf32>
    %c70 = arith.constant 70 : index
    %504 = memref.load %arg1[%c70] : memref<108xf32, #tpu.memory_space<smem>>
    %505 = vector.broadcast %504 : f32 to vector<16x128xf32>
    %506 = arith.mulf %505, %486 : vector<16x128xf32>
    %507 = arith.addf %495, %506 : vector<16x128xf32>
    %c106 = arith.constant 106 : index
    %508 = memref.load %arg1[%c106] : memref<108xf32, #tpu.memory_space<smem>>
    %509 = vector.broadcast %508 : f32 to vector<16x128xf32>
    %510 = arith.mulf %509, %486 : vector<16x128xf32>
    %511 = arith.addf %499, %510 : vector<16x128xf32>
    %c127_i32_119 = arith.constant 127 : i32
    %512 = tpu.dynamic_rotate %486 by %c127_i32_119 dim 1 : vector<16x128xf32>, i32 -> vector<16x128xf32>
    %c35 = arith.constant 35 : index
    %513 = memref.load %arg1[%c35] : memref<108xf32, #tpu.memory_space<smem>>
    %514 = vector.broadcast %513 : f32 to vector<16x128xf32>
    %515 = arith.mulf %514, %512 : vector<16x128xf32>
    %516 = arith.addf %503, %515 : vector<16x128xf32>
    %c71 = arith.constant 71 : index
    %517 = memref.load %arg1[%c71] : memref<108xf32, #tpu.memory_space<smem>>
    %518 = vector.broadcast %517 : f32 to vector<16x128xf32>
    %519 = arith.mulf %518, %512 : vector<16x128xf32>
    %520 = arith.addf %507, %519 : vector<16x128xf32>
    %c107 = arith.constant 107 : index
    %521 = memref.load %arg1[%c107] : memref<108xf32, #tpu.memory_space<smem>>
    %522 = vector.broadcast %521 : f32 to vector<16x128xf32>
    %523 = arith.mulf %522, %512 : vector<16x128xf32>
    %524 = arith.addf %511, %523 : vector<16x128xf32>
    %c0_120 = arith.constant 0 : index
    %525 = memref.load %arg2[%c0_120] : memref<3xf32, #tpu.memory_space<smem>>
    %526 = vector.broadcast %525 : f32 to vector<16x128xf32>
    %527 = arith.addf %516, %526 : vector<16x128xf32>
    %cst_121 = arith.constant 0.000000e+00 : f32
    %528 = vector.broadcast %cst_121 : f32 to vector<16x128xf32>
    %529 = arith.subf %528, %527 : vector<16x128xf32>
    %530 = math.exp %529 : vector<16x128xf32>
    %cst_122 = arith.constant 1.000000e+00 : f32
    %531 = vector.broadcast %cst_122 : f32 to vector<16x128xf32>
    %532 = arith.addf %531, %530 : vector<16x128xf32>
    %cst_123 = arith.constant 1.000000e+00 : f32
    %533 = vector.broadcast %cst_123 : f32 to vector<16x128xf32>
    %534 = arith.divf %533, %532 : vector<16x128xf32>
    %535 = vector.extract_strided_slice %534 {offsets = [0, 0], sizes = [16, 16], strides = [1, 1]} : vector<16x128xf32> to vector<16x16xf32>
    %c0_124 = arith.constant 0 : index
    %c0_125 = arith.constant 0 : index
    %c0_126 = arith.constant 0 : index
    %c0_127 = arith.constant 0 : index
    %536 = vector.load %arg3[%c0_124, %c0_125, %c0_126, %c0_127] : memref<2x3x16x16xf32, #tpu.memory_space<vmem>>, vector<1x1x16x16xf32>
    %537 = vector.shape_cast %536 : vector<1x1x16x16xf32> to vector<16x16xf32>
    %538 = vector.shape_cast %535 : vector<16x16xf32> to vector<1x1x16x16xf32>
    tpu.vector_store %arg3[%c0_124, %c0_125, %c0_126, %c0_127], %538 {strides = array<i32>} : memref<2x3x16x16xf32, #tpu.memory_space<vmem>>, vector<1x1x16x16xf32>,
    %c1_128 = arith.constant 1 : index
    %539 = memref.load %arg2[%c1_128] : memref<3xf32, #tpu.memory_space<smem>>
    %540 = vector.broadcast %539 : f32 to vector<16x128xf32>
    %541 = arith.addf %520, %540 : vector<16x128xf32>
    %cst_129 = arith.constant 0.000000e+00 : f32
    %542 = vector.broadcast %cst_129 : f32 to vector<16x128xf32>
    %543 = arith.subf %542, %541 : vector<16x128xf32>
    %544 = math.exp %543 : vector<16x128xf32>
    %cst_130 = arith.constant 1.000000e+00 : f32
    %545 = vector.broadcast %cst_130 : f32 to vector<16x128xf32>
    %546 = arith.addf %545, %544 : vector<16x128xf32>
    %cst_131 = arith.constant 1.000000e+00 : f32
    %547 = vector.broadcast %cst_131 : f32 to vector<16x128xf32>
    %548 = arith.divf %547, %546 : vector<16x128xf32>
    %549 = vector.extract_strided_slice %548 {offsets = [0, 0], sizes = [16, 16], strides = [1, 1]} : vector<16x128xf32> to vector<16x16xf32>
    %c0_132 = arith.constant 0 : index
    %c1_133 = arith.constant 1 : index
    %c0_134 = arith.constant 0 : index
    %c0_135 = arith.constant 0 : index
    %550 = vector.load %arg3[%c0_132, %c1_133, %c0_134, %c0_135] : memref<2x3x16x16xf32, #tpu.memory_space<vmem>>, vector<1x1x16x16xf32>
    %551 = vector.shape_cast %550 : vector<1x1x16x16xf32> to vector<16x16xf32>
    %552 = vector.shape_cast %549 : vector<16x16xf32> to vector<1x1x16x16xf32>
    tpu.vector_store %arg3[%c0_132, %c1_133, %c0_134, %c0_135], %552 {strides = array<i32>} : memref<2x3x16x16xf32, #tpu.memory_space<vmem>>, vector<1x1x16x16xf32>,
    %c2_136 = arith.constant 2 : index
    %553 = memref.load %arg2[%c2_136] : memref<3xf32, #tpu.memory_space<smem>>
    %554 = vector.broadcast %553 : f32 to vector<16x128xf32>
    %555 = arith.addf %524, %554 : vector<16x128xf32>
    %cst_137 = arith.constant 0.000000e+00 : f32
    %556 = vector.broadcast %cst_137 : f32 to vector<16x128xf32>
    %557 = arith.subf %556, %555 : vector<16x128xf32>
    %558 = math.exp %557 : vector<16x128xf32>
    %cst_138 = arith.constant 1.000000e+00 : f32
    %559 = vector.broadcast %cst_138 : f32 to vector<16x128xf32>
    %560 = arith.addf %559, %558 : vector<16x128xf32>
    %cst_139 = arith.constant 1.000000e+00 : f32
    %561 = vector.broadcast %cst_139 : f32 to vector<16x128xf32>
    %562 = arith.divf %561, %560 : vector<16x128xf32>
    %563 = vector.extract_strided_slice %562 {offsets = [0, 0], sizes = [16, 16], strides = [1, 1]} : vector<16x128xf32> to vector<16x16xf32>
    %c0_140 = arith.constant 0 : index
    %c2_141 = arith.constant 2 : index
    %c0_142 = arith.constant 0 : index
    %c0_143 = arith.constant 0 : index
    %564 = vector.load %arg3[%c0_140, %c2_141, %c0_142, %c0_143] : memref<2x3x16x16xf32, #tpu.memory_space<vmem>>, vector<1x1x16x16xf32>
    %565 = vector.shape_cast %564 : vector<1x1x16x16xf32> to vector<16x16xf32>
    %566 = vector.shape_cast %563 : vector<16x16xf32> to vector<1x1x16x16xf32>
    tpu.vector_store %arg3[%c0_140, %c2_141, %c0_142, %c0_143], %566 {strides = array<i32>} : memref<2x3x16x16xf32, #tpu.memory_space<vmem>>, vector<1x1x16x16xf32>,
    %cst_144 = arith.constant 0.000000e+00 : f32
    %567 = vector.broadcast %cst_144 : f32 to vector<16x128xf32>
    %cst_145 = arith.constant 0.000000e+00 : f32
    %568 = vector.broadcast %cst_145 : f32 to vector<16x128xf32>
    %cst_146 = arith.constant 0.000000e+00 : f32
    %569 = vector.broadcast %cst_146 : f32 to vector<16x128xf32>
    %c4_147 = arith.constant 4 : index
    %c0_148 = arith.constant 0 : index
    %c0_149 = arith.constant 0 : index
    %570 = vector.load %arg4[%c4_147, %c0_148, %c0_149] : memref<8x18x128xf32, #tpu.memory_space<vmem>>, vector<1x16x128xf32>
    %571 = vector.shape_cast %570 : vector<1x16x128xf32> to vector<16x128xf32>
    %c1_i32_150 = arith.constant 1 : i32
    %572 = tpu.dynamic_rotate %571 by %c1_i32_150 dim 1 : vector<16x128xf32>, i32 -> vector<16x128xf32>
    %c0_151 = arith.constant 0 : index
    %573 = memref.load %arg1[%c0_151] : memref<108xf32, #tpu.memory_space<smem>>
    %574 = vector.broadcast %573 : f32 to vector<16x128xf32>
    %575 = arith.mulf %574, %572 : vector<16x128xf32>
    %576 = arith.addf %567, %575 : vector<16x128xf32>
    %c36_152 = arith.constant 36 : index
    %577 = memref.load %arg1[%c36_152] : memref<108xf32, #tpu.memory_space<smem>>
    %578 = vector.broadcast %577 : f32 to vector<16x128xf32>
    %579 = arith.mulf %578, %572 : vector<16x128xf32>
    %580 = arith.addf %568, %579 : vector<16x128xf32>
    %c72_153 = arith.constant 72 : index
    %581 = memref.load %arg1[%c72_153] : memref<108xf32, #tpu.memory_space<smem>>
    %582 = vector.broadcast %581 : f32 to vector<16x128xf32>
    %583 = arith.mulf %582, %572 : vector<16x128xf32>
    %584 = arith.addf %569, %583 : vector<16x128xf32>
    %c1_154 = arith.constant 1 : index
    %585 = memref.load %arg1[%c1_154] : memref<108xf32, #tpu.memory_space<smem>>
    %586 = vector.broadcast %585 : f32 to vector<16x128xf32>
    %587 = arith.mulf %586, %571 : vector<16x128xf32>
    %588 = arith.addf %576, %587 : vector<16x128xf32>
    %c37_155 = arith.constant 37 : index
    %589 = memref.load %arg1[%c37_155] : memref<108xf32, #tpu.memory_space<smem>>
    %590 = vector.broadcast %589 : f32 to vector<16x128xf32>
    %591 = arith.mulf %590, %571 : vector<16x128xf32>
    %592 = arith.addf %580, %591 : vector<16x128xf32>
    %c73_156 = arith.constant 73 : index
    %593 = memref.load %arg1[%c73_156] : memref<108xf32, #tpu.memory_space<smem>>
    %594 = vector.broadcast %593 : f32 to vector<16x128xf32>
    %595 = arith.mulf %594, %571 : vector<16x128xf32>
    %596 = arith.addf %584, %595 : vector<16x128xf32>
    %c127_i32_157 = arith.constant 127 : i32
    %597 = tpu.dynamic_rotate %571 by %c127_i32_157 dim 1 : vector<16x128xf32>, i32 -> vector<16x128xf32>
    %c2_158 = arith.constant 2 : index
    %598 = memref.load %arg1[%c2_158] : memref<108xf32, #tpu.memory_space<smem>>
    %599 = vector.broadcast %598 : f32 to vector<16x128xf32>
    %600 = arith.mulf %599, %597 : vector<16x128xf32>
    %601 = arith.addf %588, %600 : vector<16x128xf32>
    %c38_159 = arith.constant 38 : index
    %602 = memref.load %arg1[%c38_159] : memref<108xf32, #tpu.memory_space<smem>>
    %603 = vector.broadcast %602 : f32 to vector<16x128xf32>
    %604 = arith.mulf %603, %597 : vector<16x128xf32>
    %605 = arith.addf %592, %604 : vector<16x128xf32>
    %c74_160 = arith.constant 74 : index
    %606 = memref.load %arg1[%c74_160] : memref<108xf32, #tpu.memory_space<smem>>
    %607 = vector.broadcast %606 : f32 to vector<16x128xf32>
    %608 = arith.mulf %607, %597 : vector<16x128xf32>
    %609 = arith.addf %596, %608 : vector<16x128xf32>
    %c4_161 = arith.constant 4 : index
    %c1_162 = arith.constant 1 : index
    %c0_163 = arith.constant 0 : index
    %610 = vector.load %arg4[%c4_161, %c1_162, %c0_163] : memref<8x18x128xf32, #tpu.memory_space<vmem>>, vector<1x16x128xf32>
    %611 = vector.shape_cast %610 : vector<1x16x128xf32> to vector<16x128xf32>
    %c1_i32_164 = arith.constant 1 : i32
    %612 = tpu.dynamic_rotate %611 by %c1_i32_164 dim 1 : vector<16x128xf32>, i32 -> vector<16x128xf32>
    %c3_165 = arith.constant 3 : index
    %613 = memref.load %arg1[%c3_165] : memref<108xf32, #tpu.memory_space<smem>>
    %614 = vector.broadcast %613 : f32 to vector<16x128xf32>
    %615 = arith.mulf %614, %612 : vector<16x128xf32>
    %616 = arith.addf %601, %615 : vector<16x128xf32>
    %c39_166 = arith.constant 39 : index
    %617 = memref.load %arg1[%c39_166] : memref<108xf32, #tpu.memory_space<smem>>
    %618 = vector.broadcast %617 : f32 to vector<16x128xf32>
    %619 = arith.mulf %618, %612 : vector<16x128xf32>
    %620 = arith.addf %605, %619 : vector<16x128xf32>
    %c75_167 = arith.constant 75 : index
    %621 = memref.load %arg1[%c75_167] : memref<108xf32, #tpu.memory_space<smem>>
    %622 = vector.broadcast %621 : f32 to vector<16x128xf32>
    %623 = arith.mulf %622, %612 : vector<16x128xf32>
    %624 = arith.addf %609, %623 : vector<16x128xf32>
    %c4_168 = arith.constant 4 : index
    %625 = memref.load %arg1[%c4_168] : memref<108xf32, #tpu.memory_space<smem>>
    %626 = vector.broadcast %625 : f32 to vector<16x128xf32>
    %627 = arith.mulf %626, %611 : vector<16x128xf32>
    %628 = arith.addf %616, %627 : vector<16x128xf32>
    %c40_169 = arith.constant 40 : index
    %629 = memref.load %arg1[%c40_169] : memref<108xf32, #tpu.memory_space<smem>>
    %630 = vector.broadcast %629 : f32 to vector<16x128xf32>
    %631 = arith.mulf %630, %611 : vector<16x128xf32>
    %632 = arith.addf %620, %631 : vector<16x128xf32>
    %c76_170 = arith.constant 76 : index
    %633 = memref.load %arg1[%c76_170] : memref<108xf32, #tpu.memory_space<smem>>
    %634 = vector.broadcast %633 : f32 to vector<16x128xf32>
    %635 = arith.mulf %634, %611 : vector<16x128xf32>
    %636 = arith.addf %624, %635 : vector<16x128xf32>
    %c127_i32_171 = arith.constant 127 : i32
    %637 = tpu.dynamic_rotate %611 by %c127_i32_171 dim 1 : vector<16x128xf32>, i32 -> vector<16x128xf32>
    %c5_172 = arith.constant 5 : index
    %638 = memref.load %arg1[%c5_172] : memref<108xf32, #tpu.memory_space<smem>>
    %639 = vector.broadcast %638 : f32 to vector<16x128xf32>
    %640 = arith.mulf %639, %637 : vector<16x128xf32>
    %641 = arith.addf %628, %640 : vector<16x128xf32>
    %c41_173 = arith.constant 41 : index
    %642 = memref.load %arg1[%c41_173] : memref<108xf32, #tpu.memory_space<smem>>
    %643 = vector.broadcast %642 : f32 to vector<16x128xf32>
    %644 = arith.mulf %643, %637 : vector<16x128xf32>
    %645 = arith.addf %632, %644 : vector<16x128xf32>
    %c77_174 = arith.constant 77 : index
    %646 = memref.load %arg1[%c77_174] : memref<108xf32, #tpu.memory_space<smem>>
    %647 = vector.broadcast %646 : f32 to vector<16x128xf32>
    %648 = arith.mulf %647, %637 : vector<16x128xf32>
    %649 = arith.addf %636, %648 : vector<16x128xf32>
    %c4_175 = arith.constant 4 : index
    %c2_176 = arith.constant 2 : index
    %c0_177 = arith.constant 0 : index
    %650 = vector.load %arg4[%c4_175, %c2_176, %c0_177] : memref<8x18x128xf32, #tpu.memory_space<vmem>>, vector<1x16x128xf32>
    %651 = vector.shape_cast %650 : vector<1x16x128xf32> to vector<16x128xf32>
    %c1_i32_178 = arith.constant 1 : i32
    %652 = tpu.dynamic_rotate %651 by %c1_i32_178 dim 1 : vector<16x128xf32>, i32 -> vector<16x128xf32>
    %c6_179 = arith.constant 6 : index
    %653 = memref.load %arg1[%c6_179] : memref<108xf32, #tpu.memory_space<smem>>
    %654 = vector.broadcast %653 : f32 to vector<16x128xf32>
    %655 = arith.mulf %654, %652 : vector<16x128xf32>
    %656 = arith.addf %641, %655 : vector<16x128xf32>
    %c42_180 = arith.constant 42 : index
    %657 = memref.load %arg1[%c42_180] : memref<108xf32, #tpu.memory_space<smem>>
    %658 = vector.broadcast %657 : f32 to vector<16x128xf32>
    %659 = arith.mulf %658, %652 : vector<16x128xf32>
    %660 = arith.addf %645, %659 : vector<16x128xf32>
    %c78_181 = arith.constant 78 : index
    %661 = memref.load %arg1[%c78_181] : memref<108xf32, #tpu.memory_space<smem>>
    %662 = vector.broadcast %661 : f32 to vector<16x128xf32>
    %663 = arith.mulf %662, %652 : vector<16x128xf32>
    %664 = arith.addf %649, %663 : vector<16x128xf32>
    %c7_182 = arith.constant 7 : index
    %665 = memref.load %arg1[%c7_182] : memref<108xf32, #tpu.memory_space<smem>>
    %666 = vector.broadcast %665 : f32 to vector<16x128xf32>
    %667 = arith.mulf %666, %651 : vector<16x128xf32>
    %668 = arith.addf %656, %667 : vector<16x128xf32>
    %c43_183 = arith.constant 43 : index
    %669 = memref.load %arg1[%c43_183] : memref<108xf32, #tpu.memory_space<smem>>
    %670 = vector.broadcast %669 : f32 to vector<16x128xf32>
    %671 = arith.mulf %670, %651 : vector<16x128xf32>
    %672 = arith.addf %660, %671 : vector<16x128xf32>
    %c79_184 = arith.constant 79 : index
    %673 = memref.load %arg1[%c79_184] : memref<108xf32, #tpu.memory_space<smem>>
    %674 = vector.broadcast %673 : f32 to vector<16x128xf32>
    %675 = arith.mulf %674, %651 : vector<16x128xf32>
    %676 = arith.addf %664, %675 : vector<16x128xf32>
    %c127_i32_185 = arith.constant 127 : i32
    %677 = tpu.dynamic_rotate %651 by %c127_i32_185 dim 1 : vector<16x128xf32>, i32 -> vector<16x128xf32>
    %c8_186 = arith.constant 8 : index
    %678 = memref.load %arg1[%c8_186] : memref<108xf32, #tpu.memory_space<smem>>
    %679 = vector.broadcast %678 : f32 to vector<16x128xf32>
    %680 = arith.mulf %679, %677 : vector<16x128xf32>
    %681 = arith.addf %668, %680 : vector<16x128xf32>
    %c44_187 = arith.constant 44 : index
    %682 = memref.load %arg1[%c44_187] : memref<108xf32, #tpu.memory_space<smem>>
    %683 = vector.broadcast %682 : f32 to vector<16x128xf32>
    %684 = arith.mulf %683, %677 : vector<16x128xf32>
    %685 = arith.addf %672, %684 : vector<16x128xf32>
    %c80_188 = arith.constant 80 : index
    %686 = memref.load %arg1[%c80_188] : memref<108xf32, #tpu.memory_space<smem>>
    %687 = vector.broadcast %686 : f32 to vector<16x128xf32>
    %688 = arith.mulf %687, %677 : vector<16x128xf32>
    %689 = arith.addf %676, %688 : vector<16x128xf32>
    %c5_189 = arith.constant 5 : index
    %c0_190 = arith.constant 0 : index
    %c0_191 = arith.constant 0 : index
    %690 = vector.load %arg4[%c5_189, %c0_190, %c0_191] : memref<8x18x128xf32, #tpu.memory_space<vmem>>, vector<1x16x128xf32>
    %691 = vector.shape_cast %690 : vector<1x16x128xf32> to vector<16x128xf32>
    %c1_i32_192 = arith.constant 1 : i32
    %692 = tpu.dynamic_rotate %691 by %c1_i32_192 dim 1 : vector<16x128xf32>, i32 -> vector<16x128xf32>
    %c9_193 = arith.constant 9 : index
    %693 = memref.load %arg1[%c9_193] : memref<108xf32, #tpu.memory_space<smem>>
    %694 = vector.broadcast %693 : f32 to vector<16x128xf32>
    %695 = arith.mulf %694, %692 : vector<16x128xf32>
    %696 = arith.addf %681, %695 : vector<16x128xf32>
    %c45_194 = arith.constant 45 : index
    %697 = memref.load %arg1[%c45_194] : memref<108xf32, #tpu.memory_space<smem>>
    %698 = vector.broadcast %697 : f32 to vector<16x128xf32>
    %699 = arith.mulf %698, %692 : vector<16x128xf32>
    %700 = arith.addf %685, %699 : vector<16x128xf32>
    %c81_195 = arith.constant 81 : index
    %701 = memref.load %arg1[%c81_195] : memref<108xf32, #tpu.memory_space<smem>>
    %702 = vector.broadcast %701 : f32 to vector<16x128xf32>
    %703 = arith.mulf %702, %692 : vector<16x128xf32>
    %704 = arith.addf %689, %703 : vector<16x128xf32>
    %c10_196 = arith.constant 10 : index
    %705 = memref.load %arg1[%c10_196] : memref<108xf32, #tpu.memory_space<smem>>
    %706 = vector.broadcast %705 : f32 to vector<16x128xf32>
    %707 = arith.mulf %706, %691 : vector<16x128xf32>
    %708 = arith.addf %696, %707 : vector<16x128xf32>
    %c46_197 = arith.constant 46 : index
    %709 = memref.load %arg1[%c46_197] : memref<108xf32, #tpu.memory_space<smem>>
    %710 = vector.broadcast %709 : f32 to vector<16x128xf32>
    %711 = arith.mulf %710, %691 : vector<16x128xf32>
    %712 = arith.addf %700, %711 : vector<16x128xf32>
    %c82_198 = arith.constant 82 : index
    %713 = memref.load %arg1[%c82_198] : memref<108xf32, #tpu.memory_space<smem>>
    %714 = vector.broadcast %713 : f32 to vector<16x128xf32>
    %715 = arith.mulf %714, %691 : vector<16x128xf32>
    %716 = arith.addf %704, %715 : vector<16x128xf32>
    %c127_i32_199 = arith.constant 127 : i32
    %717 = tpu.dynamic_rotate %691 by %c127_i32_199 dim 1 : vector<16x128xf32>, i32 -> vector<16x128xf32>
    %c11_200 = arith.constant 11 : index
    %718 = memref.load %arg1[%c11_200] : memref<108xf32, #tpu.memory_space<smem>>
    %719 = vector.broadcast %718 : f32 to vector<16x128xf32>
    %720 = arith.mulf %719, %717 : vector<16x128xf32>
    %721 = arith.addf %708, %720 : vector<16x128xf32>
    %c47_201 = arith.constant 47 : index
    %722 = memref.load %arg1[%c47_201] : memref<108xf32, #tpu.memory_space<smem>>
    %723 = vector.broadcast %722 : f32 to vector<16x128xf32>
    %724 = arith.mulf %723, %717 : vector<16x128xf32>
    %725 = arith.addf %712, %724 : vector<16x128xf32>
    %c83_202 = arith.constant 83 : index
    %726 = memref.load %arg1[%c83_202] : memref<108xf32, #tpu.memory_space<smem>>
    %727 = vector.broadcast %726 : f32 to vector<16x128xf32>
    %728 = arith.mulf %727, %717 : vector<16x128xf32>
    %729 = arith.addf %716, %728 : vector<16x128xf32>
    %c5_203 = arith.constant 5 : index
    %c1_204 = arith.constant 1 : index
    %c0_205 = arith.constant 0 : index
    %730 = vector.load %arg4[%c5_203, %c1_204, %c0_205] : memref<8x18x128xf32, #tpu.memory_space<vmem>>, vector<1x16x128xf32>
    %731 = vector.shape_cast %730 : vector<1x16x128xf32> to vector<16x128xf32>
    %c1_i32_206 = arith.constant 1 : i32
    %732 = tpu.dynamic_rotate %731 by %c1_i32_206 dim 1 : vector<16x128xf32>, i32 -> vector<16x128xf32>
    %c12_207 = arith.constant 12 : index
    %733 = memref.load %arg1[%c12_207] : memref<108xf32, #tpu.memory_space<smem>>
    %734 = vector.broadcast %733 : f32 to vector<16x128xf32>
    %735 = arith.mulf %734, %732 : vector<16x128xf32>
    %736 = arith.addf %721, %735 : vector<16x128xf32>
    %c48_208 = arith.constant 48 : index
    %737 = memref.load %arg1[%c48_208] : memref<108xf32, #tpu.memory_space<smem>>
    %738 = vector.broadcast %737 : f32 to vector<16x128xf32>
    %739 = arith.mulf %738, %732 : vector<16x128xf32>
    %740 = arith.addf %725, %739 : vector<16x128xf32>
    %c84_209 = arith.constant 84 : index
    %741 = memref.load %arg1[%c84_209] : memref<108xf32, #tpu.memory_space<smem>>
    %742 = vector.broadcast %741 : f32 to vector<16x128xf32>
    %743 = arith.mulf %742, %732 : vector<16x128xf32>
    %744 = arith.addf %729, %743 : vector<16x128xf32>
    %c13_210 = arith.constant 13 : index
    %745 = memref.load %arg1[%c13_210] : memref<108xf32, #tpu.memory_space<smem>>
    %746 = vector.broadcast %745 : f32 to vector<16x128xf32>
    %747 = arith.mulf %746, %731 : vector<16x128xf32>
    %748 = arith.addf %736, %747 : vector<16x128xf32>
    %c49_211 = arith.constant 49 : index
    %749 = memref.load %arg1[%c49_211] : memref<108xf32, #tpu.memory_space<smem>>
    %750 = vector.broadcast %749 : f32 to vector<16x128xf32>
    %751 = arith.mulf %750, %731 : vector<16x128xf32>
    %752 = arith.addf %740, %751 : vector<16x128xf32>
    %c85_212 = arith.constant 85 : index
    %753 = memref.load %arg1[%c85_212] : memref<108xf32, #tpu.memory_space<smem>>
    %754 = vector.broadcast %753 : f32 to vector<16x128xf32>
    %755 = arith.mulf %754, %731 : vector<16x128xf32>
    %756 = arith.addf %744, %755 : vector<16x128xf32>
    %c127_i32_213 = arith.constant 127 : i32
    %757 = tpu.dynamic_rotate %731 by %c127_i32_213 dim 1 : vector<16x128xf32>, i32 -> vector<16x128xf32>
    %c14_214 = arith.constant 14 : index
    %758 = memref.load %arg1[%c14_214] : memref<108xf32, #tpu.memory_space<smem>>
    %759 = vector.broadcast %758 : f32 to vector<16x128xf32>
    %760 = arith.mulf %759, %757 : vector<16x128xf32>
    %761 = arith.addf %748, %760 : vector<16x128xf32>
    %c50_215 = arith.constant 50 : index
    %762 = memref.load %arg1[%c50_215] : memref<108xf32, #tpu.memory_space<smem>>
    %763 = vector.broadcast %762 : f32 to vector<16x128xf32>
    %764 = arith.mulf %763, %757 : vector<16x128xf32>
    %765 = arith.addf %752, %764 : vector<16x128xf32>
    %c86_216 = arith.constant 86 : index
    %766 = memref.load %arg1[%c86_216] : memref<108xf32, #tpu.memory_space<smem>>
    %767 = vector.broadcast %766 : f32 to vector<16x128xf32>
    %768 = arith.mulf %767, %757 : vector<16x128xf32>
    %769 = arith.addf %756, %768 : vector<16x128xf32>
    %c5_217 = arith.constant 5 : index
    %c2_218 = arith.constant 2 : index
    %c0_219 = arith.constant 0 : index
    %770 = vector.load %arg4[%c5_217, %c2_218, %c0_219] : memref<8x18x128xf32, #tpu.memory_space<vmem>>, vector<1x16x128xf32>
    %771 = vector.shape_cast %770 : vector<1x16x128xf32> to vector<16x128xf32>
    %c1_i32_220 = arith.constant 1 : i32
    %772 = tpu.dynamic_rotate %771 by %c1_i32_220 dim 1 : vector<16x128xf32>, i32 -> vector<16x128xf32>
    %c15_221 = arith.constant 15 : index
    %773 = memref.load %arg1[%c15_221] : memref<108xf32, #tpu.memory_space<smem>>
    %774 = vector.broadcast %773 : f32 to vector<16x128xf32>
    %775 = arith.mulf %774, %772 : vector<16x128xf32>
    %776 = arith.addf %761, %775 : vector<16x128xf32>
    %c51_222 = arith.constant 51 : index
    %777 = memref.load %arg1[%c51_222] : memref<108xf32, #tpu.memory_space<smem>>
    %778 = vector.broadcast %777 : f32 to vector<16x128xf32>
    %779 = arith.mulf %778, %772 : vector<16x128xf32>
    %780 = arith.addf %765, %779 : vector<16x128xf32>
    %c87_223 = arith.constant 87 : index
    %781 = memref.load %arg1[%c87_223] : memref<108xf32, #tpu.memory_space<smem>>
    %782 = vector.broadcast %781 : f32 to vector<16x128xf32>
    %783 = arith.mulf %782, %772 : vector<16x128xf32>
    %784 = arith.addf %769, %783 : vector<16x128xf32>
    %c16_224 = arith.constant 16 : index
    %785 = memref.load %arg1[%c16_224] : memref<108xf32, #tpu.memory_space<smem>>
    %786 = vector.broadcast %785 : f32 to vector<16x128xf32>
    %787 = arith.mulf %786, %771 : vector<16x128xf32>
    %788 = arith.addf %776, %787 : vector<16x128xf32>
    %c52_225 = arith.constant 52 : index
    %789 = memref.load %arg1[%c52_225] : memref<108xf32, #tpu.memory_space<smem>>
    %790 = vector.broadcast %789 : f32 to vector<16x128xf32>
    %791 = arith.mulf %790, %771 : vector<16x128xf32>
    %792 = arith.addf %780, %791 : vector<16x128xf32>
    %c88_226 = arith.constant 88 : index
    %793 = memref.load %arg1[%c88_226] : memref<108xf32, #tpu.memory_space<smem>>
    %794 = vector.broadcast %793 : f32 to vector<16x128xf32>
    %795 = arith.mulf %794, %771 : vector<16x128xf32>
    %796 = arith.addf %784, %795 : vector<16x128xf32>
    %c127_i32_227 = arith.constant 127 : i32
    %797 = tpu.dynamic_rotate %771 by %c127_i32_227 dim 1 : vector<16x128xf32>, i32 -> vector<16x128xf32>
    %c17_228 = arith.constant 17 : index
    %798 = memref.load %arg1[%c17_228] : memref<108xf32, #tpu.memory_space<smem>>
    %799 = vector.broadcast %798 : f32 to vector<16x128xf32>
    %800 = arith.mulf %799, %797 : vector<16x128xf32>
    %801 = arith.addf %788, %800 : vector<16x128xf32>
    %c53_229 = arith.constant 53 : index
    %802 = memref.load %arg1[%c53_229] : memref<108xf32, #tpu.memory_space<smem>>
    %803 = vector.broadcast %802 : f32 to vector<16x128xf32>
    %804 = arith.mulf %803, %797 : vector<16x128xf32>
    %805 = arith.addf %792, %804 : vector<16x128xf32>
    %c89_230 = arith.constant 89 : index
    %806 = memref.load %arg1[%c89_230] : memref<108xf32, #tpu.memory_space<smem>>
    %807 = vector.broadcast %806 : f32 to vector<16x128xf32>
    %808 = arith.mulf %807, %797 : vector<16x128xf32>
    %809 = arith.addf %796, %808 : vector<16x128xf32>
    %c6_231 = arith.constant 6 : index
    %c0_232 = arith.constant 0 : index
    %c0_233 = arith.constant 0 : index
    %810 = vector.load %arg4[%c6_231, %c0_232, %c0_233] : memref<8x18x128xf32, #tpu.memory_space<vmem>>, vector<1x16x128xf32>
    %811 = vector.shape_cast %810 : vector<1x16x128xf32> to vector<16x128xf32>
    %c1_i32_234 = arith.constant 1 : i32
    %812 = tpu.dynamic_rotate %811 by %c1_i32_234 dim 1 : vector<16x128xf32>, i32 -> vector<16x128xf32>
    %c18_235 = arith.constant 18 : index
    %813 = memref.load %arg1[%c18_235] : memref<108xf32, #tpu.memory_space<smem>>
    %814 = vector.broadcast %813 : f32 to vector<16x128xf32>
    %815 = arith.mulf %814, %812 : vector<16x128xf32>
    %816 = arith.addf %801, %815 : vector<16x128xf32>
    %c54_236 = arith.constant 54 : index
    %817 = memref.load %arg1[%c54_236] : memref<108xf32, #tpu.memory_space<smem>>
    %818 = vector.broadcast %817 : f32 to vector<16x128xf32>
    %819 = arith.mulf %818, %812 : vector<16x128xf32>
    %820 = arith.addf %805, %819 : vector<16x128xf32>
    %c90_237 = arith.constant 90 : index
    %821 = memref.load %arg1[%c90_237] : memref<108xf32, #tpu.memory_space<smem>>
    %822 = vector.broadcast %821 : f32 to vector<16x128xf32>
    %823 = arith.mulf %822, %812 : vector<16x128xf32>
    %824 = arith.addf %809, %823 : vector<16x128xf32>
    %c19_238 = arith.constant 19 : index
    %825 = memref.load %arg1[%c19_238] : memref<108xf32, #tpu.memory_space<smem>>
    %826 = vector.broadcast %825 : f32 to vector<16x128xf32>
    %827 = arith.mulf %826, %811 : vector<16x128xf32>
    %828 = arith.addf %816, %827 : vector<16x128xf32>
    %c55_239 = arith.constant 55 : index
    %829 = memref.load %arg1[%c55_239] : memref<108xf32, #tpu.memory_space<smem>>
    %830 = vector.broadcast %829 : f32 to vector<16x128xf32>
    %831 = arith.mulf %830, %811 : vector<16x128xf32>
    %832 = arith.addf %820, %831 : vector<16x128xf32>
    %c91_240 = arith.constant 91 : index
    %833 = memref.load %arg1[%c91_240] : memref<108xf32, #tpu.memory_space<smem>>
    %834 = vector.broadcast %833 : f32 to vector<16x128xf32>
    %835 = arith.mulf %834, %811 : vector<16x128xf32>
    %836 = arith.addf %824, %835 : vector<16x128xf32>
    %c127_i32_241 = arith.constant 127 : i32
    %837 = tpu.dynamic_rotate %811 by %c127_i32_241 dim 1 : vector<16x128xf32>, i32 -> vector<16x128xf32>
    %c20_242 = arith.constant 20 : index
    %838 = memref.load %arg1[%c20_242] : memref<108xf32, #tpu.memory_space<smem>>
    %839 = vector.broadcast %838 : f32 to vector<16x128xf32>
    %840 = arith.mulf %839, %837 : vector<16x128xf32>
    %841 = arith.addf %828, %840 : vector<16x128xf32>
    %c56_243 = arith.constant 56 : index
    %842 = memref.load %arg1[%c56_243] : memref<108xf32, #tpu.memory_space<smem>>
    %843 = vector.broadcast %842 : f32 to vector<16x128xf32>
    %844 = arith.mulf %843, %837 : vector<16x128xf32>
    %845 = arith.addf %832, %844 : vector<16x128xf32>
    %c92_244 = arith.constant 92 : index
    %846 = memref.load %arg1[%c92_244] : memref<108xf32, #tpu.memory_space<smem>>
    %847 = vector.broadcast %846 : f32 to vector<16x128xf32>
    %848 = arith.mulf %847, %837 : vector<16x128xf32>
    %849 = arith.addf %836, %848 : vector<16x128xf32>
    %c6_245 = arith.constant 6 : index
    %c1_246 = arith.constant 1 : index
    %c0_247 = arith.constant 0 : index
    %850 = vector.load %arg4[%c6_245, %c1_246, %c0_247] : memref<8x18x128xf32, #tpu.memory_space<vmem>>, vector<1x16x128xf32>
    %851 = vector.shape_cast %850 : vector<1x16x128xf32> to vector<16x128xf32>
    %c1_i32_248 = arith.constant 1 : i32
    %852 = tpu.dynamic_rotate %851 by %c1_i32_248 dim 1 : vector<16x128xf32>, i32 -> vector<16x128xf32>
    %c21_249 = arith.constant 21 : index
    %853 = memref.load %arg1[%c21_249] : memref<108xf32, #tpu.memory_space<smem>>
    %854 = vector.broadcast %853 : f32 to vector<16x128xf32>
    %855 = arith.mulf %854, %852 : vector<16x128xf32>
    %856 = arith.addf %841, %855 : vector<16x128xf32>
    %c57_250 = arith.constant 57 : index
    %857 = memref.load %arg1[%c57_250] : memref<108xf32, #tpu.memory_space<smem>>
    %858 = vector.broadcast %857 : f32 to vector<16x128xf32>
    %859 = arith.mulf %858, %852 : vector<16x128xf32>
    %860 = arith.addf %845, %859 : vector<16x128xf32>
    %c93_251 = arith.constant 93 : index
    %861 = memref.load %arg1[%c93_251] : memref<108xf32, #tpu.memory_space<smem>>
    %862 = vector.broadcast %861 : f32 to vector<16x128xf32>
    %863 = arith.mulf %862, %852 : vector<16x128xf32>
    %864 = arith.addf %849, %863 : vector<16x128xf32>
    %c22_252 = arith.constant 22 : index
    %865 = memref.load %arg1[%c22_252] : memref<108xf32, #tpu.memory_space<smem>>
    %866 = vector.broadcast %865 : f32 to vector<16x128xf32>
    %867 = arith.mulf %866, %851 : vector<16x128xf32>
    %868 = arith.addf %856, %867 : vector<16x128xf32>
    %c58_253 = arith.constant 58 : index
    %869 = memref.load %arg1[%c58_253] : memref<108xf32, #tpu.memory_space<smem>>
    %870 = vector.broadcast %869 : f32 to vector<16x128xf32>
    %871 = arith.mulf %870, %851 : vector<16x128xf32>
    %872 = arith.addf %860, %871 : vector<16x128xf32>
    %c94_254 = arith.constant 94 : index
    %873 = memref.load %arg1[%c94_254] : memref<108xf32, #tpu.memory_space<smem>>
    %874 = vector.broadcast %873 : f32 to vector<16x128xf32>
    %875 = arith.mulf %874, %851 : vector<16x128xf32>
    %876 = arith.addf %864, %875 : vector<16x128xf32>
    %c127_i32_255 = arith.constant 127 : i32
    %877 = tpu.dynamic_rotate %851 by %c127_i32_255 dim 1 : vector<16x128xf32>, i32 -> vector<16x128xf32>
    %c23_256 = arith.constant 23 : index
    %878 = memref.load %arg1[%c23_256] : memref<108xf32, #tpu.memory_space<smem>>
    %879 = vector.broadcast %878 : f32 to vector<16x128xf32>
    %880 = arith.mulf %879, %877 : vector<16x128xf32>
    %881 = arith.addf %868, %880 : vector<16x128xf32>
    %c59_257 = arith.constant 59 : index
    %882 = memref.load %arg1[%c59_257] : memref<108xf32, #tpu.memory_space<smem>>
    %883 = vector.broadcast %882 : f32 to vector<16x128xf32>
    %884 = arith.mulf %883, %877 : vector<16x128xf32>
    %885 = arith.addf %872, %884 : vector<16x128xf32>
    %c95_258 = arith.constant 95 : index
    %886 = memref.load %arg1[%c95_258] : memref<108xf32, #tpu.memory_space<smem>>
    %887 = vector.broadcast %886 : f32 to vector<16x128xf32>
    %888 = arith.mulf %887, %877 : vector<16x128xf32>
    %889 = arith.addf %876, %888 : vector<16x128xf32>
    %c6_259 = arith.constant 6 : index
    %c2_260 = arith.constant 2 : index
    %c0_261 = arith.constant 0 : index
    %890 = vector.load %arg4[%c6_259, %c2_260, %c0_261] : memref<8x18x128xf32, #tpu.memory_space<vmem>>, vector<1x16x128xf32>
    %891 = vector.shape_cast %890 : vector<1x16x128xf32> to vector<16x128xf32>
    %c1_i32_262 = arith.constant 1 : i32
    %892 = tpu.dynamic_rotate %891 by %c1_i32_262 dim 1 : vector<16x128xf32>, i32 -> vector<16x128xf32>
    %c24_263 = arith.constant 24 : index
    %893 = memref.load %arg1[%c24_263] : memref<108xf32, #tpu.memory_space<smem>>
    %894 = vector.broadcast %893 : f32 to vector<16x128xf32>
    %895 = arith.mulf %894, %892 : vector<16x128xf32>
    %896 = arith.addf %881, %895 : vector<16x128xf32>
    %c60_264 = arith.constant 60 : index
    %897 = memref.load %arg1[%c60_264] : memref<108xf32, #tpu.memory_space<smem>>
    %898 = vector.broadcast %897 : f32 to vector<16x128xf32>
    %899 = arith.mulf %898, %892 : vector<16x128xf32>
    %900 = arith.addf %885, %899 : vector<16x128xf32>
    %c96_265 = arith.constant 96 : index
    %901 = memref.load %arg1[%c96_265] : memref<108xf32, #tpu.memory_space<smem>>
    %902 = vector.broadcast %901 : f32 to vector<16x128xf32>
    %903 = arith.mulf %902, %892 : vector<16x128xf32>
    %904 = arith.addf %889, %903 : vector<16x128xf32>
    %c25_266 = arith.constant 25 : index
    %905 = memref.load %arg1[%c25_266] : memref<108xf32, #tpu.memory_space<smem>>
    %906 = vector.broadcast %905 : f32 to vector<16x128xf32>
    %907 = arith.mulf %906, %891 : vector<16x128xf32>
    %908 = arith.addf %896, %907 : vector<16x128xf32>
    %c61_267 = arith.constant 61 : index
    %909 = memref.load %arg1[%c61_267] : memref<108xf32, #tpu.memory_space<smem>>
    %910 = vector.broadcast %909 : f32 to vector<16x128xf32>
    %911 = arith.mulf %910, %891 : vector<16x128xf32>
    %912 = arith.addf %900, %911 : vector<16x128xf32>
    %c97_268 = arith.constant 97 : index
    %913 = memref.load %arg1[%c97_268] : memref<108xf32, #tpu.memory_space<smem>>
    %914 = vector.broadcast %913 : f32 to vector<16x128xf32>
    %915 = arith.mulf %914, %891 : vector<16x128xf32>
    %916 = arith.addf %904, %915 : vector<16x128xf32>
    %c127_i32_269 = arith.constant 127 : i32
    %917 = tpu.dynamic_rotate %891 by %c127_i32_269 dim 1 : vector<16x128xf32>, i32 -> vector<16x128xf32>
    %c26_270 = arith.constant 26 : index
    %918 = memref.load %arg1[%c26_270] : memref<108xf32, #tpu.memory_space<smem>>
    %919 = vector.broadcast %918 : f32 to vector<16x128xf32>
    %920 = arith.mulf %919, %917 : vector<16x128xf32>
    %921 = arith.addf %908, %920 : vector<16x128xf32>
    %c62_271 = arith.constant 62 : index
    %922 = memref.load %arg1[%c62_271] : memref<108xf32, #tpu.memory_space<smem>>
    %923 = vector.broadcast %922 : f32 to vector<16x128xf32>
    %924 = arith.mulf %923, %917 : vector<16x128xf32>
    %925 = arith.addf %912, %924 : vector<16x128xf32>
    %c98_272 = arith.constant 98 : index
    %926 = memref.load %arg1[%c98_272] : memref<108xf32, #tpu.memory_space<smem>>
    %927 = vector.broadcast %926 : f32 to vector<16x128xf32>
    %928 = arith.mulf %927, %917 : vector<16x128xf32>
    %929 = arith.addf %916, %928 : vector<16x128xf32>
    %c7_273 = arith.constant 7 : index
    %c0_274 = arith.constant 0 : index
    %c0_275 = arith.constant 0 : index
    %930 = vector.load %arg4[%c7_273, %c0_274, %c0_275] : memref<8x18x128xf32, #tpu.memory_space<vmem>>, vector<1x16x128xf32>
    %931 = vector.shape_cast %930 : vector<1x16x128xf32> to vector<16x128xf32>
    %c1_i32_276 = arith.constant 1 : i32
    %932 = tpu.dynamic_rotate %931 by %c1_i32_276 dim 1 : vector<16x128xf32>, i32 -> vector<16x128xf32>
    %c27_277 = arith.constant 27 : index
    %933 = memref.load %arg1[%c27_277] : memref<108xf32, #tpu.memory_space<smem>>
    %934 = vector.broadcast %933 : f32 to vector<16x128xf32>
    %935 = arith.mulf %934, %932 : vector<16x128xf32>
    %936 = arith.addf %921, %935 : vector<16x128xf32>
    %c63_278 = arith.constant 63 : index
    %937 = memref.load %arg1[%c63_278] : memref<108xf32, #tpu.memory_space<smem>>
    %938 = vector.broadcast %937 : f32 to vector<16x128xf32>
    %939 = arith.mulf %938, %932 : vector<16x128xf32>
    %940 = arith.addf %925, %939 : vector<16x128xf32>
    %c99_279 = arith.constant 99 : index
    %941 = memref.load %arg1[%c99_279] : memref<108xf32, #tpu.memory_space<smem>>
    %942 = vector.broadcast %941 : f32 to vector<16x128xf32>
    %943 = arith.mulf %942, %932 : vector<16x128xf32>
    %944 = arith.addf %929, %943 : vector<16x128xf32>
    %c28_280 = arith.constant 28 : index
    %945 = memref.load %arg1[%c28_280] : memref<108xf32, #tpu.memory_space<smem>>
    %946 = vector.broadcast %945 : f32 to vector<16x128xf32>
    %947 = arith.mulf %946, %931 : vector<16x128xf32>
    %948 = arith.addf %936, %947 : vector<16x128xf32>
    %c64_281 = arith.constant 64 : index
    %949 = memref.load %arg1[%c64_281] : memref<108xf32, #tpu.memory_space<smem>>
    %950 = vector.broadcast %949 : f32 to vector<16x128xf32>
    %951 = arith.mulf %950, %931 : vector<16x128xf32>
    %952 = arith.addf %940, %951 : vector<16x128xf32>
    %c100_282 = arith.constant 100 : index
    %953 = memref.load %arg1[%c100_282] : memref<108xf32, #tpu.memory_space<smem>>
    %954 = vector.broadcast %953 : f32 to vector<16x128xf32>
    %955 = arith.mulf %954, %931 : vector<16x128xf32>
    %956 = arith.addf %944, %955 : vector<16x128xf32>
    %c127_i32_283 = arith.constant 127 : i32
    %957 = tpu.dynamic_rotate %931 by %c127_i32_283 dim 1 : vector<16x128xf32>, i32 -> vector<16x128xf32>
    %c29_284 = arith.constant 29 : index
    %958 = memref.load %arg1[%c29_284] : memref<108xf32, #tpu.memory_space<smem>>
    %959 = vector.broadcast %958 : f32 to vector<16x128xf32>
    %960 = arith.mulf %959, %957 : vector<16x128xf32>
    %961 = arith.addf %948, %960 : vector<16x128xf32>
    %c65_285 = arith.constant 65 : index
    %962 = memref.load %arg1[%c65_285] : memref<108xf32, #tpu.memory_space<smem>>
    %963 = vector.broadcast %962 : f32 to vector<16x128xf32>
    %964 = arith.mulf %963, %957 : vector<16x128xf32>
    %965 = arith.addf %952, %964 : vector<16x128xf32>
    %c101_286 = arith.constant 101 : index
    %966 = memref.load %arg1[%c101_286] : memref<108xf32, #tpu.memory_space<smem>>
    %967 = vector.broadcast %966 : f32 to vector<16x128xf32>
    %968 = arith.mulf %967, %957 : vector<16x128xf32>
    %969 = arith.addf %956, %968 : vector<16x128xf32>
    %c7_287 = arith.constant 7 : index
    %c1_288 = arith.constant 1 : index
    %c0_289 = arith.constant 0 : index
    %970 = vector.load %arg4[%c7_287, %c1_288, %c0_289] : memref<8x18x128xf32, #tpu.memory_space<vmem>>, vector<1x16x128xf32>
    %971 = vector.shape_cast %970 : vector<1x16x128xf32> to vector<16x128xf32>
    %c1_i32_290 = arith.constant 1 : i32
    %972 = tpu.dynamic_rotate %971 by %c1_i32_290 dim 1 : vector<16x128xf32>, i32 -> vector<16x128xf32>
    %c30_291 = arith.constant 30 : index
    %973 = memref.load %arg1[%c30_291] : memref<108xf32, #tpu.memory_space<smem>>
    %974 = vector.broadcast %973 : f32 to vector<16x128xf32>
    %975 = arith.mulf %974, %972 : vector<16x128xf32>
    %976 = arith.addf %961, %975 : vector<16x128xf32>
    %c66_292 = arith.constant 66 : index
    %977 = memref.load %arg1[%c66_292] : memref<108xf32, #tpu.memory_space<smem>>
    %978 = vector.broadcast %977 : f32 to vector<16x128xf32>
    %979 = arith.mulf %978, %972 : vector<16x128xf32>
    %980 = arith.addf %965, %979 : vector<16x128xf32>
    %c102_293 = arith.constant 102 : index
    %981 = memref.load %arg1[%c102_293] : memref<108xf32, #tpu.memory_space<smem>>
    %982 = vector.broadcast %981 : f32 to vector<16x128xf32>
    %983 = arith.mulf %982, %972 : vector<16x128xf32>
    %984 = arith.addf %969, %983 : vector<16x128xf32>
    %c31_294 = arith.constant 31 : index
    %985 = memref.load %arg1[%c31_294] : memref<108xf32, #tpu.memory_space<smem>>
    %986 = vector.broadcast %985 : f32 to vector<16x128xf32>
    %987 = arith.mulf %986, %971 : vector<16x128xf32>
    %988 = arith.addf %976, %987 : vector<16x128xf32>
    %c67_295 = arith.constant 67 : index
    %989 = memref.load %arg1[%c67_295] : memref<108xf32, #tpu.memory_space<smem>>
    %990 = vector.broadcast %989 : f32 to vector<16x128xf32>
    %991 = arith.mulf %990, %971 : vector<16x128xf32>
    %992 = arith.addf %980, %991 : vector<16x128xf32>
    %c103_296 = arith.constant 103 : index
    %993 = memref.load %arg1[%c103_296] : memref<108xf32, #tpu.memory_space<smem>>
    %994 = vector.broadcast %993 : f32 to vector<16x128xf32>
    %995 = arith.mulf %994, %971 : vector<16x128xf32>
    %996 = arith.addf %984, %995 : vector<16x128xf32>
    %c127_i32_297 = arith.constant 127 : i32
    %997 = tpu.dynamic_rotate %971 by %c127_i32_297 dim 1 : vector<16x128xf32>, i32 -> vector<16x128xf32>
    %c32_298 = arith.constant 32 : index
    %998 = memref.load %arg1[%c32_298] : memref<108xf32, #tpu.memory_space<smem>>
    %999 = vector.broadcast %998 : f32 to vector<16x128xf32>
    %1000 = arith.mulf %999, %997 : vector<16x128xf32>
    %1001 = arith.addf %988, %1000 : vector<16x128xf32>
    %c68_299 = arith.constant 68 : index
    %1002 = memref.load %arg1[%c68_299] : memref<108xf32, #tpu.memory_space<smem>>
    %1003 = vector.broadcast %1002 : f32 to vector<16x128xf32>
    %1004 = arith.mulf %1003, %997 : vector<16x128xf32>
    %1005 = arith.addf %992, %1004 : vector<16x128xf32>
    %c104_300 = arith.constant 104 : index
    %1006 = memref.load %arg1[%c104_300] : memref<108xf32, #tpu.memory_space<smem>>
    %1007 = vector.broadcast %1006 : f32 to vector<16x128xf32>
    %1008 = arith.mulf %1007, %997 : vector<16x128xf32>
    %1009 = arith.addf %996, %1008 : vector<16x128xf32>
    %c7_301 = arith.constant 7 : index
    %c2_302 = arith.constant 2 : index
    %c0_303 = arith.constant 0 : index
    %1010 = vector.load %arg4[%c7_301, %c2_302, %c0_303] : memref<8x18x128xf32, #tpu.memory_space<vmem>>, vector<1x16x128xf32>
    %1011 = vector.shape_cast %1010 : vector<1x16x128xf32> to vector<16x128xf32>
    %c1_i32_304 = arith.constant 1 : i32
    %1012 = tpu.dynamic_rotate %1011 by %c1_i32_304 dim 1 : vector<16x128xf32>, i32 -> vector<16x128xf32>
    %c33_305 = arith.constant 33 : index
    %1013 = memref.load %arg1[%c33_305] : memref<108xf32, #tpu.memory_space<smem>>
    %1014 = vector.broadcast %1013 : f32 to vector<16x128xf32>
    %1015 = arith.mulf %1014, %1012 : vector<16x128xf32>
    %1016 = arith.addf %1001, %1015 : vector<16x128xf32>
    %c69_306 = arith.constant 69 : index
    %1017 = memref.load %arg1[%c69_306] : memref<108xf32, #tpu.memory_space<smem>>
    %1018 = vector.broadcast %1017 : f32 to vector<16x128xf32>
    %1019 = arith.mulf %1018, %1012 : vector<16x128xf32>
    %1020 = arith.addf %1005, %1019 : vector<16x128xf32>
    %c105_307 = arith.constant 105 : index
    %1021 = memref.load %arg1[%c105_307] : memref<108xf32, #tpu.memory_space<smem>>
    %1022 = vector.broadcast %1021 : f32 to vector<16x128xf32>
    %1023 = arith.mulf %1022, %1012 : vector<16x128xf32>
    %1024 = arith.addf %1009, %1023 : vector<16x128xf32>
    %c34_308 = arith.constant 34 : index
    %1025 = memref.load %arg1[%c34_308] : memref<108xf32, #tpu.memory_space<smem>>
    %1026 = vector.broadcast %1025 : f32 to vector<16x128xf32>
    %1027 = arith.mulf %1026, %1011 : vector<16x128xf32>
    %1028 = arith.addf %1016, %1027 : vector<16x128xf32>
    %c70_309 = arith.constant 70 : index
    %1029 = memref.load %arg1[%c70_309] : memref<108xf32, #tpu.memory_space<smem>>
    %1030 = vector.broadcast %1029 : f32 to vector<16x128xf32>
    %1031 = arith.mulf %1030, %1011 : vector<16x128xf32>
    %1032 = arith.addf %1020, %1031 : vector<16x128xf32>
    %c106_310 = arith.constant 106 : index
    %1033 = memref.load %arg1[%c106_310] : memref<108xf32, #tpu.memory_space<smem>>
    %1034 = vector.broadcast %1033 : f32 to vector<16x128xf32>
    %1035 = arith.mulf %1034, %1011 : vector<16x128xf32>
    %1036 = arith.addf %1024, %1035 : vector<16x128xf32>
    %c127_i32_311 = arith.constant 127 : i32
    %1037 = tpu.dynamic_rotate %1011 by %c127_i32_311 dim 1 : vector<16x128xf32>, i32 -> vector<16x128xf32>
    %c35_312 = arith.constant 35 : index
    %1038 = memref.load %arg1[%c35_312] : memref<108xf32, #tpu.memory_space<smem>>
    %1039 = vector.broadcast %1038 : f32 to vector<16x128xf32>
    %1040 = arith.mulf %1039, %1037 : vector<16x128xf32>
    %1041 = arith.addf %1028, %1040 : vector<16x128xf32>
    %c71_313 = arith.constant 71 : index
    %1042 = memref.load %arg1[%c71_313] : memref<108xf32, #tpu.memory_space<smem>>
    %1043 = vector.broadcast %1042 : f32 to vector<16x128xf32>
    %1044 = arith.mulf %1043, %1037 : vector<16x128xf32>
    %1045 = arith.addf %1032, %1044 : vector<16x128xf32>
    %c107_314 = arith.constant 107 : index
    %1046 = memref.load %arg1[%c107_314] : memref<108xf32, #tpu.memory_space<smem>>
    %1047 = vector.broadcast %1046 : f32 to vector<16x128xf32>
    %1048 = arith.mulf %1047, %1037 : vector<16x128xf32>
    %1049 = arith.addf %1036, %1048 : vector<16x128xf32>
    %c0_315 = arith.constant 0 : index
    %1050 = memref.load %arg2[%c0_315] : memref<3xf32, #tpu.memory_space<smem>>
    %1051 = vector.broadcast %1050 : f32 to vector<16x128xf32>
    %1052 = arith.addf %1041, %1051 : vector<16x128xf32>
    %cst_316 = arith.constant 0.000000e+00 : f32
    %1053 = vector.broadcast %cst_316 : f32 to vector<16x128xf32>
    %1054 = arith.subf %1053, %1052 : vector<16x128xf32>
    %1055 = math.exp %1054 : vector<16x128xf32>
    %cst_317 = arith.constant 1.000000e+00 : f32
    %1056 = vector.broadcast %cst_317 : f32 to vector<16x128xf32>
    %1057 = arith.addf %1056, %1055 : vector<16x128xf32>
    %cst_318 = arith.constant 1.000000e+00 : f32
    %1058 = vector.broadcast %cst_318 : f32 to vector<16x128xf32>
    %1059 = arith.divf %1058, %1057 : vector<16x128xf32>
    %1060 = vector.extract_strided_slice %1059 {offsets = [0, 0], sizes = [16, 16], strides = [1, 1]} : vector<16x128xf32> to vector<16x16xf32>
    %c1_319 = arith.constant 1 : index
    %c0_320 = arith.constant 0 : index
    %c0_321 = arith.constant 0 : index
    %c0_322 = arith.constant 0 : index
    %1061 = vector.load %arg3[%c1_319, %c0_320, %c0_321, %c0_322] : memref<2x3x16x16xf32, #tpu.memory_space<vmem>>, vector<1x1x16x16xf32>
    %1062 = vector.shape_cast %1061 : vector<1x1x16x16xf32> to vector<16x16xf32>
    %1063 = vector.shape_cast %1060 : vector<16x16xf32> to vector<1x1x16x16xf32>
    tpu.vector_store %arg3[%c1_319, %c0_320, %c0_321, %c0_322], %1063 {strides = array<i32>} : memref<2x3x16x16xf32, #tpu.memory_space<vmem>>, vector<1x1x16x16xf32>,
    %c1_323 = arith.constant 1 : index
    %1064 = memref.load %arg2[%c1_323] : memref<3xf32, #tpu.memory_space<smem>>
    %1065 = vector.broadcast %1064 : f32 to vector<16x128xf32>
    %1066 = arith.addf %1045, %1065 : vector<16x128xf32>
    %cst_324 = arith.constant 0.000000e+00 : f32
    %1067 = vector.broadcast %cst_324 : f32 to vector<16x128xf32>
    %1068 = arith.subf %1067, %1066 : vector<16x128xf32>
    %1069 = math.exp %1068 : vector<16x128xf32>
    %cst_325 = arith.constant 1.000000e+00 : f32
    %1070 = vector.broadcast %cst_325 : f32 to vector<16x128xf32>
    %1071 = arith.addf %1070, %1069 : vector<16x128xf32>
    %cst_326 = arith.constant 1.000000e+00 : f32
    %1072 = vector.broadcast %cst_326 : f32 to vector<16x128xf32>
    %1073 = arith.divf %1072, %1071 : vector<16x128xf32>
    %1074 = vector.extract_strided_slice %1073 {offsets = [0, 0], sizes = [16, 16], strides = [1, 1]} : vector<16x128xf32> to vector<16x16xf32>
    %c1_327 = arith.constant 1 : index
    %c1_328 = arith.constant 1 : index
    %c0_329 = arith.constant 0 : index
    %c0_330 = arith.constant 0 : index
    %1075 = vector.load %arg3[%c1_327, %c1_328, %c0_329, %c0_330] : memref<2x3x16x16xf32, #tpu.memory_space<vmem>>, vector<1x1x16x16xf32>
    %1076 = vector.shape_cast %1075 : vector<1x1x16x16xf32> to vector<16x16xf32>
    %1077 = vector.shape_cast %1074 : vector<16x16xf32> to vector<1x1x16x16xf32>
    tpu.vector_store %arg3[%c1_327, %c1_328, %c0_329, %c0_330], %1077 {strides = array<i32>} : memref<2x3x16x16xf32, #tpu.memory_space<vmem>>, vector<1x1x16x16xf32>,
    %c2_331 = arith.constant 2 : index
    %1078 = memref.load %arg2[%c2_331] : memref<3xf32, #tpu.memory_space<smem>>
    %1079 = vector.broadcast %1078 : f32 to vector<16x128xf32>
    %1080 = arith.addf %1049, %1079 : vector<16x128xf32>
    %cst_332 = arith.constant 0.000000e+00 : f32
    %1081 = vector.broadcast %cst_332 : f32 to vector<16x128xf32>
    %1082 = arith.subf %1081, %1080 : vector<16x128xf32>
    %1083 = math.exp %1082 : vector<16x128xf32>
    %cst_333 = arith.constant 1.000000e+00 : f32
    %1084 = vector.broadcast %cst_333 : f32 to vector<16x128xf32>
    %1085 = arith.addf %1084, %1083 : vector<16x128xf32>
    %cst_334 = arith.constant 1.000000e+00 : f32
    %1086 = vector.broadcast %cst_334 : f32 to vector<16x128xf32>
    %1087 = arith.divf %1086, %1085 : vector<16x128xf32>
    %1088 = vector.extract_strided_slice %1087 {offsets = [0, 0], sizes = [16, 16], strides = [1, 1]} : vector<16x128xf32> to vector<16x16xf32>
    %c1_335 = arith.constant 1 : index
    %c2_336 = arith.constant 2 : index
    %c0_337 = arith.constant 0 : index
    %c0_338 = arith.constant 0 : index
    %1089 = vector.load %arg3[%c1_335, %c2_336, %c0_337, %c0_338] : memref<2x3x16x16xf32, #tpu.memory_space<vmem>>, vector<1x1x16x16xf32>
    %1090 = vector.shape_cast %1089 : vector<1x1x16x16xf32> to vector<16x16xf32>
    %1091 = vector.shape_cast %1088 : vector<16x16xf32> to vector<1x1x16x16xf32>
    tpu.vector_store %arg3[%c1_335, %c2_336, %c0_337, %c0_338], %1091 {strides = array<i32>} : memref<2x3x16x16xf32, #tpu.memory_space<vmem>>, vector<1x1x16x16xf32>,
    return
  }
}

</mosaic_0001>

<llo_original>
// kernel: tpu_custom_call.1
$region0: #{tpu_custom_call.1}
  #allocation0 [shape = 'u32[]', space=smem, size = 0x4, offset = 0x4, fixed_abs, tag = 'smem constant byte address 0x4 - core index']
  #allocation1 [shape = 'u32[72,128]{1,0:T(1,128)}', space=vmem, size = 0x9000, scoped, tag = 'internal scratch']
  #allocation2 [shape = 'f32[8,18,128]{2,1,0:T(8,128)}', space=vmem, size = 0x18000, scoped, tag = 'scratch operand']
  %s0 = inlined_call_operand.hbm [shape: f32[2,4,16,16], index: 0, kind: input, shape index: {}]
  %s1 = inlined_call_operand.hbm [shape: f32[108], index: 1, kind: input, shape index: {}]
  %s2 = inlined_call_operand.vmem [shape: f32[3], index: 2, kind: input, shape index: {}]
  %s3 = inlined_call_operand.hbm [shape: f32[2,3,16,16], index: 3, kind: output, shape index: {}]
  %s4 = sld [smem:[#allocation0]]
  $region34: #{tpu_custom_call.1} parent=0
    _
  %s6 = ssub.s32 1, %s4
  %s7 = scalar_select 0, %s6, %s4
  $region1: #{tpu_custom_call.1} parent=0
    #allocation3 [shape = 'u8[65536]{0}', space=vmem, size = 0x10000, scoped, tag = 'input window, operand 0, single buffered']
    #allocation4 [shape = 's32[1]{0}', space=sflag, size = 0x4, scoped, tag = 'scoped memory for tpu_custom_call.1']
    #allocation5 [shape = 's32[1]{0}', space=sflag, size = 0x4, scoped, tag = 'scoped memory for tpu_custom_call.1']
    #allocation6 [shape = 's32[1]{0}', space=sflag, size = 0x4, scoped, tag = 'scoped memory for tpu_custom_call.1']
    #allocation7 [shape = 's32[1]{0}', space=sflag, size = 0x4, scoped, tag = 'scoped memory for tpu_custom_call.1']
    #allocation8 [shape = 'u8[512]{0}', space=smem, size = 0x200, scoped, tag = 'input window, operand 1, single buffered']
    #allocation9 [shape = 'u8[512]{0}', space=smem, size = 0x200, scoped, tag = 'input window, operand 2, single buffered']
    #allocation10 [shape = 'u8[49152]{0}', space=vmem, size = 0xc000, scoped, tag = 'output window, operand 0, single buffered']
    %8 = vsyncpa [#allocation4], 0
    %9 = vsyncpa [#allocation6], 0
    %10 = vsyncpa [#allocation7], 0
    %11 = vsyncpa [#allocation5], 0
    // Predicated region
    $region2: #{tpu_custom_call.1} parent=1 // pred_check
      _
    $region3: #{tpu_custom_call.1} parent=1 // pred_check_branch
      %13 = sbr.rel (0) target = $region5
    $region4: #{tpu_custom_call.1} parent=1 // pred_region
      %15 = vsyncadd [#allocation4], 0
      %s16 = sshll.u32 %s0, 4
      %s17 = int_to_ptr.hbm [resolvable:$true] %s16
      %s18 = sshll.u32 [#allocation3], 4
      %s19 = int_to_ptr.vmem [resolvable:$true] %s18
      %24 = dma.hbm_to_vmem [thread:$0]  %s17, 2048, %s19, [#allocation4], 128, 128, 8
    $region5: #{tpu_custom_call.1} parent=1 // pred_fallthru
      _
    // Predicated region
    $region6: #{tpu_custom_call.1} parent=1 // pred_check
      _
    $region7: #{tpu_custom_call.1} parent=1 // pred_check_branch
      %26 = sbr.rel (0) target = $region9
    $region8: #{tpu_custom_call.1} parent=1 // pred_region
      %28 = vsyncadd [#allocation6], 0
      %s30 = sshll.u32 %s1, 4
      %s31 = int_to_ptr.hbm [resolvable:$true] %s30
      %33 = dma.hbm_to_smem %s31, 16, [#allocation8], [#allocation6]
    $region9: #{tpu_custom_call.1} parent=1 // pred_fallthru
      _
    // Predicated region
    $region10: #{tpu_custom_call.1} parent=1 // pred_check
      _
    $region11: #{tpu_custom_call.1} parent=1 // pred_check_branch
      %35 = sbr.rel (0) target = $region13
    $region12: #{tpu_custom_call.1} parent=1 // pred_region
      %37 = vsyncadd [#allocation7], 0
      %s39 = sshll.u32 %s2, 4
      %s40 = int_to_ptr.vmem [resolvable:$true] %s39
      %42 = dma.vmem_to_smem %s40, 16, [#allocation9], [#allocation7]
    $region13: #{tpu_custom_call.1} parent=1 // pred_fallthru
      _
    // Predicated region
    $region14: #{tpu_custom_call.1} parent=1 // pred_check
      _
    $region15: #{tpu_custom_call.1} parent=1 // pred_check_branch
      %44 = sbr.rel (0) target = $region17
    $region16: #{tpu_custom_call.1} parent=1 // pred_region
      %46 = dma.done [#allocation4], 2048
    $region17: #{tpu_custom_call.1} parent=1 // pred_fallthru
      _
    // Predicated region
    $region18: #{tpu_custom_call.1} parent=1 // pred_check
      _
    $region19: #{tpu_custom_call.1} parent=1 // pred_check_branch
      %48 = sbr.rel (0) target = $region21
    $region20: #{tpu_custom_call.1} parent=1 // pred_region
      %50 = dma.done [#allocation6], 16
    $region21: #{tpu_custom_call.1} parent=1 // pred_fallthru
      _
    // Predicated region
    $region22: #{tpu_custom_call.1} parent=1 // pred_check
      _
    $region23: #{tpu_custom_call.1} parent=1 // pred_check_branch
      %52 = sbr.rel (0) target = $region25
    $region24: #{tpu_custom_call.1} parent=1 // pred_region
      %54 = dma.done [#allocation7], 16
    $region25: #{tpu_custom_call.1} parent=1 // pred_fallthru
      _
    %55 = sfence
    %56 = vst [vmem:[#allocation2] sm:$0xff] 0.0
    %57 = vst [vmem:[#allocation2 + $0x8] sm:$0xff] 0.0
    %58 = vst [vmem:[#allocation2 + $0x10] sm:$0x3] 0.0
    %59 = vst [vmem:[#allocation2 + $0x18] sm:$0xff] 0.0
    %60 = vst [vmem:[#allocation2 + $0x20] sm:$0xff] 0.0
    %61 = vst [vmem:[#allocation2 + $0x28] sm:$0x3] 0.0
    %62 = vst [vmem:[#allocation2 + $0x30] sm:$0xff] 0.0
    %63 = vst [vmem:[#allocation2 + $0x38] sm:$0xff] 0.0
    %64 = vst [vmem:[#allocation2 + $0x40] sm:$0x3] 0.0
    %65 = vst [vmem:[#allocation2 + $0x48] sm:$0xff] 0.0
    %66 = vst [vmem:[#allocation2 + $0x50] sm:$0xff] 0.0
    %67 = vst [vmem:[#allocation2 + $0x58] sm:$0x3] 0.0
    %68 = vst [vmem:[#allocation2 + $0x60] sm:$0xff] 0.0
    %69 = vst [vmem:[#allocation2 + $0x68] sm:$0xff] 0.0
    %70 = vst [vmem:[#allocation2 + $0x70] sm:$0x3] 0.0
    %71 = vst [vmem:[#allocation2 + $0x78] sm:$0xff] 0.0
    %72 = vst [vmem:[#allocation2 + $0x80] sm:$0xff] 0.0
    %73 = vst [vmem:[#allocation2 + $0x88] sm:$0x3] 0.0
    %74 = vst [vmem:[#allocation2 + $0x90] sm:$0xff] 0.0
    %75 = vst [vmem:[#allocation2 + $0x98] sm:$0xff] 0.0
    %76 = vst [vmem:[#allocation2 + $0xa0] sm:$0x3] 0.0
    %77 = vst [vmem:[#allocation2 + $0xa8] sm:$0xff] 0.0
    %78 = vst [vmem:[#allocation2 + $0xb0] sm:$0xff] 0.0
    %79 = vst [vmem:[#allocation2 + $0xb8] sm:$0x3] 0.0
    %v80 = vld [vmem:[#allocation3] sm:$0xff]
    %v81 = vld [vmem:[#allocation3 + $0x8] sm:$0xff]
    %vm82 = vcmask 130048
    %83 = vst.msk [vmem:[#allocation2 + $0x1] sm:$0xff] %vm82, %v80
    %84 = vst.msk [vmem:[#allocation2 + $0x9] sm:$0xff] %vm82, %v81
    %s85 = scalar_lea.vmem [#allocation3], 16
    %v86 = vld [vmem:[%s85] sm:$0xff]
    %v87 = vld [vmem:[%s85 + $0x8] sm:$0xff]
    %s88 = scalar_lea.vmem [#allocation2], 24
    %89 = vst.msk [vmem:[%s88 + $0x1] sm:$0xff] %vm82, %v86
    %90 = vst.msk [vmem:[%s88 + $0x9] sm:$0xff] %vm82, %v87
    %s91 = scalar_lea.vmem [#allocation3], 32
    %v92 = vld [vmem:[%s91] sm:$0xff]
    %v93 = vld [vmem:[%s91 + $0x8] sm:$0xff]
    %s94 = scalar_lea.vmem [#allocation2], 48
    %95 = vst.msk [vmem:[%s94 + $0x1] sm:$0xff] %vm82, %v92
    %96 = vst.msk [vmem:[%s94 + $0x9] sm:$0xff] %vm82, %v93
    %s97 = scalar_lea.vmem [#allocation3], 48
    %v98 = vld [vmem:[%s97] sm:$0xff]
    %v99 = vld [vmem:[%s97 + $0x8] sm:$0xff]
    %s100 = scalar_lea.vmem [#allocation2], 72
    %101 = vst.msk [vmem:[%s100 + $0x1] sm:$0xff] %vm82, %v98
    %102 = vst.msk [vmem:[%s100 + $0x9] sm:$0xff] %vm82, %v99
    %s103 = scalar_lea.vmem [#allocation3], 64
    %v104 = vld [vmem:[%s103] sm:$0xff]
    %v105 = vld [vmem:[%s103 + $0x8] sm:$0xff]
    %s106 = scalar_lea.vmem [#allocation2], 96
    %107 = vst.msk [vmem:[%s106 + $0x1] sm:$0xff] %vm82, %v104
    %108 = vst.msk [vmem:[%s106 + $0x9] sm:$0xff] %vm82, %v105
    %s109 = scalar_lea.vmem [#allocation3], 80
    %v110 = vld [vmem:[%s109] sm:$0xff]
    %v111 = vld [vmem:[%s109 + $0x8] sm:$0xff]
    %s112 = scalar_lea.vmem [#allocation2], 120
    %113 = vst.msk [vmem:[%s112 + $0x1] sm:$0xff] %vm82, %v110
    %114 = vst.msk [vmem:[%s112 + $0x9] sm:$0xff] %vm82, %v111
    %s115 = scalar_lea.vmem [#allocation3], 96
    %v116 = vld [vmem:[%s115] sm:$0xff]
    %v117 = vld [vmem:[%s115 + $0x8] sm:$0xff]
    %s118 = scalar_lea.vmem [#allocation2], 144
    %119 = vst.msk [vmem:[%s118 + $0x1] sm:$0xff] %vm82, %v116
    %120 = vst.msk [vmem:[%s118 + $0x9] sm:$0xff] %vm82, %v117
    %s121 = scalar_lea.vmem [#allocation3], 112
    %v122 = vld [vmem:[%s121] sm:$0xff]
    %v123 = vld [vmem:[%s121 + $0x8] sm:$0xff]
    %s124 = scalar_lea.vmem [#allocation2], 168
    %125 = vst.msk [vmem:[%s124 + $0x1] sm:$0xff] %vm82, %v122
    %126 = vst.msk [vmem:[%s124 + $0x9] sm:$0xff] %vm82, %v123
    %v127 = vld [vmem:[#allocation2] sm:$0xff]
    %v128 = vld [vmem:[#allocation2 + $0x8] sm:$0xff]
    %129 = vrot.lane.b32.xlu0 %v127, 1
    %v130 = vpop.permute.xlu0 %129
    %131 = vrot.lane.b32.xlu0 %v128, 1
    %v132 = vpop.permute.xlu0 %131
    %s133 = sld [smem:[#allocation8]]
    %v134 = vstv %s133
    %v135 = vmul.f32 %v134, %v130
    %v136 = vmul.f32 %v134, %v132
    %v137 = vadd.f32 %v135, 0.0
    %v138 = vadd.f32 %v136, 0.0
    %s139 = sld [smem:[#allocation8 + $0x24]]
    %v140 = vstv %s139
    %v141 = vmul.f32 %v140, %v130
    %v142 = vmul.f32 %v140, %v132
    %v143 = vadd.f32 %v141, 0.0
    %v144 = vadd.f32 %v142, 0.0
    %s145 = sld [smem:[#allocation8 + $0x48]]
    %v146 = vstv %s145
    %v147 = vmul.f32 %v146, %v130
    %v148 = vmul.f32 %v146, %v132
    %v149 = vadd.f32 %v147, 0.0
    %v150 = vadd.f32 %v148, 0.0
    %s151 = sld [smem:[#allocation8 + $0x1]]
    %v152 = vstv %s151
    %v153 = vmul.f32 %v152, %v127
    %v154 = vmul.f32 %v152, %v128
    %v155 = vadd.f32 %v137, %v153
    %v156 = vadd.f32 %v138, %v154
    %s157 = sld [smem:[#allocation8 + $0x25]]
    %v158 = vstv %s157
    %v159 = vmul.f32 %v158, %v127
    %v160 = vmul.f32 %v158, %v128
    %v161 = vadd.f32 %v143, %v159
    %v162 = vadd.f32 %v144, %v160
    %s163 = sld [smem:[#allocation8 + $0x49]]
    %v164 = vstv %s163
    %v165 = vmul.f32 %v164, %v127
    %v166 = vmul.f32 %v164, %v128
    %v167 = vadd.f32 %v149, %v165
    %v168 = vadd.f32 %v150, %v166
    %169 = vrot.lane.b32.xlu0 %v127, 127
    %v170 = vpop.permute.xlu0 %169
    %171 = vrot.lane.b32.xlu0 %v128, 127
    %v172 = vpop.permute.xlu0 %171
    %s173 = sld [smem:[#allocation8 + $0x2]]
    %v174 = vstv %s173
    %v175 = vmul.f32 %v174, %v170
    %v176 = vmul.f32 %v174, %v172
    %v177 = vadd.f32 %v155, %v175
    %v178 = vadd.f32 %v156, %v176
    %s179 = sld [smem:[#allocation8 + $0x26]]
    %v180 = vstv %s179
    %v181 = vmul.f32 %v180, %v170
    %v182 = vmul.f32 %v180, %v172
    %v183 = vadd.f32 %v161, %v181
    %v184 = vadd.f32 %v162, %v182
    %s185 = sld [smem:[#allocation8 + $0x4a]]
    %v186 = vstv %s185
    %v187 = vmul.f32 %v186, %v170
    %v188 = vmul.f32 %v186, %v172
    %v189 = vadd.f32 %v167, %v187
    %v190 = vadd.f32 %v168, %v188
    %v191 = vld [vmem:[#allocation2 + $0x1] sm:$0xff]
    %v192 = vld [vmem:[#allocation2 + $0x9] sm:$0xff]
    %193 = vrot.lane.b32.xlu0 %v191, 1
    %v194 = vpop.permute.xlu0 %193
    %195 = vrot.lane.b32.xlu0 %v192, 1
    %v196 = vpop.permute.xlu0 %195
    %s197 = sld [smem:[#allocation8 + $0x3]]
    %v198 = vstv %s197
    %v199 = vmul.f32 %v198, %v194
    %v200 = vmul.f32 %v198, %v196
    %v201 = vadd.f32 %v177, %v199
    %v202 = vadd.f32 %v178, %v200
    %s203 = sld [smem:[#allocation8 + $0x27]]
    %v204 = vstv %s203
    %v205 = vmul.f32 %v204, %v194
    %v206 = vmul.f32 %v204, %v196
    %v207 = vadd.f32 %v183, %v205
    %v208 = vadd.f32 %v184, %v206
    %s209 = sld [smem:[#allocation8 + $0x4b]]
    %v210 = vstv %s209
    %v211 = vmul.f32 %v210, %v194
    %v212 = vmul.f32 %v210, %v196
    %v213 = vadd.f32 %v189, %v211
    %v214 = vadd.f32 %v190, %v212
    %s215 = sld [smem:[#allocation8 + $0x4]]
    %v216 = vstv %s215
    %v217 = vmul.f32 %v216, %v191
    %v218 = vmul.f32 %v216, %v192
    %v219 = vadd.f32 %v201, %v217
    %v220 = vadd.f32 %v202, %v218
    %s221 = sld [smem:[#allocation8 + $0x28]]
    %v222 = vstv %s221
    %v223 = vmul.f32 %v222, %v191
    %v224 = vmul.f32 %v222, %v192
    %v225 = vadd.f32 %v207, %v223
    %v226 = vadd.f32 %v208, %v224
    %s227 = sld [smem:[#allocation8 + $0x4c]]
    %v228 = vstv %s227
    %v229 = vmul.f32 %v228, %v191
    %v230 = vmul.f32 %v228, %v192
    %v231 = vadd.f32 %v213, %v229
    %v232 = vadd.f32 %v214, %v230
    %233 = vrot.lane.b32.xlu0 %v191, 127
    %v234 = vpop.permute.xlu0 %233
    %235 = vrot.lane.b32.xlu0 %v192, 127
    %v236 = vpop.permute.xlu0 %235
    %s237 = sld [smem:[#allocation8 + $0x5]]
    %v238 = vstv %s237
    %v239 = vmul.f32 %v238, %v234
    %v240 = vmul.f32 %v238, %v236
    %v241 = vadd.f32 %v219, %v239
    %v242 = vadd.f32 %v220, %v240
    %s243 = sld [smem:[#allocation8 + $0x29]]
    %v244 = vstv %s243
    %v245 = vmul.f32 %v244, %v234
    %v246 = vmul.f32 %v244, %v236
    %v247 = vadd.f32 %v225, %v245
    %v248 = vadd.f32 %v226, %v246
    %s249 = sld [smem:[#allocation8 + $0x4d]]
    %v250 = vstv %s249
    %v251 = vmul.f32 %v250, %v234
    %v252 = vmul.f32 %v250, %v236
    %v253 = vadd.f32 %v231, %v251
    %v254 = vadd.f32 %v232, %v252
    %v255 = vld [vmem:[#allocation2 + $0x2] sm:$0xff]
    %v256 = vld [vmem:[#allocation2 + $0xa] sm:$0xff]
    %257 = vrot.lane.b32.xlu0 %v255, 1
    %v258 = vpop.permute.xlu0 %257
    %259 = vrot.lane.b32.xlu0 %v256, 1
    %v260 = vpop.permute.xlu0 %259
    %s261 = sld [smem:[#allocation8 + $0x6]]
    %v262 = vstv %s261
    %v263 = vmul.f32 %v262, %v258
    %v264 = vmul.f32 %v262, %v260
    %v265 = vadd.f32 %v241, %v263
    %v266 = vadd.f32 %v242, %v264
    %s267 = sld [smem:[#allocation8 + $0x2a]]
    %v268 = vstv %s267
    %v269 = vmul.f32 %v268, %v258
    %v270 = vmul.f32 %v268, %v260
    %v271 = vadd.f32 %v247, %v269
    %v272 = vadd.f32 %v248, %v270
    %s273 = sld [smem:[#allocation8 + $0x4e]]
    %v274 = vstv %s273
    %v275 = vmul.f32 %v274, %v258
    %v276 = vmul.f32 %v274, %v260
    %v277 = vadd.f32 %v253, %v275
    %v278 = vadd.f32 %v254, %v276
    %s279 = sld [smem:[#allocation8 + $0x7]]
    %v280 = vstv %s279
    %v281 = vmul.f32 %v280, %v255
    %v282 = vmul.f32 %v280, %v256
    %v283 = vadd.f32 %v265, %v281
    %v284 = vadd.f32 %v266, %v282
    %s285 = sld [smem:[#allocation8 + $0x2b]]
    %v286 = vstv %s285
    %v287 = vmul.f32 %v286, %v255
    %v288 = vmul.f32 %v286, %v256
    %v289 = vadd.f32 %v271, %v287
    %v290 = vadd.f32 %v272, %v288
    %s291 = sld [smem:[#allocation8 + $0x4f]]
    %v292 = vstv %s291
    %v293 = vmul.f32 %v292, %v255
    %v294 = vmul.f32 %v292, %v256
    %v295 = vadd.f32 %v277, %v293
    %v296 = vadd.f32 %v278, %v294
    %297 = vrot.lane.b32.xlu0 %v255, 127
    %v298 = vpop.permute.xlu0 %297
    %299 = vrot.lane.b32.xlu0 %v256, 127
    %v300 = vpop.permute.xlu0 %299
    %s301 = sld [smem:[#allocation8 + $0x8]]
    %v302 = vstv %s301
    %v303 = vmul.f32 %v302, %v298
    %v304 = vmul.f32 %v302, %v300
    %v305 = vadd.f32 %v283, %v303
    %v306 = vadd.f32 %v284, %v304
    %s307 = sld [smem:[#allocation8 + $0x2c]]
    %v308 = vstv %s307
    %v309 = vmul.f32 %v308, %v298
    %v310 = vmul.f32 %v308, %v300
    %v311 = vadd.f32 %v289, %v309
    %v312 = vadd.f32 %v290, %v310
    %s313 = sld [smem:[#allocation8 + $0x50]]
    %v314 = vstv %s313
    %v315 = vmul.f32 %v314, %v298
    %v316 = vmul.f32 %v314, %v300
    %v317 = vadd.f32 %v295, %v315
    %v318 = vadd.f32 %v296, %v316
    %v319 = vld [vmem:[%s88] sm:$0xff]
    %v320 = vld [vmem:[%s88 + $0x8] sm:$0xff]
    %321 = vrot.lane.b32.xlu0 %v319, 1
    %v322 = vpop.permute.xlu0 %321
    %323 = vrot.lane.b32.xlu0 %v320, 1
    %v324 = vpop.permute.xlu0 %323
    %s325 = sld [smem:[#allocation8 + $0x9]]
    %v326 = vstv %s325
    %v327 = vmul.f32 %v326, %v322
    %v328 = vmul.f32 %v326, %v324
    %v329 = vadd.f32 %v305, %v327
    %v330 = vadd.f32 %v306, %v328
    %s331 = sld [smem:[#allocation8 + $0x2d]]
    %v332 = vstv %s331
    %v333 = vmul.f32 %v332, %v322
    %v334 = vmul.f32 %v332, %v324
    %v335 = vadd.f32 %v311, %v333
    %v336 = vadd.f32 %v312, %v334
    %s337 = sld [smem:[#allocation8 + $0x51]]
    %v338 = vstv %s337
    %v339 = vmul.f32 %v338, %v322
    %v340 = vmul.f32 %v338, %v324
    %v341 = vadd.f32 %v317, %v339
    %v342 = vadd.f32 %v318, %v340
    %s343 = sld [smem:[#allocation8 + $0xa]]
    %v344 = vstv %s343
    %v345 = vmul.f32 %v344, %v319
    %v346 = vmul.f32 %v344, %v320
    %v347 = vadd.f32 %v329, %v345
    %v348 = vadd.f32 %v330, %v346
    %s349 = sld [smem:[#allocation8 + $0x2e]]
    %v350 = vstv %s349
    %v351 = vmul.f32 %v350, %v319
    %v352 = vmul.f32 %v350, %v320
    %v353 = vadd.f32 %v335, %v351
    %v354 = vadd.f32 %v336, %v352
    %s355 = sld [smem:[#allocation8 + $0x52]]
    %v356 = vstv %s355
    %v357 = vmul.f32 %v356, %v319
    %v358 = vmul.f32 %v356, %v320
    %v359 = vadd.f32 %v341, %v357
    %v360 = vadd.f32 %v342, %v358
    %361 = vrot.lane.b32.xlu0 %v319, 127
    %v362 = vpop.permute.xlu0 %361
    %363 = vrot.lane.b32.xlu0 %v320, 127
    %v364 = vpop.permute.xlu0 %363
    %s365 = sld [smem:[#allocation8 + $0xb]]
    %v366 = vstv %s365
    %v367 = vmul.f32 %v366, %v362
    %v368 = vmul.f32 %v366, %v364
    %v369 = vadd.f32 %v347, %v367
    %v370 = vadd.f32 %v348, %v368
    %s371 = sld [smem:[#allocation8 + $0x2f]]
    %v372 = vstv %s371
    %v373 = vmul.f32 %v372, %v362
    %v374 = vmul.f32 %v372, %v364
    %v375 = vadd.f32 %v353, %v373
    %v376 = vadd.f32 %v354, %v374
    %s377 = sld [smem:[#allocation8 + $0x53]]
    %v378 = vstv %s377
    %v379 = vmul.f32 %v378, %v362
    %v380 = vmul.f32 %v378, %v364
    %v381 = vadd.f32 %v359, %v379
    %v382 = vadd.f32 %v360, %v380
    %v383 = vld [vmem:[%s88 + $0x1] sm:$0xff]
    %v384 = vld [vmem:[%s88 + $0x9] sm:$0xff]
    %385 = vrot.lane.b32.xlu0 %v383, 1
    %v386 = vpop.permute.xlu0 %385
    %387 = vrot.lane.b32.xlu0 %v384, 1
    %v388 = vpop.permute.xlu0 %387
    %s389 = sld [smem:[#allocation8 + $0xc]]
    %v390 = vstv %s389
    %v391 = vmul.f32 %v390, %v386
    %v392 = vmul.f32 %v390, %v388
    %v393 = vadd.f32 %v369, %v391
    %v394 = vadd.f32 %v370, %v392
    %s395 = sld [smem:[#allocation8 + $0x30]]
    %v396 = vstv %s395
    %v397 = vmul.f32 %v396, %v386
    %v398 = vmul.f32 %v396, %v388
    %v399 = vadd.f32 %v375, %v397
    %v400 = vadd.f32 %v376, %v398
    %s401 = sld [smem:[#allocation8 + $0x54]]
    %v402 = vstv %s401
    %v403 = vmul.f32 %v402, %v386
    %v404 = vmul.f32 %v402, %v388
    %v405 = vadd.f32 %v381, %v403
    %v406 = vadd.f32 %v382, %v404
    %s407 = sld [smem:[#allocation8 + $0xd]]
    %v408 = vstv %s407
    %v409 = vmul.f32 %v408, %v383
    %v410 = vmul.f32 %v408, %v384
    %v411 = vadd.f32 %v393, %v409
    %v412 = vadd.f32 %v394, %v410
    %s413 = sld [smem:[#allocation8 + $0x31]]
    %v414 = vstv %s413
    %v415 = vmul.f32 %v414, %v383
    %v416 = vmul.f32 %v414, %v384
    %v417 = vadd.f32 %v399, %v415
    %v418 = vadd.f32 %v400, %v416
    %s419 = sld [smem:[#allocation8 + $0x55]]
    %v420 = vstv %s419
    %v421 = vmul.f32 %v420, %v383
    %v422 = vmul.f32 %v420, %v384
    %v423 = vadd.f32 %v405, %v421
    %v424 = vadd.f32 %v406, %v422
    %425 = vrot.lane.b32.xlu0 %v383, 127
    %v426 = vpop.permute.xlu0 %425
    %427 = vrot.lane.b32.xlu0 %v384, 127
    %v428 = vpop.permute.xlu0 %427
    %s429 = sld [smem:[#allocation8 + $0xe]]
    %v430 = vstv %s429
    %v431 = vmul.f32 %v430, %v426
    %v432 = vmul.f32 %v430, %v428
    %v433 = vadd.f32 %v411, %v431
    %v434 = vadd.f32 %v412, %v432
    %s435 = sld [smem:[#allocation8 + $0x32]]
    %v436 = vstv %s435
    %v437 = vmul.f32 %v436, %v426
    %v438 = vmul.f32 %v436, %v428
    %v439 = vadd.f32 %v417, %v437
    %v440 = vadd.f32 %v418, %v438
    %s441 = sld [smem:[#allocation8 + $0x56]]
    %v442 = vstv %s441
    %v443 = vmul.f32 %v442, %v426
    %v444 = vmul.f32 %v442, %v428
    %v445 = vadd.f32 %v423, %v443
    %v446 = vadd.f32 %v424, %v444
    %v447 = vld [vmem:[%s88 + $0x2] sm:$0xff]
    %v448 = vld [vmem:[%s88 + $0xa] sm:$0xff]
    %449 = vrot.lane.b32.xlu0 %v447, 1
    %v450 = vpop.permute.xlu0 %449
    %451 = vrot.lane.b32.xlu0 %v448, 1
    %v452 = vpop.permute.xlu0 %451
    %s453 = sld [smem:[#allocation8 + $0xf]]
    %v454 = vstv %s453
    %v455 = vmul.f32 %v454, %v450
    %v456 = vmul.f32 %v454, %v452
    %v457 = vadd.f32 %v433, %v455
    %v458 = vadd.f32 %v434, %v456
    %s459 = sld [smem:[#allocation8 + $0x33]]
    %v460 = vstv %s459
    %v461 = vmul.f32 %v460, %v450
    %v462 = vmul.f32 %v460, %v452
    %v463 = vadd.f32 %v439, %v461
    %v464 = vadd.f32 %v440, %v462
    %s465 = sld [smem:[#allocation8 + $0x57]]
    %v466 = vstv %s465
    %v467 = vmul.f32 %v466, %v450
    %v468 = vmul.f32 %v466, %v452
    %v469 = vadd.f32 %v445, %v467
    %v470 = vadd.f32 %v446, %v468
    %s471 = sld [smem:[#allocation8 + $0x10]]
    %v472 = vstv %s471
    %v473 = vmul.f32 %v472, %v447
    %v474 = vmul.f32 %v472, %v448
    %v475 = vadd.f32 %v457, %v473
    %v476 = vadd.f32 %v458, %v474
    %s477 = sld [smem:[#allocation8 + $0x34]]
    %v478 = vstv %s477
    %v479 = vmul.f32 %v478, %v447
    %v480 = vmul.f32 %v478, %v448
    %v481 = vadd.f32 %v463, %v479
    %v482 = vadd.f32 %v464, %v480
    %s483 = sld [smem:[#allocation8 + $0x58]]
    %v484 = vstv %s483
    %v485 = vmul.f32 %v484, %v447
    %v486 = vmul.f32 %v484, %v448
    %v487 = vadd.f32 %v469, %v485
    %v488 = vadd.f32 %v470, %v486
    %489 = vrot.lane.b32.xlu0 %v447, 127
    %v490 = vpop.permute.xlu0 %489
    %491 = vrot.lane.b32.xlu0 %v448, 127
    %v492 = vpop.permute.xlu0 %491
    %s493 = sld [smem:[#allocation8 + $0x11]]
    %v494 = vstv %s493
    %v495 = vmul.f32 %v494, %v490
    %v496 = vmul.f32 %v494, %v492
    %v497 = vadd.f32 %v475, %v495
    %v498 = vadd.f32 %v476, %v496
    %s499 = sld [smem:[#allocation8 + $0x35]]
    %v500 = vstv %s499
    %v501 = vmul.f32 %v500, %v490
    %v502 = vmul.f32 %v500, %v492
    %v503 = vadd.f32 %v481, %v501
    %v504 = vadd.f32 %v482, %v502
    %s505 = sld [smem:[#allocation8 + $0x59]]
    %v506 = vstv %s505
    %v507 = vmul.f32 %v506, %v490
    %v508 = vmul.f32 %v506, %v492
    %v509 = vadd.f32 %v487, %v507
    %v510 = vadd.f32 %v488, %v508
    %v511 = vld [vmem:[%s94] sm:$0xff]
    %v512 = vld [vmem:[%s94 + $0x8] sm:$0xff]
    %513 = vrot.lane.b32.xlu0 %v511, 1
    %v514 = vpop.permute.xlu0 %513
    %515 = vrot.lane.b32.xlu0 %v512, 1
    %v516 = vpop.permute.xlu0 %515
    %s517 = sld [smem:[#allocation8 + $0x12]]
    %v518 = vstv %s517
    %v519 = vmul.f32 %v518, %v514
    %v520 = vmul.f32 %v518, %v516
    %v521 = vadd.f32 %v497, %v519
    %v522 = vadd.f32 %v498, %v520
    %s523 = sld [smem:[#allocation8 + $0x36]]
    %v524 = vstv %s523
    %v525 = vmul.f32 %v524, %v514
    %v526 = vmul.f32 %v524, %v516
    %v527 = vadd.f32 %v503, %v525
    %v528 = vadd.f32 %v504, %v526
    %s529 = sld [smem:[#allocation8 + $0x5a]]
    %v530 = vstv %s529
    %v531 = vmul.f32 %v530, %v514
    %v532 = vmul.f32 %v530, %v516
    %v533 = vadd.f32 %v509, %v531
    %v534 = vadd.f32 %v510, %v532
    %s535 = sld [smem:[#allocation8 + $0x13]]
    %v536 = vstv %s535
    %v537 = vmul.f32 %v536, %v511
    %v538 = vmul.f32 %v536, %v512
    %v539 = vadd.f32 %v521, %v537
    %v540 = vadd.f32 %v522, %v538
    %s541 = sld [smem:[#allocation8 + $0x37]]
    %v542 = vstv %s541
    %v543 = vmul.f32 %v542, %v511
    %v544 = vmul.f32 %v542, %v512
    %v545 = vadd.f32 %v527, %v543
    %v546 = vadd.f32 %v528, %v544
    %s547 = sld [smem:[#allocation8 + $0x5b]]
    %v548 = vstv %s547
    %v549 = vmul.f32 %v548, %v511
    %v550 = vmul.f32 %v548, %v512
    %v551 = vadd.f32 %v533, %v549
    %v552 = vadd.f32 %v534, %v550
    %553 = vrot.lane.b32.xlu0 %v511, 127
    %v554 = vpop.permute.xlu0 %553
    %555 = vrot.lane.b32.xlu0 %v512, 127
    %v556 = vpop.permute.xlu0 %555
    %s557 = sld [smem:[#allocation8 + $0x14]]
    %v558 = vstv %s557
    %v559 = vmul.f32 %v558, %v554
    %v560 = vmul.f32 %v558, %v556
    %v561 = vadd.f32 %v539, %v559
    %v562 = vadd.f32 %v540, %v560
    %s563 = sld [smem:[#allocation8 + $0x38]]
    %v564 = vstv %s563
    %v565 = vmul.f32 %v564, %v554
    %v566 = vmul.f32 %v564, %v556
    %v567 = vadd.f32 %v545, %v565
    %v568 = vadd.f32 %v546, %v566
    %s569 = sld [smem:[#allocation8 + $0x5c]]
    %v570 = vstv %s569
    %v571 = vmul.f32 %v570, %v554
    %v572 = vmul.f32 %v570, %v556
    %v573 = vadd.f32 %v551, %v571
    %v574 = vadd.f32 %v552, %v572
    %v575 = vld [vmem:[%s94 + $0x1] sm:$0xff]
    %v576 = vld [vmem:[%s94 + $0x9] sm:$0xff]
    %577 = vrot.lane.b32.xlu0 %v575, 1
    %v578 = vpop.permute.xlu0 %577
    %579 = vrot.lane.b32.xlu0 %v576, 1
    %v580 = vpop.permute.xlu0 %579
    %s581 = sld [smem:[#allocation8 + $0x15]]
    %v582 = vstv %s581
    %v583 = vmul.f32 %v582, %v578
    %v584 = vmul.f32 %v582, %v580
    %v585 = vadd.f32 %v561, %v583
    %v586 = vadd.f32 %v562, %v584
    %s587 = sld [smem:[#allocation8 + $0x39]]
    %v588 = vstv %s587
    %v589 = vmul.f32 %v588, %v578
    %v590 = vmul.f32 %v588, %v580
    %v591 = vadd.f32 %v567, %v589
    %v592 = vadd.f32 %v568, %v590
    %s593 = sld [smem:[#allocation8 + $0x5d]]
    %v594 = vstv %s593
    %v595 = vmul.f32 %v594, %v578
    %v596 = vmul.f32 %v594, %v580
    %v597 = vadd.f32 %v573, %v595
    %v598 = vadd.f32 %v574, %v596
    %s599 = sld [smem:[#allocation8 + $0x16]]
    %v600 = vstv %s599
    %v601 = vmul.f32 %v600, %v575
    %v602 = vmul.f32 %v600, %v576
    %v603 = vadd.f32 %v585, %v601
    %v604 = vadd.f32 %v586, %v602
    %s605 = sld [smem:[#allocation8 + $0x3a]]
    %v606 = vstv %s605
    %v607 = vmul.f32 %v606, %v575
    %v608 = vmul.f32 %v606, %v576
    %v609 = vadd.f32 %v591, %v607
    %v610 = vadd.f32 %v592, %v608
    %s611 = sld [smem:[#allocation8 + $0x5e]]
    %v612 = vstv %s611
    %v613 = vmul.f32 %v612, %v575
    %v614 = vmul.f32 %v612, %v576
    %v615 = vadd.f32 %v597, %v613
    %v616 = vadd.f32 %v598, %v614
    %617 = vrot.lane.b32.xlu0 %v575, 127
    %v618 = vpop.permute.xlu0 %617
    %619 = vrot.lane.b32.xlu0 %v576, 127
    %v620 = vpop.permute.xlu0 %619
    %s621 = sld [smem:[#allocation8 + $0x17]]
    %v622 = vstv %s621
    %v623 = vmul.f32 %v622, %v618
    %v624 = vmul.f32 %v622, %v620
    %v625 = vadd.f32 %v603, %v623
    %v626 = vadd.f32 %v604, %v624
    %s627 = sld [smem:[#allocation8 + $0x3b]]
    %v628 = vstv %s627
    %v629 = vmul.f32 %v628, %v618
    %v630 = vmul.f32 %v628, %v620
    %v631 = vadd.f32 %v609, %v629
    %v632 = vadd.f32 %v610, %v630
    %s633 = sld [smem:[#allocation8 + $0x5f]]
    %v634 = vstv %s633
    %v635 = vmul.f32 %v634, %v618
    %v636 = vmul.f32 %v634, %v620
    %v637 = vadd.f32 %v615, %v635
    %v638 = vadd.f32 %v616, %v636
    %v639 = vld [vmem:[%s94 + $0x2] sm:$0xff]
    %v640 = vld [vmem:[%s94 + $0xa] sm:$0xff]
    %641 = vrot.lane.b32.xlu0 %v639, 1
    %v642 = vpop.permute.xlu0 %641
    %643 = vrot.lane.b32.xlu0 %v640, 1
    %v644 = vpop.permute.xlu0 %643
    %s645 = sld [smem:[#allocation8 + $0x18]]
    %v646 = vstv %s645
    %v647 = vmul.f32 %v646, %v642
    %v648 = vmul.f32 %v646, %v644
    %v649 = vadd.f32 %v625, %v647
    %v650 = vadd.f32 %v626, %v648
    %s651 = sld [smem:[#allocation8 + $0x3c]]
    %v652 = vstv %s651
    %v653 = vmul.f32 %v652, %v642
    %v654 = vmul.f32 %v652, %v644
    %v655 = vadd.f32 %v631, %v653
    %v656 = vadd.f32 %v632, %v654
    %s657 = sld [smem:[#allocation8 + $0x60]]
    %v658 = vstv %s657
    %v659 = vmul.f32 %v658, %v642
    %v660 = vmul.f32 %v658, %v644
    %v661 = vadd.f32 %v637, %v659
    %v662 = vadd.f32 %v638, %v660
    %s663 = sld [smem:[#allocation8 + $0x19]]
    %v664 = vstv %s663
    %v665 = vmul.f32 %v664, %v639
    %v666 = vmul.f32 %v664, %v640
    %v667 = vadd.f32 %v649, %v665
    %v668 = vadd.f32 %v650, %v666
    %s669 = sld [smem:[#allocation8 + $0x3d]]
    %v670 = vstv %s669
    %v671 = vmul.f32 %v670, %v639
    %v672 = vmul.f32 %v670, %v640
    %v673 = vadd.f32 %v655, %v671
    %v674 = vadd.f32 %v656, %v672
    %s675 = sld [smem:[#allocation8 + $0x61]]
    %v676 = vstv %s675
    %v677 = vmul.f32 %v676, %v639
    %v678 = vmul.f32 %v676, %v640
    %v679 = vadd.f32 %v661, %v677
    %v680 = vadd.f32 %v662, %v678
    %681 = vrot.lane.b32.xlu0 %v639, 127
    %v682 = vpop.permute.xlu0 %681
    %683 = vrot.lane.b32.xlu0 %v640, 127
    %v684 = vpop.permute.xlu0 %683
    %s685 = sld [smem:[#allocation8 + $0x1a]]
    %v686 = vstv %s685
    %v687 = vmul.f32 %v686, %v682
    %v688 = vmul.f32 %v686, %v684
    %v689 = vadd.f32 %v667, %v687
    %v690 = vadd.f32 %v668, %v688
    %s691 = sld [smem:[#allocation8 + $0x3e]]
    %v692 = vstv %s691
    %v693 = vmul.f32 %v692, %v682
    %v694 = vmul.f32 %v692, %v684
    %v695 = vadd.f32 %v673, %v693
    %v696 = vadd.f32 %v674, %v694
    %s697 = sld [smem:[#allocation8 + $0x62]]
    %v698 = vstv %s697
    %v699 = vmul.f32 %v698, %v682
    %v700 = vmul.f32 %v698, %v684
    %v701 = vadd.f32 %v679, %v699
    %v702 = vadd.f32 %v680, %v700
    %v703 = vld [vmem:[%s100] sm:$0xff]
    %v704 = vld [vmem:[%s100 + $0x8] sm:$0xff]
    %705 = vrot.lane.b32.xlu0 %v703, 1
    %v706 = vpop.permute.xlu0 %705
    %707 = vrot.lane.b32.xlu0 %v704, 1
    %v708 = vpop.permute.xlu0 %707
    %s709 = sld [smem:[#allocation8 + $0x1b]]
    %v710 = vstv %s709
    %v711 = vmul.f32 %v710, %v706
    %v712 = vmul.f32 %v710, %v708
    %v713 = vadd.f32 %v689, %v711
    %v714 = vadd.f32 %v690, %v712
    %s715 = sld [smem:[#allocation8 + $0x3f]]
    %v716 = vstv %s715
    %v717 = vmul.f32 %v716, %v706
    %v718 = vmul.f32 %v716, %v708
    %v719 = vadd.f32 %v695, %v717
    %v720 = vadd.f32 %v696, %v718
    %s721 = sld [smem:[#allocation8 + $0x63]]
    %v722 = vstv %s721
    %v723 = vmul.f32 %v722, %v706
    %v724 = vmul.f32 %v722, %v708
    %v725 = vadd.f32 %v701, %v723
    %v726 = vadd.f32 %v702, %v724
    %s727 = sld [smem:[#allocation8 + $0x1c]]
    %v728 = vstv %s727
    %v729 = vmul.f32 %v728, %v703
    %v730 = vmul.f32 %v728, %v704
    %v731 = vadd.f32 %v713, %v729
    %v732 = vadd.f32 %v714, %v730
    %s733 = sld [smem:[#allocation8 + $0x40]]
    %v734 = vstv %s733
    %v735 = vmul.f32 %v734, %v703
    %v736 = vmul.f32 %v734, %v704
    %v737 = vadd.f32 %v719, %v735
    %v738 = vadd.f32 %v720, %v736
    %s739 = sld [smem:[#allocation8 + $0x64]]
    %v740 = vstv %s739
    %v741 = vmul.f32 %v740, %v703
    %v742 = vmul.f32 %v740, %v704
    %v743 = vadd.f32 %v725, %v741
    %v744 = vadd.f32 %v726, %v742
    %745 = vrot.lane.b32.xlu0 %v703, 127
    %v746 = vpop.permute.xlu0 %745
    %747 = vrot.lane.b32.xlu0 %v704, 127
    %v748 = vpop.permute.xlu0 %747
    %s749 = sld [smem:[#allocation8 + $0x1d]]
    %v750 = vstv %s749
    %v751 = vmul.f32 %v750, %v746
    %v752 = vmul.f32 %v750, %v748
    %v753 = vadd.f32 %v731, %v751
    %v754 = vadd.f32 %v732, %v752
    %s755 = sld [smem:[#allocation8 + $0x41]]
    %v756 = vstv %s755
    %v757 = vmul.f32 %v756, %v746
    %v758 = vmul.f32 %v756, %v748
    %v759 = vadd.f32 %v737, %v757
    %v760 = vadd.f32 %v738, %v758
    %s761 = sld [smem:[#allocation8 + $0x65]]
    %v762 = vstv %s761
    %v763 = vmul.f32 %v762, %v746
    %v764 = vmul.f32 %v762, %v748
    %v765 = vadd.f32 %v743, %v763
    %v766 = vadd.f32 %v744, %v764
    %v767 = vld [vmem:[%s100 + $0x1] sm:$0xff]
    %v768 = vld [vmem:[%s100 + $0x9] sm:$0xff]
    %769 = vrot.lane.b32.xlu0 %v767, 1
    %v770 = vpop.permute.xlu0 %769
    %771 = vrot.lane.b32.xlu0 %v768, 1
    %v772 = vpop.permute.xlu0 %771
    %s773 = sld [smem:[#allocation8 + $0x1e]]
    %v774 = vstv %s773
    %v775 = vmul.f32 %v774, %v770
    %v776 = vmul.f32 %v774, %v772
    %v777 = vadd.f32 %v753, %v775
    %v778 = vadd.f32 %v754, %v776
    %s779 = sld [smem:[#allocation8 + $0x42]]
    %v780 = vstv %s779
    %v781 = vmul.f32 %v780, %v770
    %v782 = vmul.f32 %v780, %v772
    %v783 = vadd.f32 %v759, %v781
    %v784 = vadd.f32 %v760, %v782
    %s785 = sld [smem:[#allocation8 + $0x66]]
    %v786 = vstv %s785
    %v787 = vmul.f32 %v786, %v770
    %v788 = vmul.f32 %v786, %v772
    %v789 = vadd.f32 %v765, %v787
    %v790 = vadd.f32 %v766, %v788
    %s791 = sld [smem:[#allocation8 + $0x1f]]
    %v792 = vstv %s791
    %v793 = vmul.f32 %v792, %v767
    %v794 = vmul.f32 %v792, %v768
    %v795 = vadd.f32 %v777, %v793
    %v796 = vadd.f32 %v778, %v794
    %s797 = sld [smem:[#allocation8 + $0x43]]
    %v798 = vstv %s797
    %v799 = vmul.f32 %v798, %v767
    %v800 = vmul.f32 %v798, %v768
    %v801 = vadd.f32 %v783, %v799
    %v802 = vadd.f32 %v784, %v800
    %s803 = sld [smem:[#allocation8 + $0x67]]
    %v804 = vstv %s803
    %v805 = vmul.f32 %v804, %v767
    %v806 = vmul.f32 %v804, %v768
    %v807 = vadd.f32 %v789, %v805
    %v808 = vadd.f32 %v790, %v806
    %809 = vrot.lane.b32.xlu0 %v767, 127
    %v810 = vpop.permute.xlu0 %809
    %811 = vrot.lane.b32.xlu0 %v768, 127
    %v812 = vpop.permute.xlu0 %811
    %s813 = sld [smem:[#allocation8 + $0x20]]
    %v814 = vstv %s813
    %v815 = vmul.f32 %v814, %v810
    %v816 = vmul.f32 %v814, %v812
    %v817 = vadd.f32 %v795, %v815
    %v818 = vadd.f32 %v796, %v816
    %s819 = sld [smem:[#allocation8 + $0x44]]
    %v820 = vstv %s819
    %v821 = vmul.f32 %v820, %v810
    %v822 = vmul.f32 %v820, %v812
    %v823 = vadd.f32 %v801, %v821
    %v824 = vadd.f32 %v802, %v822
    %s825 = sld [smem:[#allocation8 + $0x68]]
    %v826 = vstv %s825
    %v827 = vmul.f32 %v826, %v810
    %v828 = vmul.f32 %v826, %v812
    %v829 = vadd.f32 %v807, %v827
    %v830 = vadd.f32 %v808, %v828
    %v831 = vld [vmem:[%s100 + $0x2] sm:$0xff]
    %v832 = vld [vmem:[%s100 + $0xa] sm:$0xff]
    %833 = vrot.lane.b32.xlu0 %v831, 1
    %v834 = vpop.permute.xlu0 %833
    %835 = vrot.lane.b32.xlu0 %v832, 1
    %v836 = vpop.permute.xlu0 %835
    %s837 = sld [smem:[#allocation8 + $0x21]]
    %v838 = vstv %s837
    %v839 = vmul.f32 %v838, %v834
    %v840 = vmul.f32 %v838, %v836
    %v841 = vadd.f32 %v817, %v839
    %v842 = vadd.f32 %v818, %v840
    %s843 = sld [smem:[#allocation8 + $0x45]]
    %v844 = vstv %s843
    %v845 = vmul.f32 %v844, %v834
    %v846 = vmul.f32 %v844, %v836
    %v847 = vadd.f32 %v823, %v845
    %v848 = vadd.f32 %v824, %v846
    %s849 = sld [smem:[#allocation8 + $0x69]]
    %v850 = vstv %s849
    %v851 = vmul.f32 %v850, %v834
    %v852 = vmul.f32 %v850, %v836
    %v853 = vadd.f32 %v829, %v851
    %v854 = vadd.f32 %v830, %v852
    %s855 = sld [smem:[#allocation8 + $0x22]]
    %v856 = vstv %s855
    %v857 = vmul.f32 %v856, %v831
    %v858 = vmul.f32 %v856, %v832
    %v859 = vadd.f32 %v841, %v857
    %v860 = vadd.f32 %v842, %v858
    %s861 = sld [smem:[#allocation8 + $0x46]]
    %v862 = vstv %s861
    %v863 = vmul.f32 %v862, %v831
    %v864 = vmul.f32 %v862, %v832
    %v865 = vadd.f32 %v847, %v863
    %v866 = vadd.f32 %v848, %v864
    %s867 = sld [smem:[#allocation8 + $0x6a]]
    %v868 = vstv %s867
    %v869 = vmul.f32 %v868, %v831
    %v870 = vmul.f32 %v868, %v832
    %v871 = vadd.f32 %v853, %v869
    %v872 = vadd.f32 %v854, %v870
    %873 = vrot.lane.b32.xlu0 %v831, 127
    %v874 = vpop.permute.xlu0 %873
    %875 = vrot.lane.b32.xlu0 %v832, 127
    %v876 = vpop.permute.xlu0 %875
    %s877 = sld [smem:[#allocation8 + $0x23]]
    %v878 = vstv %s877
    %v879 = vmul.f32 %v878, %v874
    %v880 = vmul.f32 %v878, %v876
    %v881 = vadd.f32 %v859, %v879
    %v882 = vadd.f32 %v860, %v880
    %s883 = sld [smem:[#allocation8 + $0x47]]
    %v884 = vstv %s883
    %v885 = vmul.f32 %v884, %v874
    %v886 = vmul.f32 %v884, %v876
    %v887 = vadd.f32 %v865, %v885
    %v888 = vadd.f32 %v866, %v886
    %s889 = sld [smem:[#allocation8 + $0x6b]]
    %v890 = vstv %s889
    %v891 = vmul.f32 %v890, %v874
    %v892 = vmul.f32 %v890, %v876
    %v893 = vadd.f32 %v871, %v891
    %v894 = vadd.f32 %v872, %v892
    %s895 = sld [smem:[#allocation9]]
    %v896 = vstv %s895
    %v897 = vadd.f32 %v881, %v896
    %v898 = vadd.f32 %v882, %v896
    %v899 = vsub.f32 0.0, %v897
    %v900 = vsub.f32 0.0, %v898
    %v901 = vmul.f32 %v899, 1.442695
    %v902 = vpow.pop %v901
    %v903 = vmul.f32 %v900, 1.442695
    %v904 = vpow.pop %v903
    %v905 = vadd.f32 %v902, 1.0
    %v906 = vadd.f32 %v904, 1.0
    %v907 = vrcp.pop %v905
    %v908 = vmul.f32 %v905, %v907
    %v909 = vsub.f32 1.0, %v908
    %v910 = vmul.f32 %v907, %v909
    %v911 = vadd.f32 %v907, %v910
    %vm912 = vweird.f32 %v905
    %vm913 = vweird.f32 %v907
    %vm914 = vmor %vm912, %vm913
    %v915 = vsel %vm914, %v907, %v911
    %v916 = vand.u32 2147483647, %v905
    %vm917 = vcmp.eq.f32.partialorder %v916, 8.507059e+37
    %v918 = vand.u32 %v905, 2147483648
    %v919 = vor.u32 1.1754944e-38, %v918
    %v920 = vsel %vm917, %v919, %v915
    %v921 = vmul.f32 1.0, %v920
    %v922 = vrcp.pop %v906
    %v923 = vmul.f32 %v906, %v922
    %v924 = vsub.f32 1.0, %v923
    %v925 = vmul.f32 %v922, %v924
    %v926 = vadd.f32 %v922, %v925
    %vm927 = vweird.f32 %v906
    %vm928 = vweird.f32 %v922
    %vm929 = vmor %vm927, %vm928
    %v930 = vsel %vm929, %v922, %v926
    %v931 = vand.u32 2147483647, %v906
    %vm932 = vcmp.eq.f32.partialorder %v931, 8.507059e+37
    %v933 = vand.u32 %v906, 2147483648
    %v934 = vor.u32 1.1754944e-38, %v933
    %v935 = vsel %vm932, %v934, %v930
    %v936 = vmul.f32 1.0, %v935
    %937 = vst.msk [vmem:[#allocation10] sm:$0xff] %vm82, %v921
    %938 = vst.msk [vmem:[#allocation10 + $0x8] sm:$0xff] %vm82, %v936
    %s939 = sld [smem:[#allocation9 + $0x1]]
    %v940 = vstv %s939
    %v941 = vadd.f32 %v887, %v940
    %v942 = vadd.f32 %v888, %v940
    %v943 = vsub.f32 0.0, %v941
    %v944 = vsub.f32 0.0, %v942
    %v945 = vmul.f32 %v943, 1.442695
    %v946 = vpow.pop %v945
    %v947 = vmul.f32 %v944, 1.442695
    %v948 = vpow.pop %v947
    %v949 = vadd.f32 %v946, 1.0
    %v950 = vadd.f32 %v948, 1.0
    %v951 = vrcp.pop %v949
    %v952 = vmul.f32 %v949, %v951
    %v953 = vsub.f32 1.0, %v952
    %v954 = vmul.f32 %v951, %v953
    %v955 = vadd.f32 %v951, %v954
    %vm956 = vweird.f32 %v949
    %vm957 = vweird.f32 %v951
    %vm958 = vmor %vm956, %vm957
    %v959 = vsel %vm958, %v951, %v955
    %v960 = vand.u32 2147483647, %v949
    %vm961 = vcmp.eq.f32.partialorder %v960, 8.507059e+37
    %v962 = vand.u32 %v949, 2147483648
    %v963 = vor.u32 1.1754944e-38, %v962
    %v964 = vsel %vm961, %v963, %v959
    %v965 = vmul.f32 1.0, %v964
    %v966 = vrcp.pop %v950
    %v967 = vmul.f32 %v950, %v966
    %v968 = vsub.f32 1.0, %v967
    %v969 = vmul.f32 %v966, %v968
    %v970 = vadd.f32 %v966, %v969
    %vm971 = vweird.f32 %v950
    %vm972 = vweird.f32 %v966
    %vm973 = vmor %vm971, %vm972
    %v974 = vsel %vm973, %v966, %v970
    %v975 = vand.u32 2147483647, %v950
    %vm976 = vcmp.eq.f32.partialorder %v975, 8.507059e+37
    %v977 = vand.u32 %v950, 2147483648
    %v978 = vor.u32 1.1754944e-38, %v977
    %v979 = vsel %vm976, %v978, %v974
    %v980 = vmul.f32 1.0, %v979
    %s981 = scalar_lea.vmem [#allocation10], 16
    %982 = vst.msk [vmem:[%s981] sm:$0xff] %vm82, %v965
    %983 = vst.msk [vmem:[%s981 + $0x8] sm:$0xff] %vm82, %v980
    %s984 = sld [smem:[#allocation9 + $0x2]]
    %v985 = vstv %s984
    %v986 = vadd.f32 %v893, %v985
    %v987 = vadd.f32 %v894, %v985
    %v988 = vsub.f32 0.0, %v986
    %v989 = vsub.f32 0.0, %v987
    %v990 = vmul.f32 %v988, 1.442695
    %v991 = vpow.pop %v990
    %v992 = vmul.f32 %v989, 1.442695
    %v993 = vpow.pop %v992
    %v994 = vadd.f32 %v991, 1.0
    %v995 = vadd.f32 %v993, 1.0
    %v996 = vrcp.pop %v994
    %v997 = vmul.f32 %v994, %v996
    %v998 = vsub.f32 1.0, %v997
    %v999 = vmul.f32 %v996, %v998
    %v1000 = vadd.f32 %v996, %v999
    %vm1001 = vweird.f32 %v994
    %vm1002 = vweird.f32 %v996
    %vm1003 = vmor %vm1001, %vm1002
    %v1004 = vsel %vm1003, %v996, %v1000
    %v1005 = vand.u32 2147483647, %v994
    %vm1006 = vcmp.eq.f32.partialorder %v1005, 8.507059e+37
    %v1007 = vand.u32 %v994, 2147483648
    %v1008 = vor.u32 1.1754944e-38, %v1007
    %v1009 = vsel %vm1006, %v1008, %v1004
    %v1010 = vmul.f32 1.0, %v1009
    %v1011 = vrcp.pop %v995
    %v1012 = vmul.f32 %v995, %v1011
    %v1013 = vsub.f32 1.0, %v1012
    %v1014 = vmul.f32 %v1011, %v1013
    %v1015 = vadd.f32 %v1011, %v1014
    %vm1016 = vweird.f32 %v995
    %vm1017 = vweird.f32 %v1011
    %vm1018 = vmor %vm1016, %vm1017
    %v1019 = vsel %vm1018, %v1011, %v1015
    %v1020 = vand.u32 2147483647, %v995
    %vm1021 = vcmp.eq.f32.partialorder %v1020, 8.507059e+37
    %v1022 = vand.u32 %v995, 2147483648
    %v1023 = vor.u32 1.1754944e-38, %v1022
    %v1024 = vsel %vm1021, %v1023, %v1019
    %v1025 = vmul.f32 1.0, %v1024
    %s1026 = scalar_lea.vmem [#allocation10], 32
    %1027 = vst.msk [vmem:[%s1026] sm:$0xff] %vm82, %v1010
    %1028 = vst.msk [vmem:[%s1026 + $0x8] sm:$0xff] %vm82, %v1025
    %v1029 = vld [vmem:[%s106] sm:$0xff]
    %v1030 = vld [vmem:[%s106 + $0x8] sm:$0xff]
    %1031 = vrot.lane.b32.xlu0 %v1029, 1
    %v1032 = vpop.permute.xlu0 %1031
    %1033 = vrot.lane.b32.xlu0 %v1030, 1
    %v1034 = vpop.permute.xlu0 %1033
    %s1035 = sld [smem:[#allocation8]]
    %v1036 = vstv %s1035
    %v1037 = vmul.f32 %v1036, %v1032
    %v1038 = vmul.f32 %v1036, %v1034
    %v1039 = vadd.f32 %v1037, 0.0
    %v1040 = vadd.f32 %v1038, 0.0
    %s1041 = sld [smem:[#allocation8 + $0x24]]
    %v1042 = vstv %s1041
    %v1043 = vmul.f32 %v1042, %v1032
    %v1044 = vmul.f32 %v1042, %v1034
    %v1045 = vadd.f32 %v1043, 0.0
    %v1046 = vadd.f32 %v1044, 0.0
    %s1047 = sld [smem:[#allocation8 + $0x48]]
    %v1048 = vstv %s1047
    %v1049 = vmul.f32 %v1048, %v1032
    %v1050 = vmul.f32 %v1048, %v1034
    %v1051 = vadd.f32 %v1049, 0.0
    %v1052 = vadd.f32 %v1050, 0.0
    %s1053 = sld [smem:[#allocation8 + $0x1]]
    %v1054 = vstv %s1053
    %v1055 = vmul.f32 %v1054, %v1029
    %v1056 = vmul.f32 %v1054, %v1030
    %v1057 = vadd.f32 %v1039, %v1055
    %v1058 = vadd.f32 %v1040, %v1056
    %s1059 = sld [smem:[#allocation8 + $0x25]]
    %v1060 = vstv %s1059
    %v1061 = vmul.f32 %v1060, %v1029
    %v1062 = vmul.f32 %v1060, %v1030
    %v1063 = vadd.f32 %v1045, %v1061
    %v1064 = vadd.f32 %v1046, %v1062
    %s1065 = sld [smem:[#allocation8 + $0x49]]
    %v1066 = vstv %s1065
    %v1067 = vmul.f32 %v1066, %v1029
    %v1068 = vmul.f32 %v1066, %v1030
    %v1069 = vadd.f32 %v1051, %v1067
    %v1070 = vadd.f32 %v1052, %v1068
    %1071 = vrot.lane.b32.xlu0 %v1029, 127
    %v1072 = vpop.permute.xlu0 %1071
    %1073 = vrot.lane.b32.xlu0 %v1030, 127
    %v1074 = vpop.permute.xlu0 %1073
    %s1075 = sld [smem:[#allocation8 + $0x2]]
    %v1076 = vstv %s1075
    %v1077 = vmul.f32 %v1076, %v1072
    %v1078 = vmul.f32 %v1076, %v1074
    %v1079 = vadd.f32 %v1057, %v1077
    %v1080 = vadd.f32 %v1058, %v1078
    %s1081 = sld [smem:[#allocation8 + $0x26]]
    %v1082 = vstv %s1081
    %v1083 = vmul.f32 %v1082, %v1072
    %v1084 = vmul.f32 %v1082, %v1074
    %v1085 = vadd.f32 %v1063, %v1083
    %v1086 = vadd.f32 %v1064, %v1084
    %s1087 = sld [smem:[#allocation8 + $0x4a]]
    %v1088 = vstv %s1087
    %v1089 = vmul.f32 %v1088, %v1072
    %v1090 = vmul.f32 %v1088, %v1074
    %v1091 = vadd.f32 %v1069, %v1089
    %v1092 = vadd.f32 %v1070, %v1090
    %v1093 = vld [vmem:[%s106 + $0x1] sm:$0xff]
    %v1094 = vld [vmem:[%s106 + $0x9] sm:$0xff]
    %1095 = vrot.lane.b32.xlu0 %v1093, 1
    %v1096 = vpop.permute.xlu0 %1095
    %1097 = vrot.lane.b32.xlu0 %v1094, 1
    %v1098 = vpop.permute.xlu0 %1097
    %s1099 = sld [smem:[#allocation8 + $0x3]]
    %v1100 = vstv %s1099
    %v1101 = vmul.f32 %v1100, %v1096
    %v1102 = vmul.f32 %v1100, %v1098
    %v1103 = vadd.f32 %v1079, %v1101
    %v1104 = vadd.f32 %v1080, %v1102
    %s1105 = sld [smem:[#allocation8 + $0x27]]
    %v1106 = vstv %s1105
    %v1107 = vmul.f32 %v1106, %v1096
    %v1108 = vmul.f32 %v1106, %v1098
    %v1109 = vadd.f32 %v1085, %v1107
    %v1110 = vadd.f32 %v1086, %v1108
    %s1111 = sld [smem:[#allocation8 + $0x4b]]
    %v1112 = vstv %s1111
    %v1113 = vmul.f32 %v1112, %v1096
    %v1114 = vmul.f32 %v1112, %v1098
    %v1115 = vadd.f32 %v1091, %v1113
    %v1116 = vadd.f32 %v1092, %v1114
    %s1117 = sld [smem:[#allocation8 + $0x4]]
    %v1118 = vstv %s1117
    %v1119 = vmul.f32 %v1118, %v1093
    %v1120 = vmul.f32 %v1118, %v1094
    %v1121 = vadd.f32 %v1103, %v1119
    %v1122 = vadd.f32 %v1104, %v1120
    %s1123 = sld [smem:[#allocation8 + $0x28]]
    %v1124 = vstv %s1123
    %v1125 = vmul.f32 %v1124, %v1093
    %v1126 = vmul.f32 %v1124, %v1094
    %v1127 = vadd.f32 %v1109, %v1125
    %v1128 = vadd.f32 %v1110, %v1126
    %s1129 = sld [smem:[#allocation8 + $0x4c]]
    %v1130 = vstv %s1129
    %v1131 = vmul.f32 %v1130, %v1093
    %v1132 = vmul.f32 %v1130, %v1094
    %v1133 = vadd.f32 %v1115, %v1131
    %v1134 = vadd.f32 %v1116, %v1132
    %1135 = vrot.lane.b32.xlu0 %v1093, 127
    %v1136 = vpop.permute.xlu0 %1135
    %1137 = vrot.lane.b32.xlu0 %v1094, 127
    %v1138 = vpop.permute.xlu0 %1137
    %s1139 = sld [smem:[#allocation8 + $0x5]]
    %v1140 = vstv %s1139
    %v1141 = vmul.f32 %v1140, %v1136
    %v1142 = vmul.f32 %v1140, %v1138
    %v1143 = vadd.f32 %v1121, %v1141
    %v1144 = vadd.f32 %v1122, %v1142
    %s1145 = sld [smem:[#allocation8 + $0x29]]
    %v1146 = vstv %s1145
    %v1147 = vmul.f32 %v1146, %v1136
    %v1148 = vmul.f32 %v1146, %v1138
    %v1149 = vadd.f32 %v1127, %v1147
    %v1150 = vadd.f32 %v1128, %v1148
    %s1151 = sld [smem:[#allocation8 + $0x4d]]
    %v1152 = vstv %s1151
    %v1153 = vmul.f32 %v1152, %v1136
    %v1154 = vmul.f32 %v1152, %v1138
    %v1155 = vadd.f32 %v1133, %v1153
    %v1156 = vadd.f32 %v1134, %v1154
    %v1157 = vld [vmem:[%s106 + $0x2] sm:$0xff]
    %v1158 = vld [vmem:[%s106 + $0xa] sm:$0xff]
    %1159 = vrot.lane.b32.xlu0 %v1157, 1
    %v1160 = vpop.permute.xlu0 %1159
    %1161 = vrot.lane.b32.xlu0 %v1158, 1
    %v1162 = vpop.permute.xlu0 %1161
    %s1163 = sld [smem:[#allocation8 + $0x6]]
    %v1164 = vstv %s1163
    %v1165 = vmul.f32 %v1164, %v1160
    %v1166 = vmul.f32 %v1164, %v1162
    %v1167 = vadd.f32 %v1143, %v1165
    %v1168 = vadd.f32 %v1144, %v1166
    %s1169 = sld [smem:[#allocation8 + $0x2a]]
    %v1170 = vstv %s1169
    %v1171 = vmul.f32 %v1170, %v1160
    %v1172 = vmul.f32 %v1170, %v1162
    %v1173 = vadd.f32 %v1149, %v1171
    %v1174 = vadd.f32 %v1150, %v1172
    %s1175 = sld [smem:[#allocation8 + $0x4e]]
    %v1176 = vstv %s1175
    %v1177 = vmul.f32 %v1176, %v1160
    %v1178 = vmul.f32 %v1176, %v1162
    %v1179 = vadd.f32 %v1155, %v1177
    %v1180 = vadd.f32 %v1156, %v1178
    %s1181 = sld [smem:[#allocation8 + $0x7]]
    %v1182 = vstv %s1181
    %v1183 = vmul.f32 %v1182, %v1157
    %v1184 = vmul.f32 %v1182, %v1158
    %v1185 = vadd.f32 %v1167, %v1183
    %v1186 = vadd.f32 %v1168, %v1184
    %s1187 = sld [smem:[#allocation8 + $0x2b]]
    %v1188 = vstv %s1187
    %v1189 = vmul.f32 %v1188, %v1157
    %v1190 = vmul.f32 %v1188, %v1158
    %v1191 = vadd.f32 %v1173, %v1189
    %v1192 = vadd.f32 %v1174, %v1190
    %s1193 = sld [smem:[#allocation8 + $0x4f]]
    %v1194 = vstv %s1193
    %v1195 = vmul.f32 %v1194, %v1157
    %v1196 = vmul.f32 %v1194, %v1158
    %v1197 = vadd.f32 %v1179, %v1195
    %v1198 = vadd.f32 %v1180, %v1196
    %1199 = vrot.lane.b32.xlu0 %v1157, 127
    %v1200 = vpop.permute.xlu0 %1199
    %1201 = vrot.lane.b32.xlu0 %v1158, 127
    %v1202 = vpop.permute.xlu0 %1201
    %s1203 = sld [smem:[#allocation8 + $0x8]]
    %v1204 = vstv %s1203
    %v1205 = vmul.f32 %v1204, %v1200
    %v1206 = vmul.f32 %v1204, %v1202
    %v1207 = vadd.f32 %v1185, %v1205
    %v1208 = vadd.f32 %v1186, %v1206
    %s1209 = sld [smem:[#allocation8 + $0x2c]]
    %v1210 = vstv %s1209
    %v1211 = vmul.f32 %v1210, %v1200
    %v1212 = vmul.f32 %v1210, %v1202
    %v1213 = vadd.f32 %v1191, %v1211
    %v1214 = vadd.f32 %v1192, %v1212
    %s1215 = sld [smem:[#allocation8 + $0x50]]
    %v1216 = vstv %s1215
    %v1217 = vmul.f32 %v1216, %v1200
    %v1218 = vmul.f32 %v1216, %v1202
    %v1219 = vadd.f32 %v1197, %v1217
    %v1220 = vadd.f32 %v1198, %v1218
    %v1221 = vld [vmem:[%s112] sm:$0xff]
    %v1222 = vld [vmem:[%s112 + $0x8] sm:$0xff]
    %1223 = vrot.lane.b32.xlu0 %v1221, 1
    %v1224 = vpop.permute.xlu0 %1223
    %1225 = vrot.lane.b32.xlu0 %v1222, 1
    %v1226 = vpop.permute.xlu0 %1225
    %s1227 = sld [smem:[#allocation8 + $0x9]]
    %v1228 = vstv %s1227
    %v1229 = vmul.f32 %v1228, %v1224
    %v1230 = vmul.f32 %v1228, %v1226
    %v1231 = vadd.f32 %v1207, %v1229
    %v1232 = vadd.f32 %v1208, %v1230
    %s1233 = sld [smem:[#allocation8 + $0x2d]]
    %v1234 = vstv %s1233
    %v1235 = vmul.f32 %v1234, %v1224
    %v1236 = vmul.f32 %v1234, %v1226
    %v1237 = vadd.f32 %v1213, %v1235
    %v1238 = vadd.f32 %v1214, %v1236
    %s1239 = sld [smem:[#allocation8 + $0x51]]
    %v1240 = vstv %s1239
    %v1241 = vmul.f32 %v1240, %v1224
    %v1242 = vmul.f32 %v1240, %v1226
    %v1243 = vadd.f32 %v1219, %v1241
    %v1244 = vadd.f32 %v1220, %v1242
    %s1245 = sld [smem:[#allocation8 + $0xa]]
    %v1246 = vstv %s1245
    %v1247 = vmul.f32 %v1246, %v1221
    %v1248 = vmul.f32 %v1246, %v1222
    %v1249 = vadd.f32 %v1231, %v1247
    %v1250 = vadd.f32 %v1232, %v1248
    %s1251 = sld [smem:[#allocation8 + $0x2e]]
    %v1252 = vstv %s1251
    %v1253 = vmul.f32 %v1252, %v1221
    %v1254 = vmul.f32 %v1252, %v1222
    %v1255 = vadd.f32 %v1237, %v1253
    %v1256 = vadd.f32 %v1238, %v1254
    %s1257 = sld [smem:[#allocation8 + $0x52]]
    %v1258 = vstv %s1257
    %v1259 = vmul.f32 %v1258, %v1221
    %v1260 = vmul.f32 %v1258, %v1222
    %v1261 = vadd.f32 %v1243, %v1259
    %v1262 = vadd.f32 %v1244, %v1260
    %1263 = vrot.lane.b32.xlu0 %v1221, 127
    %v1264 = vpop.permute.xlu0 %1263
    %1265 = vrot.lane.b32.xlu0 %v1222, 127
    %v1266 = vpop.permute.xlu0 %1265
    %s1267 = sld [smem:[#allocation8 + $0xb]]
    %v1268 = vstv %s1267
    %v1269 = vmul.f32 %v1268, %v1264
    %v1270 = vmul.f32 %v1268, %v1266
    %v1271 = vadd.f32 %v1249, %v1269
    %v1272 = vadd.f32 %v1250, %v1270
    %s1273 = sld [smem:[#allocation8 + $0x2f]]
    %v1274 = vstv %s1273
    %v1275 = vmul.f32 %v1274, %v1264
    %v1276 = vmul.f32 %v1274, %v1266
    %v1277 = vadd.f32 %v1255, %v1275
    %v1278 = vadd.f32 %v1256, %v1276
    %s1279 = sld [smem:[#allocation8 + $0x53]]
    %v1280 = vstv %s1279
    %v1281 = vmul.f32 %v1280, %v1264
    %v1282 = vmul.f32 %v1280, %v1266
    %v1283 = vadd.f32 %v1261, %v1281
    %v1284 = vadd.f32 %v1262, %v1282
    %v1285 = vld [vmem:[%s112 + $0x1] sm:$0xff]
    %v1286 = vld [vmem:[%s112 + $0x9] sm:$0xff]
    %1287 = vrot.lane.b32.xlu0 %v1285, 1
    %v1288 = vpop.permute.xlu0 %1287
    %1289 = vrot.lane.b32.xlu0 %v1286, 1
    %v1290 = vpop.permute.xlu0 %1289
    %s1291 = sld [smem:[#allocation8 + $0xc]]
    %v1292 = vstv %s1291
    %v1293 = vmul.f32 %v1292, %v1288
    %v1294 = vmul.f32 %v1292, %v1290
    %v1295 = vadd.f32 %v1271, %v1293
    %v1296 = vadd.f32 %v1272, %v1294
    %s1297 = sld [smem:[#allocation8 + $0x30]]
    %v1298 = vstv %s1297
    %v1299 = vmul.f32 %v1298, %v1288
    %v1300 = vmul.f32 %v1298, %v1290
    %v1301 = vadd.f32 %v1277, %v1299
    %v1302 = vadd.f32 %v1278, %v1300
    %s1303 = sld [smem:[#allocation8 + $0x54]]
    %v1304 = vstv %s1303
    %v1305 = vmul.f32 %v1304, %v1288
    %v1306 = vmul.f32 %v1304, %v1290
    %v1307 = vadd.f32 %v1283, %v1305
    %v1308 = vadd.f32 %v1284, %v1306
    %s1309 = sld [smem:[#allocation8 + $0xd]]
    %v1310 = vstv %s1309
    %v1311 = vmul.f32 %v1310, %v1285
    %v1312 = vmul.f32 %v1310, %v1286
    %v1313 = vadd.f32 %v1295, %v1311
    %v1314 = vadd.f32 %v1296, %v1312
    %s1315 = sld [smem:[#allocation8 + $0x31]]
    %v1316 = vstv %s1315
    %v1317 = vmul.f32 %v1316, %v1285
    %v1318 = vmul.f32 %v1316, %v1286
    %v1319 = vadd.f32 %v1301, %v1317
    %v1320 = vadd.f32 %v1302, %v1318
    %s1321 = sld [smem:[#allocation8 + $0x55]]
    %v1322 = vstv %s1321
    %v1323 = vmul.f32 %v1322, %v1285
    %v1324 = vmul.f32 %v1322, %v1286
    %v1325 = vadd.f32 %v1307, %v1323
    %v1326 = vadd.f32 %v1308, %v1324
    %1327 = vrot.lane.b32.xlu0 %v1285, 127
    %v1328 = vpop.permute.xlu0 %1327
    %1329 = vrot.lane.b32.xlu0 %v1286, 127
    %v1330 = vpop.permute.xlu0 %1329
    %s1331 = sld [smem:[#allocation8 + $0xe]]
    %v1332 = vstv %s1331
    %v1333 = vmul.f32 %v1332, %v1328
    %v1334 = vmul.f32 %v1332, %v1330
    %v1335 = vadd.f32 %v1313, %v1333
    %v1336 = vadd.f32 %v1314, %v1334
    %s1337 = sld [smem:[#allocation8 + $0x32]]
    %v1338 = vstv %s1337
    %v1339 = vmul.f32 %v1338, %v1328
    %v1340 = vmul.f32 %v1338, %v1330
    %v1341 = vadd.f32 %v1319, %v1339
    %v1342 = vadd.f32 %v1320, %v1340
    %s1343 = sld [smem:[#allocation8 + $0x56]]
    %v1344 = vstv %s1343
    %v1345 = vmul.f32 %v1344, %v1328
    %v1346 = vmul.f32 %v1344, %v1330
    %v1347 = vadd.f32 %v1325, %v1345
    %v1348 = vadd.f32 %v1326, %v1346
    %v1349 = vld [vmem:[%s112 + $0x2] sm:$0xff]
    %v1350 = vld [vmem:[%s112 + $0xa] sm:$0xff]
    %1351 = vrot.lane.b32.xlu0 %v1349, 1
    %v1352 = vpop.permute.xlu0 %1351
    %1353 = vrot.lane.b32.xlu0 %v1350, 1
    %v1354 = vpop.permute.xlu0 %1353
    %s1355 = sld [smem:[#allocation8 + $0xf]]
    %v1356 = vstv %s1355
    %v1357 = vmul.f32 %v1356, %v1352
    %v1358 = vmul.f32 %v1356, %v1354
    %v1359 = vadd.f32 %v1335, %v1357
    %v1360 = vadd.f32 %v1336, %v1358
    %s1361 = sld [smem:[#allocation8 + $0x33]]
    %v1362 = vstv %s1361
    %v1363 = vmul.f32 %v1362, %v1352
    %v1364 = vmul.f32 %v1362, %v1354
    %v1365 = vadd.f32 %v1341, %v1363
    %v1366 = vadd.f32 %v1342, %v1364
    %s1367 = sld [smem:[#allocation8 + $0x57]]
    %v1368 = vstv %s1367
    %v1369 = vmul.f32 %v1368, %v1352
    %v1370 = vmul.f32 %v1368, %v1354
    %v1371 = vadd.f32 %v1347, %v1369
    %v1372 = vadd.f32 %v1348, %v1370
    %s1373 = sld [smem:[#allocation8 + $0x10]]
    %v1374 = vstv %s1373
    %v1375 = vmul.f32 %v1374, %v1349
    %v1376 = vmul.f32 %v1374, %v1350
    %v1377 = vadd.f32 %v1359, %v1375
    %v1378 = vadd.f32 %v1360, %v1376
    %s1379 = sld [smem:[#allocation8 + $0x34]]
    %v1380 = vstv %s1379
    %v1381 = vmul.f32 %v1380, %v1349
    %v1382 = vmul.f32 %v1380, %v1350
    %v1383 = vadd.f32 %v1365, %v1381
    %v1384 = vadd.f32 %v1366, %v1382
    %s1385 = sld [smem:[#allocation8 + $0x58]]
    %v1386 = vstv %s1385
    %v1387 = vmul.f32 %v1386, %v1349
    %v1388 = vmul.f32 %v1386, %v1350
    %v1389 = vadd.f32 %v1371, %v1387
    %v1390 = vadd.f32 %v1372, %v1388
    %1391 = vrot.lane.b32.xlu0 %v1349, 127
    %v1392 = vpop.permute.xlu0 %1391
    %1393 = vrot.lane.b32.xlu0 %v1350, 127
    %v1394 = vpop.permute.xlu0 %1393
    %s1395 = sld [smem:[#allocation8 + $0x11]]
    %v1396 = vstv %s1395
    %v1397 = vmul.f32 %v1396, %v1392
    %v1398 = vmul.f32 %v1396, %v1394
    %v1399 = vadd.f32 %v1377, %v1397
    %v1400 = vadd.f32 %v1378, %v1398
    %s1401 = sld [smem:[#allocation8 + $0x35]]
    %v1402 = vstv %s1401
    %v1403 = vmul.f32 %v1402, %v1392
    %v1404 = vmul.f32 %v1402, %v1394
    %v1405 = vadd.f32 %v1383, %v1403
    %v1406 = vadd.f32 %v1384, %v1404
    %s1407 = sld [smem:[#allocation8 + $0x59]]
    %v1408 = vstv %s1407
    %v1409 = vmul.f32 %v1408, %v1392
    %v1410 = vmul.f32 %v1408, %v1394
    %v1411 = vadd.f32 %v1389, %v1409
    %v1412 = vadd.f32 %v1390, %v1410
    %v1413 = vld [vmem:[%s118] sm:$0xff]
    %v1414 = vld [vmem:[%s118 + $0x8] sm:$0xff]
    %1415 = vrot.lane.b32.xlu0 %v1413, 1
    %v1416 = vpop.permute.xlu0 %1415
    %1417 = vrot.lane.b32.xlu0 %v1414, 1
    %v1418 = vpop.permute.xlu0 %1417
    %s1419 = sld [smem:[#allocation8 + $0x12]]
    %v1420 = vstv %s1419
    %v1421 = vmul.f32 %v1420, %v1416
    %v1422 = vmul.f32 %v1420, %v1418
    %v1423 = vadd.f32 %v1399, %v1421
    %v1424 = vadd.f32 %v1400, %v1422
    %s1425 = sld [smem:[#allocation8 + $0x36]]
    %v1426 = vstv %s1425
    %v1427 = vmul.f32 %v1426, %v1416
    %v1428 = vmul.f32 %v1426, %v1418
    %v1429 = vadd.f32 %v1405, %v1427
    %v1430 = vadd.f32 %v1406, %v1428
    %s1431 = sld [smem:[#allocation8 + $0x5a]]
    %v1432 = vstv %s1431
    %v1433 = vmul.f32 %v1432, %v1416
    %v1434 = vmul.f32 %v1432, %v1418
    %v1435 = vadd.f32 %v1411, %v1433
    %v1436 = vadd.f32 %v1412, %v1434
    %s1437 = sld [smem:[#allocation8 + $0x13]]
    %v1438 = vstv %s1437
    %v1439 = vmul.f32 %v1438, %v1413
    %v1440 = vmul.f32 %v1438, %v1414
    %v1441 = vadd.f32 %v1423, %v1439
    %v1442 = vadd.f32 %v1424, %v1440
    %s1443 = sld [smem:[#allocation8 + $0x37]]
    %v1444 = vstv %s1443
    %v1445 = vmul.f32 %v1444, %v1413
    %v1446 = vmul.f32 %v1444, %v1414
    %v1447 = vadd.f32 %v1429, %v1445
    %v1448 = vadd.f32 %v1430, %v1446
    %s1449 = sld [smem:[#allocation8 + $0x5b]]
    %v1450 = vstv %s1449
    %v1451 = vmul.f32 %v1450, %v1413
    %v1452 = vmul.f32 %v1450, %v1414
    %v1453 = vadd.f32 %v1435, %v1451
    %v1454 = vadd.f32 %v1436, %v1452
    %1455 = vrot.lane.b32.xlu0 %v1413, 127
    %v1456 = vpop.permute.xlu0 %1455
    %1457 = vrot.lane.b32.xlu0 %v1414, 127
    %v1458 = vpop.permute.xlu0 %1457
    %s1459 = sld [smem:[#allocation8 + $0x14]]
    %v1460 = vstv %s1459
    %v1461 = vmul.f32 %v1460, %v1456
    %v1462 = vmul.f32 %v1460, %v1458
    %v1463 = vadd.f32 %v1441, %v1461
    %v1464 = vadd.f32 %v1442, %v1462
    %s1465 = sld [smem:[#allocation8 + $0x38]]
    %v1466 = vstv %s1465
    %v1467 = vmul.f32 %v1466, %v1456
    %v1468 = vmul.f32 %v1466, %v1458
    %v1469 = vadd.f32 %v1447, %v1467
    %v1470 = vadd.f32 %v1448, %v1468
    %s1471 = sld [smem:[#allocation8 + $0x5c]]
    %v1472 = vstv %s1471
    %v1473 = vmul.f32 %v1472, %v1456
    %v1474 = vmul.f32 %v1472, %v1458
    %v1475 = vadd.f32 %v1453, %v1473
    %v1476 = vadd.f32 %v1454, %v1474
    %v1477 = vld [vmem:[%s118 + $0x1] sm:$0xff]
    %v1478 = vld [vmem:[%s118 + $0x9] sm:$0xff]
    %1479 = vrot.lane.b32.xlu0 %v1477, 1
    %v1480 = vpop.permute.xlu0 %1479
    %1481 = vrot.lane.b32.xlu0 %v1478, 1
    %v1482 = vpop.permute.xlu0 %1481
    %s1483 = sld [smem:[#allocation8 + $0x15]]
    %v1484 = vstv %s1483
    %v1485 = vmul.f32 %v1484, %v1480
    %v1486 = vmul.f32 %v1484, %v1482
    %v1487 = vadd.f32 %v1463, %v1485
    %v1488 = vadd.f32 %v1464, %v1486
    %s1489 = sld [smem:[#allocation8 + $0x39]]
    %v1490 = vstv %s1489
    %v1491 = vmul.f32 %v1490, %v1480
    %v1492 = vmul.f32 %v1490, %v1482
    %v1493 = vadd.f32 %v1469, %v1491
    %v1494 = vadd.f32 %v1470, %v1492
    %s1495 = sld [smem:[#allocation8 + $0x5d]]
    %v1496 = vstv %s1495
    %v1497 = vmul.f32 %v1496, %v1480
    %v1498 = vmul.f32 %v1496, %v1482
    %v1499 = vadd.f32 %v1475, %v1497
    %v1500 = vadd.f32 %v1476, %v1498
    %s1501 = sld [smem:[#allocation8 + $0x16]]
    %v1502 = vstv %s1501
    %v1503 = vmul.f32 %v1502, %v1477
    %v1504 = vmul.f32 %v1502, %v1478
    %v1505 = vadd.f32 %v1487, %v1503
    %v1506 = vadd.f32 %v1488, %v1504
    %s1507 = sld [smem:[#allocation8 + $0x3a]]
    %v1508 = vstv %s1507
    %v1509 = vmul.f32 %v1508, %v1477
    %v1510 = vmul.f32 %v1508, %v1478
    %v1511 = vadd.f32 %v1493, %v1509
    %v1512 = vadd.f32 %v1494, %v1510
    %s1513 = sld [smem:[#allocation8 + $0x5e]]
    %v1514 = vstv %s1513
    %v1515 = vmul.f32 %v1514, %v1477
    %v1516 = vmul.f32 %v1514, %v1478
    %v1517 = vadd.f32 %v1499, %v1515
    %v1518 = vadd.f32 %v1500, %v1516
    %1519 = vrot.lane.b32.xlu0 %v1477, 127
    %v1520 = vpop.permute.xlu0 %1519
    %1521 = vrot.lane.b32.xlu0 %v1478, 127
    %v1522 = vpop.permute.xlu0 %1521
    %s1523 = sld [smem:[#allocation8 + $0x17]]
    %v1524 = vstv %s1523
    %v1525 = vmul.f32 %v1524, %v1520
    %v1526 = vmul.f32 %v1524, %v1522
    %v1527 = vadd.f32 %v1505, %v1525
    %v1528 = vadd.f32 %v1506, %v1526
    %s1529 = sld [smem:[#allocation8 + $0x3b]]
    %v1530 = vstv %s1529
    %v1531 = vmul.f32 %v1530, %v1520
    %v1532 = vmul.f32 %v1530, %v1522
    %v1533 = vadd.f32 %v1511, %v1531
    %v1534 = vadd.f32 %v1512, %v1532
    %s1535 = sld [smem:[#allocation8 + $0x5f]]
    %v1536 = vstv %s1535
    %v1537 = vmul.f32 %v1536, %v1520
    %v1538 = vmul.f32 %v1536, %v1522
    %v1539 = vadd.f32 %v1517, %v1537
    %v1540 = vadd.f32 %v1518, %v1538
    %v1541 = vld [vmem:[%s118 + $0x2] sm:$0xff]
    %v1542 = vld [vmem:[%s118 + $0xa] sm:$0xff]
    %1543 = vrot.lane.b32.xlu0 %v1541, 1
    %v1544 = vpop.permute.xlu0 %1543
    %1545 = vrot.lane.b32.xlu0 %v1542, 1
    %v1546 = vpop.permute.xlu0 %1545
    %s1547 = sld [smem:[#allocation8 + $0x18]]
    %v1548 = vstv %s1547
    %v1549 = vmul.f32 %v1548, %v1544
    %v1550 = vmul.f32 %v1548, %v1546
    %v1551 = vadd.f32 %v1527, %v1549
    %v1552 = vadd.f32 %v1528, %v1550
    %s1553 = sld [smem:[#allocation8 + $0x3c]]
    %v1554 = vstv %s1553
    %v1555 = vmul.f32 %v1554, %v1544
    %v1556 = vmul.f32 %v1554, %v1546
    %v1557 = vadd.f32 %v1533, %v1555
    %v1558 = vadd.f32 %v1534, %v1556
    %s1559 = sld [smem:[#allocation8 + $0x60]]
    %v1560 = vstv %s1559
    %v1561 = vmul.f32 %v1560, %v1544
    %v1562 = vmul.f32 %v1560, %v1546
    %v1563 = vadd.f32 %v1539, %v1561
    %v1564 = vadd.f32 %v1540, %v1562
    %s1565 = sld [smem:[#allocation8 + $0x19]]
    %v1566 = vstv %s1565
    %v1567 = vmul.f32 %v1566, %v1541
    %v1568 = vmul.f32 %v1566, %v1542
    %v1569 = vadd.f32 %v1551, %v1567
    %v1570 = vadd.f32 %v1552, %v1568
    %s1571 = sld [smem:[#allocation8 + $0x3d]]
    %v1572 = vstv %s1571
    %v1573 = vmul.f32 %v1572, %v1541
    %v1574 = vmul.f32 %v1572, %v1542
    %v1575 = vadd.f32 %v1557, %v1573
    %v1576 = vadd.f32 %v1558, %v1574
    %s1577 = sld [smem:[#allocation8 + $0x61]]
    %v1578 = vstv %s1577
    %v1579 = vmul.f32 %v1578, %v1541
    %v1580 = vmul.f32 %v1578, %v1542
    %v1581 = vadd.f32 %v1563, %v1579
    %v1582 = vadd.f32 %v1564, %v1580
    %1583 = vrot.lane.b32.xlu0 %v1541, 127
    %v1584 = vpop.permute.xlu0 %1583
    %1585 = vrot.lane.b32.xlu0 %v1542, 127
    %v1586 = vpop.permute.xlu0 %1585
    %s1587 = sld [smem:[#allocation8 + $0x1a]]
    %v1588 = vstv %s1587
    %v1589 = vmul.f32 %v1588, %v1584
    %v1590 = vmul.f32 %v1588, %v1586
    %v1591 = vadd.f32 %v1569, %v1589
    %v1592 = vadd.f32 %v1570, %v1590
    %s1593 = sld [smem:[#allocation8 + $0x3e]]
    %v1594 = vstv %s1593
    %v1595 = vmul.f32 %v1594, %v1584
    %v1596 = vmul.f32 %v1594, %v1586
    %v1597 = vadd.f32 %v1575, %v1595
    %v1598 = vadd.f32 %v1576, %v1596
    %s1599 = sld [smem:[#allocation8 + $0x62]]
    %v1600 = vstv %s1599
    %v1601 = vmul.f32 %v1600, %v1584
    %v1602 = vmul.f32 %v1600, %v1586
    %v1603 = vadd.f32 %v1581, %v1601
    %v1604 = vadd.f32 %v1582, %v1602
    %v1605 = vld [vmem:[%s124] sm:$0xff]
    %v1606 = vld [vmem:[%s124 + $0x8] sm:$0xff]
    %1607 = vrot.lane.b32.xlu0 %v1605, 1
    %v1608 = vpop.permute.xlu0 %1607
    %1609 = vrot.lane.b32.xlu0 %v1606, 1
    %v1610 = vpop.permute.xlu0 %1609
    %s1611 = sld [smem:[#allocation8 + $0x1b]]
    %v1612 = vstv %s1611
    %v1613 = vmul.f32 %v1612, %v1608
    %v1614 = vmul.f32 %v1612, %v1610
    %v1615 = vadd.f32 %v1591, %v1613
    %v1616 = vadd.f32 %v1592, %v1614
    %s1617 = sld [smem:[#allocation8 + $0x3f]]
    %v1618 = vstv %s1617
    %v1619 = vmul.f32 %v1618, %v1608
    %v1620 = vmul.f32 %v1618, %v1610
    %v1621 = vadd.f32 %v1597, %v1619
    %v1622 = vadd.f32 %v1598, %v1620
    %s1623 = sld [smem:[#allocation8 + $0x63]]
    %v1624 = vstv %s1623
    %v1625 = vmul.f32 %v1624, %v1608
    %v1626 = vmul.f32 %v1624, %v1610
    %v1627 = vadd.f32 %v1603, %v1625
    %v1628 = vadd.f32 %v1604, %v1626
    %s1629 = sld [smem:[#allocation8 + $0x1c]]
    %v1630 = vstv %s1629
    %v1631 = vmul.f32 %v1630, %v1605
    %v1632 = vmul.f32 %v1630, %v1606
    %v1633 = vadd.f32 %v1615, %v1631
    %v1634 = vadd.f32 %v1616, %v1632
    %s1635 = sld [smem:[#allocation8 + $0x40]]
    %v1636 = vstv %s1635
    %v1637 = vmul.f32 %v1636, %v1605
    %v1638 = vmul.f32 %v1636, %v1606
    %v1639 = vadd.f32 %v1621, %v1637
    %v1640 = vadd.f32 %v1622, %v1638
    %s1641 = sld [smem:[#allocation8 + $0x64]]
    %v1642 = vstv %s1641
    %v1643 = vmul.f32 %v1642, %v1605
    %v1644 = vmul.f32 %v1642, %v1606
    %v1645 = vadd.f32 %v1627, %v1643
    %v1646 = vadd.f32 %v1628, %v1644
    %1647 = vrot.lane.b32.xlu0 %v1605, 127
    %v1648 = vpop.permute.xlu0 %1647
    %1649 = vrot.lane.b32.xlu0 %v1606, 127
    %v1650 = vpop.permute.xlu0 %1649
    %s1651 = sld [smem:[#allocation8 + $0x1d]]
    %v1652 = vstv %s1651
    %v1653 = vmul.f32 %v1652, %v1648
    %v1654 = vmul.f32 %v1652, %v1650
    %v1655 = vadd.f32 %v1633, %v1653
    %v1656 = vadd.f32 %v1634, %v1654
    %s1657 = sld [smem:[#allocation8 + $0x41]]
    %v1658 = vstv %s1657
    %v1659 = vmul.f32 %v1658, %v1648
    %v1660 = vmul.f32 %v1658, %v1650
    %v1661 = vadd.f32 %v1639, %v1659
    %v1662 = vadd.f32 %v1640, %v1660
    %s1663 = sld [smem:[#allocation8 + $0x65]]
    %v1664 = vstv %s1663
    %v1665 = vmul.f32 %v1664, %v1648
    %v1666 = vmul.f32 %v1664, %v1650
    %v1667 = vadd.f32 %v1645, %v1665
    %v1668 = vadd.f32 %v1646, %v1666
    %v1669 = vld [vmem:[%s124 + $0x1] sm:$0xff]
    %v1670 = vld [vmem:[%s124 + $0x9] sm:$0xff]
    %1671 = vrot.lane.b32.xlu0 %v1669, 1
    %v1672 = vpop.permute.xlu0 %1671
    %1673 = vrot.lane.b32.xlu0 %v1670, 1
    %v1674 = vpop.permute.xlu0 %1673
    %s1675 = sld [smem:[#allocation8 + $0x1e]]
    %v1676 = vstv %s1675
    %v1677 = vmul.f32 %v1676, %v1672
    %v1678 = vmul.f32 %v1676, %v1674
    %v1679 = vadd.f32 %v1655, %v1677
    %v1680 = vadd.f32 %v1656, %v1678
    %s1681 = sld [smem:[#allocation8 + $0x42]]
    %v1682 = vstv %s1681
    %v1683 = vmul.f32 %v1682, %v1672
    %v1684 = vmul.f32 %v1682, %v1674
    %v1685 = vadd.f32 %v1661, %v1683
    %v1686 = vadd.f32 %v1662, %v1684
    %s1687 = sld [smem:[#allocation8 + $0x66]]
    %v1688 = vstv %s1687
    %v1689 = vmul.f32 %v1688, %v1672
    %v1690 = vmul.f32 %v1688, %v1674
    %v1691 = vadd.f32 %v1667, %v1689
    %v1692 = vadd.f32 %v1668, %v1690
    %s1693 = sld [smem:[#allocation8 + $0x1f]]
    %v1694 = vstv %s1693
    %v1695 = vmul.f32 %v1694, %v1669
    %v1696 = vmul.f32 %v1694, %v1670
    %v1697 = vadd.f32 %v1679, %v1695
    %v1698 = vadd.f32 %v1680, %v1696
    %s1699 = sld [smem:[#allocation8 + $0x43]]
    %v1700 = vstv %s1699
    %v1701 = vmul.f32 %v1700, %v1669
    %v1702 = vmul.f32 %v1700, %v1670
    %v1703 = vadd.f32 %v1685, %v1701
    %v1704 = vadd.f32 %v1686, %v1702
    %s1705 = sld [smem:[#allocation8 + $0x67]]
    %v1706 = vstv %s1705
    %v1707 = vmul.f32 %v1706, %v1669
    %v1708 = vmul.f32 %v1706, %v1670
    %v1709 = vadd.f32 %v1691, %v1707
    %v1710 = vadd.f32 %v1692, %v1708
    %1711 = vrot.lane.b32.xlu0 %v1669, 127
    %v1712 = vpop.permute.xlu0 %1711
    %1713 = vrot.lane.b32.xlu0 %v1670, 127
    %v1714 = vpop.permute.xlu0 %1713
    %s1715 = sld [smem:[#allocation8 + $0x20]]
    %v1716 = vstv %s1715
    %v1717 = vmul.f32 %v1716, %v1712
    %v1718 = vmul.f32 %v1716, %v1714
    %v1719 = vadd.f32 %v1697, %v1717
    %v1720 = vadd.f32 %v1698, %v1718
    %s1721 = sld [smem:[#allocation8 + $0x44]]
    %v1722 = vstv %s1721
    %v1723 = vmul.f32 %v1722, %v1712
    %v1724 = vmul.f32 %v1722, %v1714
    %v1725 = vadd.f32 %v1703, %v1723
    %v1726 = vadd.f32 %v1704, %v1724
    %s1727 = sld [smem:[#allocation8 + $0x68]]
    %v1728 = vstv %s1727
    %v1729 = vmul.f32 %v1728, %v1712
    %v1730 = vmul.f32 %v1728, %v1714
    %v1731 = vadd.f32 %v1709, %v1729
    %v1732 = vadd.f32 %v1710, %v1730
    %v1733 = vld [vmem:[%s124 + $0x2] sm:$0xff]
    %v1734 = vld [vmem:[%s124 + $0xa] sm:$0xff]
    %1735 = vrot.lane.b32.xlu0 %v1733, 1
    %v1736 = vpop.permute.xlu0 %1735
    %1737 = vrot.lane.b32.xlu0 %v1734, 1
    %v1738 = vpop.permute.xlu0 %1737
    %s1739 = sld [smem:[#allocation8 + $0x21]]
    %v1740 = vstv %s1739
    %v1741 = vmul.f32 %v1740, %v1736
    %v1742 = vmul.f32 %v1740, %v1738
    %v1743 = vadd.f32 %v1719, %v1741
    %v1744 = vadd.f32 %v1720, %v1742
    %s1745 = sld [smem:[#allocation8 + $0x45]]
    %v1746 = vstv %s1745
    %v1747 = vmul.f32 %v1746, %v1736
    %v1748 = vmul.f32 %v1746, %v1738
    %v1749 = vadd.f32 %v1725, %v1747
    %v1750 = vadd.f32 %v1726, %v1748
    %s1751 = sld [smem:[#allocation8 + $0x69]]
    %v1752 = vstv %s1751
    %v1753 = vmul.f32 %v1752, %v1736
    %v1754 = vmul.f32 %v1752, %v1738
    %v1755 = vadd.f32 %v1731, %v1753
    %v1756 = vadd.f32 %v1732, %v1754
    %s1757 = sld [smem:[#allocation8 + $0x22]]
    %v1758 = vstv %s1757
    %v1759 = vmul.f32 %v1758, %v1733
    %v1760 = vmul.f32 %v1758, %v1734
    %v1761 = vadd.f32 %v1743, %v1759
    %v1762 = vadd.f32 %v1744, %v1760
    %s1763 = sld [smem:[#allocation8 + $0x46]]
    %v1764 = vstv %s1763
    %v1765 = vmul.f32 %v1764, %v1733
    %v1766 = vmul.f32 %v1764, %v1734
    %v1767 = vadd.f32 %v1749, %v1765
    %v1768 = vadd.f32 %v1750, %v1766
    %s1769 = sld [smem:[#allocation8 + $0x6a]]
    %v1770 = vstv %s1769
    %v1771 = vmul.f32 %v1770, %v1733
    %v1772 = vmul.f32 %v1770, %v1734
    %v1773 = vadd.f32 %v1755, %v1771
    %v1774 = vadd.f32 %v1756, %v1772
    %1775 = vrot.lane.b32.xlu0 %v1733, 127
    %v1776 = vpop.permute.xlu0 %1775
    %1777 = vrot.lane.b32.xlu0 %v1734, 127
    %v1778 = vpop.permute.xlu0 %1777
    %s1779 = sld [smem:[#allocation8 + $0x23]]
    %v1780 = vstv %s1779
    %v1781 = vmul.f32 %v1780, %v1776
    %v1782 = vmul.f32 %v1780, %v1778
    %v1783 = vadd.f32 %v1761, %v1781
    %v1784 = vadd.f32 %v1762, %v1782
    %s1785 = sld [smem:[#allocation8 + $0x47]]
    %v1786 = vstv %s1785
    %v1787 = vmul.f32 %v1786, %v1776
    %v1788 = vmul.f32 %v1786, %v1778
    %v1789 = vadd.f32 %v1767, %v1787
    %v1790 = vadd.f32 %v1768, %v1788
    %s1791 = sld [smem:[#allocation8 + $0x6b]]
    %v1792 = vstv %s1791
    %v1793 = vmul.f32 %v1792, %v1776
    %v1794 = vmul.f32 %v1792, %v1778
    %v1795 = vadd.f32 %v1773, %v1793
    %v1796 = vadd.f32 %v1774, %v1794
    %s1797 = sld [smem:[#allocation9]]
    %v1798 = vstv %s1797
    %v1799 = vadd.f32 %v1783, %v1798
    %v1800 = vadd.f32 %v1784, %v1798
    %v1801 = vsub.f32 0.0, %v1799
    %v1802 = vsub.f32 0.0, %v1800
    %v1803 = vmul.f32 %v1801, 1.442695
    %v1804 = vpow.pop %v1803
    %v1805 = vmul.f32 %v1802, 1.442695
    %v1806 = vpow.pop %v1805
    %v1807 = vadd.f32 %v1804, 1.0
    %v1808 = vadd.f32 %v1806, 1.0
    %v1809 = vrcp.pop %v1807
    %v1810 = vmul.f32 %v1807, %v1809
    %v1811 = vsub.f32 1.0, %v1810
    %v1812 = vmul.f32 %v1809, %v1811
    %v1813 = vadd.f32 %v1809, %v1812
    %vm1814 = vweird.f32 %v1807
    %vm1815 = vweird.f32 %v1809
    %vm1816 = vmor %vm1814, %vm1815
    %v1817 = vsel %vm1816, %v1809, %v1813
    %v1818 = vand.u32 2147483647, %v1807
    %vm1819 = vcmp.eq.f32.partialorder %v1818, 8.507059e+37
    %v1820 = vand.u32 %v1807, 2147483648
    %v1821 = vor.u32 1.1754944e-38, %v1820
    %v1822 = vsel %vm1819, %v1821, %v1817
    %v1823 = vmul.f32 1.0, %v1822
    %v1824 = vrcp.pop %v1808
    %v1825 = vmul.f32 %v1808, %v1824
    %v1826 = vsub.f32 1.0, %v1825
    %v1827 = vmul.f32 %v1824, %v1826
    %v1828 = vadd.f32 %v1824, %v1827
    %vm1829 = vweird.f32 %v1808
    %vm1830 = vweird.f32 %v1824
    %vm1831 = vmor %vm1829, %vm1830
    %v1832 = vsel %vm1831, %v1824, %v1828
    %v1833 = vand.u32 2147483647, %v1808
    %vm1834 = vcmp.eq.f32.partialorder %v1833, 8.507059e+37
    %v1835 = vand.u32 %v1808, 2147483648
    %v1836 = vor.u32 1.1754944e-38, %v1835
    %v1837 = vsel %vm1834, %v1836, %v1832
    %v1838 = vmul.f32 1.0, %v1837
    %s1839 = scalar_lea.vmem [#allocation10], 48
    %1840 = vst.msk [vmem:[%s1839] sm:$0xff] %vm82, %v1823
    %1841 = vst.msk [vmem:[%s1839 + $0x8] sm:$0xff] %vm82, %v1838
    %s1842 = sld [smem:[#allocation9 + $0x1]]
    %v1843 = vstv %s1842
    %v1844 = vadd.f32 %v1789, %v1843
    %v1845 = vadd.f32 %v1790, %v1843
    %v1846 = vsub.f32 0.0, %v1844
    %v1847 = vsub.f32 0.0, %v1845
    %v1848 = vmul.f32 %v1846, 1.442695
    %v1849 = vpow.pop %v1848
    %v1850 = vmul.f32 %v1847, 1.442695
    %v1851 = vpow.pop %v1850
    %v1852 = vadd.f32 %v1849, 1.0
    %v1853 = vadd.f32 %v1851, 1.0
    %v1854 = vrcp.pop %v1852
    %v1855 = vmul.f32 %v1852, %v1854
    %v1856 = vsub.f32 1.0, %v1855
    %v1857 = vmul.f32 %v1854, %v1856
    %v1858 = vadd.f32 %v1854, %v1857
    %vm1859 = vweird.f32 %v1852
    %vm1860 = vweird.f32 %v1854
    %vm1861 = vmor %vm1859, %vm1860
    %v1862 = vsel %vm1861, %v1854, %v1858
    %v1863 = vand.u32 2147483647, %v1852
    %vm1864 = vcmp.eq.f32.partialorder %v1863, 8.507059e+37
    %v1865 = vand.u32 %v1852, 2147483648
    %v1866 = vor.u32 1.1754944e-38, %v1865
    %v1867 = vsel %vm1864, %v1866, %v1862
    %v1868 = vmul.f32 1.0, %v1867
    %v1869 = vrcp.pop %v1853
    %v1870 = vmul.f32 %v1853, %v1869
    %v1871 = vsub.f32 1.0, %v1870
    %v1872 = vmul.f32 %v1869, %v1871
    %v1873 = vadd.f32 %v1869, %v1872
    %vm1874 = vweird.f32 %v1853
    %vm1875 = vweird.f32 %v1869
    %vm1876 = vmor %vm1874, %vm1875
    %v1877 = vsel %vm1876, %v1869, %v1873
    %v1878 = vand.u32 2147483647, %v1853
    %vm1879 = vcmp.eq.f32.partialorder %v1878, 8.507059e+37
    %v1880 = vand.u32 %v1853, 2147483648
    %v1881 = vor.u32 1.1754944e-38, %v1880
    %v1882 = vsel %vm1879, %v1881, %v1877
    %v1883 = vmul.f32 1.0, %v1882
    %s1884 = scalar_lea.vmem [#allocation10], 64
    %1885 = vst.msk [vmem:[%s1884] sm:$0xff] %vm82, %v1868
    %1886 = vst.msk [vmem:[%s1884 + $0x8] sm:$0xff] %vm82, %v1883
    %s1887 = sld [smem:[#allocation9 + $0x2]]
    %v1888 = vstv %s1887
    %v1889 = vadd.f32 %v1795, %v1888
    %v1890 = vadd.f32 %v1796, %v1888
    %v1891 = vsub.f32 0.0, %v1889
    %v1892 = vsub.f32 0.0, %v1890
    %v1893 = vmul.f32 %v1891, 1.442695
    %v1894 = vpow.pop %v1893
    %v1895 = vmul.f32 %v1892, 1.442695
    %v1896 = vpow.pop %v1895
    %v1897 = vadd.f32 %v1894, 1.0
    %v1898 = vadd.f32 %v1896, 1.0
    %v1899 = vrcp.pop %v1897
    %v1900 = vmul.f32 %v1897, %v1899
    %v1901 = vsub.f32 1.0, %v1900
    %v1902 = vmul.f32 %v1899, %v1901
    %v1903 = vadd.f32 %v1899, %v1902
    %vm1904 = vweird.f32 %v1897
    %vm1905 = vweird.f32 %v1899
    %vm1906 = vmor %vm1904, %vm1905
    %v1907 = vsel %vm1906, %v1899, %v1903
    %v1908 = vand.u32 2147483647, %v1897
    %vm1909 = vcmp.eq.f32.partialorder %v1908, 8.507059e+37
    %v1910 = vand.u32 %v1897, 2147483648
    %v1911 = vor.u32 1.1754944e-38, %v1910
    %v1912 = vsel %vm1909, %v1911, %v1907
    %v1913 = vmul.f32 1.0, %v1912
    %v1914 = vrcp.pop %v1898
    %v1915 = vmul.f32 %v1898, %v1914
    %v1916 = vsub.f32 1.0, %v1915
    %v1917 = vmul.f32 %v1914, %v1916
    %v1918 = vadd.f32 %v1914, %v1917
    %vm1919 = vweird.f32 %v1898
    %vm1920 = vweird.f32 %v1914
    %vm1921 = vmor %vm1919, %vm1920
    %v1922 = vsel %vm1921, %v1914, %v1918
    %v1923 = vand.u32 2147483647, %v1898
    %vm1924 = vcmp.eq.f32.partialorder %v1923, 8.507059e+37
    %v1925 = vand.u32 %v1898, 2147483648
    %v1926 = vor.u32 1.1754944e-38, %v1925
    %v1927 = vsel %vm1924, %v1926, %v1922
    %v1928 = vmul.f32 1.0, %v1927
    %s1929 = scalar_lea.vmem [#allocation10], 80
    %1930 = vst.msk [vmem:[%s1929] sm:$0xff] %vm82, %v1913
    %1931 = vst.msk [vmem:[%s1929 + $0x8] sm:$0xff] %vm82, %v1928
    // Predicated region
    $region26: #{tpu_custom_call.1} parent=1 // pred_check
      _
    $region27: #{tpu_custom_call.1} parent=1 // pred_check_branch
      %1933 = sbr.rel (0) target = $region29
    $region28: #{tpu_custom_call.1} parent=1 // pred_region
      %1935 = vsyncadd [#allocation5], 0
      %s1936 = sshll.u32 [#allocation10], 4
      %s1937 = int_to_ptr.vmem [resolvable:$true] %s1936
      %s1938 = sshll.u32 %s3, 4
      %s1939 = int_to_ptr.hbm [resolvable:$true] %s1938
      %1944 = dma.vmem_to_hbm [thread:$0]  %s1937, 1536, %s1939, [#allocation5], 128, 128, 8
    $region29: #{tpu_custom_call.1} parent=1 // pred_fallthru
      _
    // Predicated region
    $region30: #{tpu_custom_call.1} parent=1 // pred_check
      _
    $region31: #{tpu_custom_call.1} parent=1 // pred_check_branch
      %1946 = sbr.rel (0) target = $region33
    $region32: #{tpu_custom_call.1} parent=1 // pred_region
      %1948 = dma.done [#allocation5], 1536
    $region33: #{tpu_custom_call.1} parent=1 // pred_fallthru
      _
    %1949 = vsyncpa [#allocation4], 1
    %1950 = vsyncpa [#allocation5], 1
    %1951 = vsyncpa [#allocation6], 1
    %1952 = vsyncpa [#allocation7], 1

</llo_original>
